<compile_context>
chip_gen: v5e
topology: v5e:2x2
jax: 0.10.0
libtpu: 0.0.40
codegen_flags: <defaults>
</compile_context>

<pallas_src>
import functools

import jax
import jax.numpy as jnp
from jax.experimental import pallas as pl
from jax.experimental.pallas import tpu as pltpu

F32 = jnp.float32
BF16 = jnp.bfloat16


# ----------------------------------------------------------------------------
# In-kernel helpers
# ----------------------------------------------------------------------------
def _layer_norm(x, g_ref, b_ref, eps=1e-6):
    """torch.nn.LayerNorm(eps=1e-6): biased variance + affine, f32 VPU math."""
    mu = jnp.mean(x, axis=-1, keepdims=True)
    var = jnp.mean(jnp.square(x - mu), axis=-1, keepdims=True)
    return (x - mu) * jax.lax.rsqrt(var + eps) * g_ref[...] + b_ref[...]


def _mha_tile(x, kv_ref, wq_ref, wo_ref, g_ref, b_ref, attn_ref, *,
              n_head, d_k, d_v):
    """Multi-head attention for one query tile.

    x       : (TQ, D) f32 query rows (also the residual).
    kv_ref  : (Lk, H*(d_k+d_v)) bf16 cached [K | V] projections of the raw
              (un-normalized) key/value source, as in the PyTorch module.
    attn_ref: (1, H, TQ, Lk) output block for the attention map.
    """
    h_dk = n_head * d_k
    xn = _layer_norm(x, g_ref, b_ref).astype(BF16)                      # (TQ, D)

    # Fused-head query projection: ONE (TQ, D) x (D, H*d_k) matmul.
    # 1/sqrt(d_k) is pre-folded into wq at prepare_params() time.
    q = jnp.dot(xn, wq_ref[...], preferred_element_type=F32).astype(BF16)

    o_heads = []
    for h in range(n_head):                                             # static unroll
        q_h = q[:, h * d_k:(h + 1) * d_k]                               # (TQ, d_k) bf16
        k_h = kv_ref[:, h * d_k:(h + 1) * d_k]                          # (Lk, d_k) bf16
        v_h = kv_ref[:, h_dk + h * d_v: h_dk + (h + 1) * d_v]           # (Lk, d_v) bf16

        s = jnp.einsum('qe,ke->qk', q_h, k_h,
                       preferred_element_type=F32)                      # (TQ, Lk) f32
        # TODO(synk): attention mask (masked_fill with -1e9) not wired in; this
        #             forward implements the mask=None path only.
        s = s - jnp.max(s, axis=-1, keepdims=True)
        ex = jnp.exp(s)
        a = ex * (1.0 / jnp.sum(ex, axis=-1, keepdims=True))            # exact softmax
        a_bf = a.astype(BF16)
        # Per-head store: overlaps with the next score / AV matmul (v5e has a
        # single vector-store slot per bundle).
        attn_ref[0, h] = a_bf.astype(attn_ref.dtype)
        o_heads.append(jnp.dot(a_bf, v_h,
                               preferred_element_type=F32).astype(BF16))

    o = jnp.concatenate(o_heads, axis=-1)                               # (TQ, H*d_v) bf16
    # Fused output projection: ONE (TQ, H*d_v) x (H*d_v, D) matmul (no head-sum).
    y = jnp.dot(o, wo_ref[...], preferred_element_type=F32)             # (TQ, D) f32
    return y + x                                                        # residual add


# ----------------------------------------------------------------------------
# Fused decoder-layer kernel (one (batch, query-tile) grid step)
# ----------------------------------------------------------------------------
def _decoder_layer_kernel(
        dec_q_ref,                       # (1, TQ, D)   query tile of dec_input
        dec_kv_ref,                      # (1, Ldec, D) full dec_input (self-attn K/V src)
        enc_kv_ref,                      # (1, Lenc, D) full enc_output (cross-attn K/V src)
        s_wq, s_wkv, s_wo, s_g, s_b,     # self-attention params
        e_wq, e_wkv, e_wo, e_g, e_b,     # enc-dec attention params
        f_w1, f_b1, f_w2, f_b2, f_g, f_b,  # position-wise FFN params
        out_ref, slf_attn_ref, enc_attn_ref,
        kv_self_ref, kv_enc_ref,         # bf16 VMEM scratch: per-batch K|V caches
        *, n_head, d_k, d_v):

    # ---- Per-batch K/V caches: computed once, reused by every query tile ----
    @pl.when(pl.program_id(1) == 0)
    def _():
        # Single fused [K | V] projection per source: one (L, D)x(D, H*(dk+dv)) matmul.
        kv_self_ref[...] = jnp.dot(dec_kv_ref[0].astype(BF16), s_wkv[...],
                                   preferred_element_type=F32).astype(BF16)
        kv_enc_ref[...] = jnp.dot(enc_kv_ref[0].astype(BF16), e_wkv[...],
                                  preferred_element_type=F32).astype(BF16)

    x0 = dec_q_ref[0].astype(F32)                                       # (TQ, D)

    # Self-attention (keys/values = full dec_input)
    x1 = _mha_tile(x0, kv_self_ref, s_wq, s_wo, s_g, s_b, slf_attn_ref,
                   n_head=n_head, d_k=d_k, d_v=d_v)
    # Encoder-decoder attention (keys/values = full enc_output)
    x2 = _mha_tile(x1, kv_enc_ref, e_wq, e_wo, e_g, e_b, enc_attn_ref,
                   n_head=n_head, d_k=d_k, d_v=d_v)

    # Position-wise FFN
    xn = _layer_norm(x2, f_g, f_b).astype(BF16)
    hid = jnp.dot(xn, f_w1[...], preferred_element_type=F32) + f_b1[...]
    hid = jnp.maximum(hid, 0.0).astype(BF16)                            # ReLU, bf16 for 2nd matmul
    y = jnp.dot(hid, f_w2[...], preferred_element_type=F32) + f_b2[...]
    out_ref[0] = (y + x2).astype(out_ref.dtype)


# ----------------------------------------------------------------------------
# Wrapper
# ----------------------------------------------------------------------------
def decoder_layer_forward(dec_input, enc_output, prepared, *,
                          q_tile=128, attn_dtype=jnp.bfloat16):
    B, Lq, D = dec_input.shape
    Lk = enc_output.shape[1]
    dims = prepared["dims"]
    n_head, d_k, d_v = dims["n_head"], dims["d_k"], dims["d_v"]
    s, e, f = prepared["slf_attn"], prepared["enc_attn"], prepared["pos_ffn"]

    tq = min(q_tile, Lq)
    assert Lq % tq == 0, "TODO(synk): pad ragged query lengths to a tile multiple"
    n_q_tiles = Lq // tq

    weights = [s["wq"], s["wkv"], s["wo"], s["ln_g"], s["ln_b"],
               e["wq"], e["wkv"], e["wo"], e["ln_g"], e["ln_b"],
               f["w1"], f["b1"], f["w2"], f["b2"], f["ln_g"], f["ln_b"]]

    def const_spec(w):
        zeros = (0,) * w.ndim
        # Grid-invariant weight blocks: single-buffered (no wasted 2x VMEM copy).
        return pl.BlockSpec(w.shape, lambda b, q, _z=zeros: _z,
                            pipeline_mode=pl.Buffered(1))

    kernel = functools.partial(_decoder_layer_kernel,
                               n_head=n_head, d_k=d_k, d_v=d_v)

    out, slf_attn, enc_attn = pl.pallas_call(
        kernel,
        out_shape=(
            jax.ShapeDtypeStruct((B, Lq, D), dec_input.dtype),
            jax.ShapeDtypeStruct((B, n_head, Lq, Lq), attn_dtype),
            jax.ShapeDtypeStruct((B, n_head, Lq, Lk), attn_dtype),
        ),
        grid_spec=pltpu.PrefetchScalarGridSpec(
            num_scalar_prefetch=0,
            grid=(B, n_q_tiles),
            in_specs=[
                pl.BlockSpec((1, tq, D), lambda b, q: (b, q, 0)),   # query tile
                pl.BlockSpec((1, Lq, D), lambda b, q: (b, 0, 0)),   # full dec (K/V src)
                pl.BlockSpec((1, Lk, D), lambda b, q: (b, 0, 0)),   # full enc (K/V src)
            ] + [const_spec(w) for w in weights],
            out_specs=[
                pl.BlockSpec((1, tq, D), lambda b, q: (b, q, 0)),
                pl.BlockSpec((1, n_head, tq, Lq), lambda b, q: (b, 0, q, 0)),
                pl.BlockSpec((1, n_head, tq, Lk), lambda b, q: (b, 0, q, 0)),
            ],
            scratch_shapes=[
                pltpu.VMEM((Lq, n_head * (d_k + d_v)), jnp.bfloat16),  # self-attn K|V
                pltpu.VMEM((Lk, n_head * (d_k + d_v)), jnp.bfloat16),  # cross-attn K|V
            ],
        ),
        compiler_params=pltpu.CompilerParams(
            dimension_semantics=("parallel", "arbitrary"),
            vmem_limit_bytes=64 * 1024 * 1024),
    )(dec_input, dec_input, enc_output, *weights)
    return out, slf_attn, enc_attn


# ----------------------------------------------------------------------------
# Parameter init (shapes per module __init__) and one-time preprocessing
# ----------------------------------------------------------------------------
def init_mha_params(key, d_model, n_head, d_k, d_v):
    ks = jax.random.split(key, 6)
    u = lambda k, shp, fan_in: jax.random.uniform(
        k, shp, jnp.float32, -1.0 / jnp.sqrt(fan_in), 1.0 / jnp.sqrt(fan_in))
    return {
        "wq": u(ks[0], (d_model, n_head * d_k), d_model),
        "wk": u(ks[1], (d_model, n_head * d_k), d_model),
        "wv": u(ks[2], (d_model, n_head * d_v), d_model),
        "wo": u(ks[3], (n_head * d_v, d_model), n_head * d_v),
        "ln_g": 1.0 + 0.1 * jax.random.normal(ks[4], (1, d_model), jnp.float32),
        "ln_b": 0.1 * jax.random.normal(ks[5], (1, d_model), jnp.float32),
    }


def init_ffn_params(key, d_model, d_inner):
    ks = jax.random.split(key, 6)
    u = lambda k, shp, fan_in: jax.random.uniform(
        k, shp, jnp.float32, -1.0 / jnp.sqrt(fan_in), 1.0 / jnp.sqrt(fan_in))
    return {
        "w1": u(ks[0], (d_model, d_inner), d_model),
        "b1": u(ks[1], (1, d_inner), d_model),
        "w2": u(ks[2], (d_inner, d_model), d_inner),
        "b2": u(ks[3], (1, d_model), d_inner),
        "ln_g": 1.0 + 0.1 * jax.random.normal(ks[4], (1, d_model), jnp.float32),
        "ln_b": 0.1 * jax.random.normal(ks[5], (1, d_model), jnp.float32),
    }


def prepare_params(params, *, n_head, d_k, d_v):
    """One-time weight prep: fold 1/sqrt(d_k) into w_q, concatenate w_k|w_v so
    K and V come from one MXU pass, cast MXU operands to bf16 (LN params and
    biases stay f32 for the VPU path)."""
    def prep_mha(p):
        scale = 1.0 / (d_k ** 0.5)
        return {
            "wq": (p["wq"] * scale).astype(BF16),                         # (D, H*dk)
            "wkv": jnp.concatenate([p["wk"], p["wv"]], axis=1).astype(BF16),  # (D, H*(dk+dv))
            "wo": p["wo"].astype(BF16),                                   # (H*dv, D)
            "ln_g": p["ln_g"], "ln_b": p["ln_b"],
        }

    def prep_ffn(p):
        return {"w1": p["w1"].astype(BF16), "b1": p["b1"],
                "w2": p["w2"].astype(BF16), "b2": p["b2"],
                "ln_g": p["ln_g"], "ln_b": p["ln_b"]}

    return {"slf_attn": prep_mha(params["slf_attn"]),
            "enc_attn": prep_mha(params["enc_attn"]),
            "pos_ffn": prep_ffn(params["pos_ffn"]),
            "dims": {"n_head": n_head, "d_k": d_k, "d_v": d_v}}


# ----------------------------------------------------------------------------
# Pure-JAX reference with identical bf16 matmul boundaries
# ----------------------------------------------------------------------------
def _ref_mha(x, kv_src, p, *, n_head, d_k, d_v):
    B, Lq, D = x.shape
    Lk = kv_src.shape[1]
    mu = jnp.mean(x, -1, keepdims=True)
    var = jnp.mean((x - mu) ** 2, -1, keepdims=True)
    xn = ((x - mu) * jax.lax.rsqrt(var + 1e-6) * p["ln_g"] + p["ln_b"]).astype(BF16)
    q = jnp.dot(xn, p["wq"], preferred_element_type=F32).astype(BF16)
    kv = jnp.dot(kv_src.astype(BF16), p["wkv"], preferred_element_type=F32).astype(BF16)
    qh = q.reshape(B, Lq, n_head, d_k)
    kh = kv[..., :n_head * d_k].reshape(B, Lk, n_head, d_k)
    vh = kv[..., n_head * d_k:].reshape(B, Lk, n_head, d_v)
    s = jnp.einsum('bqhe,bkhe->bhqk', qh, kh, preferred_element_type=F32)
    a = jax.nn.softmax(s, axis=-1)
    o = jnp.einsum('bhqk,bkhd->bqhd', a.astype(BF16), vh,
                   preferred_element_type=F32).astype(BF16)
    y = jnp.dot(o.reshape(B, Lq, n_head * d_v), p["wo"], preferred_element_type=F32)
    return y + x, a


def _ref_ffn(x, p):
    mu = jnp.mean(x, -1, keepdims=True)
    var = jnp.mean((x - mu) ** 2, -1, keepdims=True)
    xn = ((x - mu) * jax.lax.rsqrt(var + 1e-6) * p["ln_g"] + p["ln_b"]).astype(BF16)
    h = jnp.dot(xn, p["w1"], preferred_element_type=F32) + p["b1"]
    h = jnp.maximum(h, 0.0).astype(BF16)
    y = jnp.dot(h, p["w2"], preferred_element_type=F32) + p["b2"]
    return y + x


def _ref_decoder(dec_in, enc_out, prepared):
    dims = prepared["dims"]
    y, a1 = _ref_mha(dec_in, dec_in, prepared["slf_attn"], **dims)
    y, a2 = _ref_mha(y, enc_out, prepared["enc_attn"], **dims)
    y = _ref_ffn(y, prepared["pos_ffn"])
    return y, a1, a2


# ----------------------------------------------------------------------------
if __name__ == "__main__":
    # Small but lane-friendly shapes: D, H*dk, H*dv, d_inner all multiples of 128.
    B, L_dec, L_enc = 2, 16, 32
    d_model, d_inner, n_head, d_k, d_v = 128, 256, 4, 32, 32

    root = jax.random.PRNGKey(0)
    k_in, k_enc, k_p1, k_p2, k_p3 = jax.random.split(root, 5)

    dec_input = jax.random.normal(k_in, (B, L_dec, d_model), jnp.float32)
    enc_output = jax.random.normal(k_enc, (B, L_enc, d_model), jnp.float32)

    params = {
        "slf_attn": init_mha_params(k_p1, d_model, n_head, d_k, d_v),
        "enc_attn": init_mha_params(k_p2, d_model, n_head, d_k, d_v),
        "pos_ffn": init_ffn_params(k_p3, d_model, d_inner),
    }
    prepared = prepare_params(params, n_head=n_head, d_k=d_k, d_v=d_v)

    # q_tile=8 -> two query tiles per batch element, so the per-batch K/V cache
    # (pl.when) and the tiled output path are actually exercised at these shapes.
    dec_out, slf_attn, enc_attn = decoder_layer_forward(
        dec_input, enc_output, prepared, q_tile=8)
    jax.block_until_ready((dec_out, slf_attn, enc_attn))

    # Verify against a pure-JAX reference with the same bf16 matmul boundaries.
    r_out, r_slf, r_enc = _ref_decoder(dec_input, enc_output, prepared)

    assert dec_out.shape == (B, L_dec, d_model)
    assert slf_attn.shape == (B, n_head, L_dec, L_dec)
    assert enc_attn.shape == (B, n_head, L_dec, L_enc)
    # Attention maps are stored bf16 (halved writeback) -> ~bf16-ulp tolerance.
    assert jnp.allclose(slf_attn.astype(jnp.float32), r_slf, atol=8e-3, rtol=0)
    assert jnp.allclose(enc_attn.astype(jnp.float32), r_enc, atol=8e-3, rtol=0)
    assert jnp.allclose(dec_out, r_out, atol=3e-2, rtol=3e-2)

    print("KERNEL_OK")
</pallas_src>

<mosaic_0001>
module attributes {stable_mosaic.version = 11 : i64} {
  func.func @_decoder_layer_kernel(%arg0: i32, %arg1: i32, %arg2: memref<1x8x128xf32, #tpu.memory_space<vmem>>, %arg3: memref<1x16x128xf32, #tpu.memory_space<vmem>>, %arg4: memref<1x32x128xf32, #tpu.memory_space<vmem>>, %arg5: memref<128x128xbf16, #tpu.memory_space<vmem>>, %arg6: memref<128x256xbf16, #tpu.memory_space<vmem>>, %arg7: memref<128x128xbf16, #tpu.memory_space<vmem>>, %arg8: memref<1x128xf32, #tpu.memory_space<vmem>>, %arg9: memref<1x128xf32, #tpu.memory_space<vmem>>, %arg10: memref<128x128xbf16, #tpu.memory_space<vmem>>, %arg11: memref<128x256xbf16, #tpu.memory_space<vmem>>, %arg12: memref<128x128xbf16, #tpu.memory_space<vmem>>, %arg13: memref<1x128xf32, #tpu.memory_space<vmem>>, %arg14: memref<1x128xf32, #tpu.memory_space<vmem>>, %arg15: memref<128x256xbf16, #tpu.memory_space<vmem>>, %arg16: memref<1x256xf32, #tpu.memory_space<vmem>>, %arg17: memref<256x128xbf16, #tpu.memory_space<vmem>>, %arg18: memref<1x128xf32, #tpu.memory_space<vmem>>, %arg19: memref<1x128xf32, #tpu.memory_space<vmem>>, %arg20: memref<1x128xf32, #tpu.memory_space<vmem>>, %arg21: memref<1x8x128xf32, #tpu.memory_space<vmem>>, %arg22: memref<1x4x8x16xbf16, #tpu.memory_space<vmem>>, %arg23: memref<1x4x8x32xbf16, #tpu.memory_space<vmem>>, %arg24: memref<16x256xbf16, #tpu.memory_space<vmem>>, %arg25: memref<32x256xbf16, #tpu.memory_space<vmem>>) attributes {dimension_semantics = [#tpu.dimension_semantics<parallel>, #tpu.dimension_semantics<arbitrary>], iteration_bounds = array<i64: 2, 2>, scalar_prefetch = 0 : i64, scratch_operands = 2 : i64, tpu.core_type = #tpu.core_type<tc>, window_params = [{transform_indices = @transform_0, window_bounds = array<i64: 1, 8, 128>}, {transform_indices = @transform_1, window_bounds = array<i64: 1, 16, 128>}, {transform_indices = @transform_2, window_bounds = array<i64: 1, 32, 128>}, {pipeline_mode = #tpu.pipeline_mode<synchronous>, transform_indices = @transform_3, window_bounds = array<i64: 128, 128>}, {pipeline_mode = #tpu.pipeline_mode<synchronous>, transform_indices = @transform_4, window_bounds = array<i64: 128, 256>}, {pipeline_mode = #tpu.pipeline_mode<synchronous>, transform_indices = @transform_5, window_bounds = array<i64: 128, 128>}, {pipeline_mode = #tpu.pipeline_mode<synchronous>, transform_indices = @transform_6, window_bounds = array<i64: 1, 128>}, {pipeline_mode = #tpu.pipeline_mode<synchronous>, transform_indices = @transform_7, window_bounds = array<i64: 1, 128>}, {pipeline_mode = #tpu.pipeline_mode<synchronous>, transform_indices = @transform_8, window_bounds = array<i64: 128, 128>}, {pipeline_mode = #tpu.pipeline_mode<synchronous>, transform_indices = @transform_9, window_bounds = array<i64: 128, 256>}, {pipeline_mode = #tpu.pipeline_mode<synchronous>, transform_indices = @transform_10, window_bounds = array<i64: 128, 128>}, {pipeline_mode = #tpu.pipeline_mode<synchronous>, transform_indices = @transform_11, window_bounds = array<i64: 1, 128>}, {pipeline_mode = #tpu.pipeline_mode<synchronous>, transform_indices = @transform_12, window_bounds = array<i64: 1, 128>}, {pipeline_mode = #tpu.pipeline_mode<synchronous>, transform_indices = @transform_13, window_bounds = array<i64: 128, 256>}, {pipeline_mode = #tpu.pipeline_mode<synchronous>, transform_indices = @transform_14, window_bounds = array<i64: 1, 256>}, {pipeline_mode = #tpu.pipeline_mode<synchronous>, transform_indices = @transform_15, window_bounds = array<i64: 256, 128>}, {pipeline_mode = #tpu.pipeline_mode<synchronous>, transform_indices = @transform_16, window_bounds = array<i64: 1, 128>}, {pipeline_mode = #tpu.pipeline_mode<synchronous>, transform_indices = @transform_17, window_bounds = array<i64: 1, 128>}, {pipeline_mode = #tpu.pipeline_mode<synchronous>, transform_indices = @transform_18, window_bounds = array<i64: 1, 128>}, {transform_indices = @transform_19, window_bounds = array<i64: 1, 8, 128>}, {transform_indices = @transform_20, window_bounds = array<i64: 1, 4, 8, 16>}, {transform_indices = @transform_21, window_bounds = array<i64: 1, 4, 8, 32>}]} {
    %c0_i32 = arith.constant 0 : i32
    %0 = arith.cmpi eq, %arg1, %c0_i32 : i32
    %1 = arith.extui %0 : i1 to i32
    %c0_i32_0 = arith.constant 0 : i32
    %2 = arith.cmpi ne, %1, %c0_i32_0 : i32
    scf.if %2 {
      %c0_149 = arith.constant 0 : index
      %c0_150 = arith.constant 0 : index
      %c0_151 = arith.constant 0 : index
      %279 = vector.load %arg3[%c0_149, %c0_150, %c0_151] : memref<1x16x128xf32, #tpu.memory_space<vmem>>, vector<1x16x128xf32>
      %280 = vector.shape_cast %279 : vector<1x16x128xf32> to vector<16x128xf32>
      %281 = arith.truncf %280 : vector<16x128xf32> to vector<16x128xbf16>
      %c0_152 = arith.constant 0 : index
      %c0_153 = arith.constant 0 : index
      %282 = vector.load %arg6[%c0_152, %c0_153] : memref<128x256xbf16, #tpu.memory_space<vmem>>, vector<128x256xbf16>
      %cst_154 = arith.constant dense<0.000000e+00> : vector<16x256xf32>
      %283 = tpu.matmul %281, %282, %cst_154 {dimension_numbers = #tpu.dot_dimension_numbers<[1], [0], [0], [1], [0, 0, 1, 1], [], []>} : vector<16x128xbf16>, vector<128x256xbf16>, vector<16x256xf32> -> vector<16x256xf32>
      %284 = arith.truncf %283 : vector<16x256xf32> to vector<16x256xbf16>
      %c0_155 = arith.constant 0 : index
      %c0_156 = arith.constant 0 : index
      %285 = vector.load %arg24[%c0_155, %c0_156] : memref<16x256xbf16, #tpu.memory_space<vmem>>, vector<16x256xbf16>
      tpu.vector_store %arg24[%c0_155, %c0_156], %284 {strides = array<i32>} : memref<16x256xbf16, #tpu.memory_space<vmem>>, vector<16x256xbf16>,
      %c0_157 = arith.constant 0 : index
      %c0_158 = arith.constant 0 : index
      %c0_159 = arith.constant 0 : index
      %286 = vector.load %arg4[%c0_157, %c0_158, %c0_159] : memref<1x32x128xf32, #tpu.memory_space<vmem>>, vector<1x32x128xf32>
      %287 = vector.shape_cast %286 : vector<1x32x128xf32> to vector<32x128xf32>
      %288 = arith.truncf %287 : vector<32x128xf32> to vector<32x128xbf16>
      %c0_160 = arith.constant 0 : index
      %c0_161 = arith.constant 0 : index
      %289 = vector.load %arg11[%c0_160, %c0_161] : memref<128x256xbf16, #tpu.memory_space<vmem>>, vector<128x256xbf16>
      %cst_162 = arith.constant dense<0.000000e+00> : vector<32x256xf32>
      %290 = tpu.matmul %288, %289, %cst_162 {dimension_numbers = #tpu.dot_dimension_numbers<[1], [0], [0], [1], [0, 0, 1, 1], [], []>} : vector<32x128xbf16>, vector<128x256xbf16>, vector<32x256xf32> -> vector<32x256xf32>
      %291 = arith.truncf %290 : vector<32x256xf32> to vector<32x256xbf16>
      %c0_163 = arith.constant 0 : index
      %c0_164 = arith.constant 0 : index
      %292 = vector.load %arg25[%c0_163, %c0_164] : memref<32x256xbf16, #tpu.memory_space<vmem>>, vector<32x256xbf16>
      tpu.vector_store %arg25[%c0_163, %c0_164], %291 {strides = array<i32>} : memref<32x256xbf16, #tpu.memory_space<vmem>>, vector<32x256xbf16>,
    } else {
    }
    %c0 = arith.constant 0 : index
    %c0_1 = arith.constant 0 : index
    %c0_2 = arith.constant 0 : index
    %3 = vector.load %arg2[%c0, %c0_1, %c0_2] : memref<1x8x128xf32, #tpu.memory_space<vmem>>, vector<1x8x128xf32>
    %4 = vector.shape_cast %3 : vector<1x8x128xf32> to vector<8x128xf32>
    %cst = arith.constant dense<0.000000e+00> : vector<8xf32>
    %5 = vector.multi_reduction <add>, %4, %cst [1] : vector<8x128xf32> to vector<8xf32>
    %6 = vector.shape_cast %5 : vector<8xf32> to vector<8x1xf32>
    %cst_3 = arith.constant 1.280000e+02 : f32
    %7 = vector.broadcast %cst_3 : f32 to vector<8x1xf32>
    %8 = arith.divf %6, %7 : vector<8x1xf32>
    %9 = vector.broadcast %8 : vector<8x1xf32> to vector<8x128xf32>
    %10 = arith.subf %4, %9 : vector<8x128xf32>
    %11 = arith.mulf %10, %10 : vector<8x128xf32>
    %cst_4 = arith.constant dense<0.000000e+00> : vector<8xf32>
    %12 = vector.multi_reduction <add>, %11, %cst_4 [1] : vector<8x128xf32> to vector<8xf32>
    %13 = vector.shape_cast %12 : vector<8xf32> to vector<8x1xf32>
    %cst_5 = arith.constant 1.280000e+02 : f32
    %14 = vector.broadcast %cst_5 : f32 to vector<8x1xf32>
    %15 = arith.divf %13, %14 : vector<8x1xf32>
    %16 = vector.broadcast %8 : vector<8x1xf32> to vector<8x128xf32>
    %17 = arith.subf %4, %16 : vector<8x128xf32>
    %cst_6 = arith.constant 9.99999997E-7 : f32
    %18 = vector.broadcast %cst_6 : f32 to vector<8x1xf32>
    %19 = arith.addf %15, %18 : vector<8x1xf32>
    %20 = math.rsqrt %19 : vector<8x1xf32>
    %21 = vector.broadcast %20 : vector<8x1xf32> to vector<8x128xf32>
    %22 = arith.mulf %17, %21 : vector<8x128xf32>
    %c0_7 = arith.constant 0 : index
    %c0_8 = arith.constant 0 : index
    %23 = vector.load %arg8[%c0_7, %c0_8] : memref<1x128xf32, #tpu.memory_space<vmem>>, vector<1x128xf32>
    %24 = vector.broadcast %23 : vector<1x128xf32> to vector<8x128xf32>
    %25 = arith.mulf %22, %24 : vector<8x128xf32>
    %c0_9 = arith.constant 0 : index
    %c0_10 = arith.constant 0 : index
    %26 = vector.load %arg9[%c0_9, %c0_10] : memref<1x128xf32, #tpu.memory_space<vmem>>, vector<1x128xf32>
    %27 = vector.broadcast %26 : vector<1x128xf32> to vector<8x128xf32>
    %28 = arith.addf %25, %27 : vector<8x128xf32>
    %29 = arith.truncf %28 : vector<8x128xf32> to vector<8x128xbf16>
    %c0_11 = arith.constant 0 : index
    %c0_12 = arith.constant 0 : index
    %30 = vector.load %arg5[%c0_11, %c0_12] : memref<128x128xbf16, #tpu.memory_space<vmem>>, vector<128x128xbf16>
    %cst_13 = arith.constant dense<0.000000e+00> : vector<8x128xf32>
    %31 = tpu.matmul %29, %30, %cst_13 {dimension_numbers = #tpu.dot_dimension_numbers<[1], [0], [0], [1], [0, 0, 1, 1], [], []>} : vector<8x128xbf16>, vector<128x128xbf16>, vector<8x128xf32> -> vector<8x128xf32>
    %32 = arith.truncf %31 : vector<8x128xf32> to vector<8x128xbf16>
    %33 = vector.extract_strided_slice %32 {offsets = [0, 0], sizes = [8, 32], strides = [1, 1]} : vector<8x128xbf16> to vector<8x32xbf16>
    %c0_14 = arith.constant 0 : index
    %c0_15 = arith.constant 0 : index
    %34 = vector.load %arg24[%c0_14, %c0_15] : memref<16x256xbf16, #tpu.memory_space<vmem>>, vector<16x32xbf16>
    %c0_16 = arith.constant 0 : index
    %c128 = arith.constant 128 : index
    %35 = vector.load %arg24[%c0_16, %c128] : memref<16x256xbf16, #tpu.memory_space<vmem>>, vector<16x32xbf16>
    "tpu.trace_start"() <{level = 10 : i32, message = "qe,ke->qk"}> : () -> ()
    %cst_17 = arith.constant dense<0.000000e+00> : vector<8x16xf32>
    %36 = tpu.matmul %33, %34, %cst_17 {dimension_numbers = #tpu.dot_dimension_numbers<[1], [1], [0], [0], [0, 0, 1, 0], [], []>} : vector<8x32xbf16>, vector<16x32xbf16>, vector<8x16xf32> -> vector<8x16xf32>
    "tpu.trace_stop"() : () -> ()
    %cst_18 = arith.constant dense<0xFF800000> : vector<8xf32>
    %37 = vector.multi_reduction <maximumf>, %36, %cst_18 [1] : vector<8x16xf32> to vector<8xf32>
    %38 = vector.shape_cast %37 : vector<8xf32> to vector<8x1xf32>
    %39 = vector.broadcast %38 : vector<8x1xf32> to vector<8x16xf32>
    %40 = arith.subf %36, %39 : vector<8x16xf32>
    %41 = math.exp %40 : vector<8x16xf32>
    %cst_19 = arith.constant dense<0.000000e+00> : vector<8xf32>
    %42 = vector.multi_reduction <add>, %41, %cst_19 [1] : vector<8x16xf32> to vector<8xf32>
    %43 = vector.shape_cast %42 : vector<8xf32> to vector<8x1xf32>
    %cst_20 = arith.constant 1.000000e+00 : f32
    %44 = vector.broadcast %cst_20 : f32 to vector<8x1xf32>
    %45 = arith.divf %44, %43 : vector<8x1xf32>
    %46 = vector.broadcast %45 : vector<8x1xf32> to vector<8x16xf32>
    %47 = arith.mulf %41, %46 : vector<8x16xf32>
    %48 = arith.truncf %47 : vector<8x16xf32> to vector<8x16xbf16>
    %c0_21 = arith.constant 0 : index
    %c0_22 = arith.constant 0 : index
    %c0_23 = arith.constant 0 : index
    %c0_24 = arith.constant 0 : index
    %49 = vector.load %arg22[%c0_21, %c0_22, %c0_23, %c0_24] : memref<1x4x8x16xbf16, #tpu.memory_space<vmem>>, vector<1x1x8x16xbf16>
    %50 = vector.shape_cast %49 : vector<1x1x8x16xbf16> to vector<8x16xbf16>
    %51 = vector.shape_cast %48 : vector<8x16xbf16> to vector<1x1x8x16xbf16>
    tpu.vector_store %arg22[%c0_21, %c0_22, %c0_23, %c0_24], %51 {strides = array<i32>} : memref<1x4x8x16xbf16, #tpu.memory_space<vmem>>, vector<1x1x8x16xbf16>,
    %cst_25 = arith.constant dense<0.000000e+00> : vector<8x32xf32>
    %52 = tpu.matmul %48, %35, %cst_25 {dimension_numbers = #tpu.dot_dimension_numbers<[1], [0], [0], [1], [0, 0, 1, 1], [], []>} : vector<8x16xbf16>, vector<16x32xbf16>, vector<8x32xf32> -> vector<8x32xf32>
    %53 = arith.truncf %52 : vector<8x32xf32> to vector<8x32xbf16>
    %54 = vector.extract_strided_slice %32 {offsets = [0, 32], sizes = [8, 32], strides = [1, 1]} : vector<8x128xbf16> to vector<8x32xbf16>
    %c0_26 = arith.constant 0 : index
    %c32 = arith.constant 32 : index
    %55 = vector.load %arg24[%c0_26, %c32] : memref<16x256xbf16, #tpu.memory_space<vmem>>, vector<16x32xbf16>
    %c0_27 = arith.constant 0 : index
    %c160 = arith.constant 160 : index
    %56 = vector.load %arg24[%c0_27, %c160] : memref<16x256xbf16, #tpu.memory_space<vmem>>, vector<16x32xbf16>
    "tpu.trace_start"() <{level = 10 : i32, message = "qe,ke->qk"}> : () -> ()
    %cst_28 = arith.constant dense<0.000000e+00> : vector<8x16xf32>
    %57 = tpu.matmul %54, %55, %cst_28 {dimension_numbers = #tpu.dot_dimension_numbers<[1], [1], [0], [0], [0, 0, 1, 0], [], []>} : vector<8x32xbf16>, vector<16x32xbf16>, vector<8x16xf32> -> vector<8x16xf32>
    "tpu.trace_stop"() : () -> ()
    %cst_29 = arith.constant dense<0xFF800000> : vector<8xf32>
    %58 = vector.multi_reduction <maximumf>, %57, %cst_29 [1] : vector<8x16xf32> to vector<8xf32>
    %59 = vector.shape_cast %58 : vector<8xf32> to vector<8x1xf32>
    %60 = vector.broadcast %59 : vector<8x1xf32> to vector<8x16xf32>
    %61 = arith.subf %57, %60 : vector<8x16xf32>
    %62 = math.exp %61 : vector<8x16xf32>
    %cst_30 = arith.constant dense<0.000000e+00> : vector<8xf32>
    %63 = vector.multi_reduction <add>, %62, %cst_30 [1] : vector<8x16xf32> to vector<8xf32>
    %64 = vector.shape_cast %63 : vector<8xf32> to vector<8x1xf32>
    %cst_31 = arith.constant 1.000000e+00 : f32
    %65 = vector.broadcast %cst_31 : f32 to vector<8x1xf32>
    %66 = arith.divf %65, %64 : vector<8x1xf32>
    %67 = vector.broadcast %66 : vector<8x1xf32> to vector<8x16xf32>
    %68 = arith.mulf %62, %67 : vector<8x16xf32>
    %69 = arith.truncf %68 : vector<8x16xf32> to vector<8x16xbf16>
    %c0_32 = arith.constant 0 : index
    %c1 = arith.constant 1 : index
    %c0_33 = arith.constant 0 : index
    %c0_34 = arith.constant 0 : index
    %70 = vector.load %arg22[%c0_32, %c1, %c0_33, %c0_34] : memref<1x4x8x16xbf16, #tpu.memory_space<vmem>>, vector<1x1x8x16xbf16>
    %71 = vector.shape_cast %70 : vector<1x1x8x16xbf16> to vector<8x16xbf16>
    %72 = vector.shape_cast %69 : vector<8x16xbf16> to vector<1x1x8x16xbf16>
    tpu.vector_store %arg22[%c0_32, %c1, %c0_33, %c0_34], %72 {strides = array<i32>} : memref<1x4x8x16xbf16, #tpu.memory_space<vmem>>, vector<1x1x8x16xbf16>,
    %cst_35 = arith.constant dense<0.000000e+00> : vector<8x32xf32>
    %73 = tpu.matmul %69, %56, %cst_35 {dimension_numbers = #tpu.dot_dimension_numbers<[1], [0], [0], [1], [0, 0, 1, 1], [], []>} : vector<8x16xbf16>, vector<16x32xbf16>, vector<8x32xf32> -> vector<8x32xf32>
    %74 = arith.truncf %73 : vector<8x32xf32> to vector<8x32xbf16>
    %75 = vector.extract_strided_slice %32 {offsets = [0, 64], sizes = [8, 32], strides = [1, 1]} : vector<8x128xbf16> to vector<8x32xbf16>
    %c0_36 = arith.constant 0 : index
    %c64 = arith.constant 64 : index
    %76 = vector.load %arg24[%c0_36, %c64] : memref<16x256xbf16, #tpu.memory_space<vmem>>, vector<16x32xbf16>
    %c0_37 = arith.constant 0 : index
    %c192 = arith.constant 192 : index
    %77 = vector.load %arg24[%c0_37, %c192] : memref<16x256xbf16, #tpu.memory_space<vmem>>, vector<16x32xbf16>
    "tpu.trace_start"() <{level = 10 : i32, message = "qe,ke->qk"}> : () -> ()
    %cst_38 = arith.constant dense<0.000000e+00> : vector<8x16xf32>
    %78 = tpu.matmul %75, %76, %cst_38 {dimension_numbers = #tpu.dot_dimension_numbers<[1], [1], [0], [0], [0, 0, 1, 0], [], []>} : vector<8x32xbf16>, vector<16x32xbf16>, vector<8x16xf32> -> vector<8x16xf32>
    "tpu.trace_stop"() : () -> ()
    %cst_39 = arith.constant dense<0xFF800000> : vector<8xf32>
    %79 = vector.multi_reduction <maximumf>, %78, %cst_39 [1] : vector<8x16xf32> to vector<8xf32>
    %80 = vector.shape_cast %79 : vector<8xf32> to vector<8x1xf32>
    %81 = vector.broadcast %80 : vector<8x1xf32> to vector<8x16xf32>
    %82 = arith.subf %78, %81 : vector<8x16xf32>
    %83 = math.exp %82 : vector<8x16xf32>
    %cst_40 = arith.constant dense<0.000000e+00> : vector<8xf32>
    %84 = vector.multi_reduction <add>, %83, %cst_40 [1] : vector<8x16xf32> to vector<8xf32>
    %85 = vector.shape_cast %84 : vector<8xf32> to vector<8x1xf32>
    %cst_41 = arith.constant 1.000000e+00 : f32
    %86 = vector.broadcast %cst_41 : f32 to vector<8x1xf32>
    %87 = arith.divf %86, %85 : vector<8x1xf32>
    %88 = vector.broadcast %87 : vector<8x1xf32> to vector<8x16xf32>
    %89 = arith.mulf %83, %88 : vector<8x16xf32>
    %90 = arith.truncf %89 : vector<8x16xf32> to vector<8x16xbf16>
    %c0_42 = arith.constant 0 : index
    %c2 = arith.constant 2 : index
    %c0_43 = arith.constant 0 : index
    %c0_44 = arith.constant 0 : index
    %91 = vector.load %arg22[%c0_42, %c2, %c0_43, %c0_44] : memref<1x4x8x16xbf16, #tpu.memory_space<vmem>>, vector<1x1x8x16xbf16>
    %92 = vector.shape_cast %91 : vector<1x1x8x16xbf16> to vector<8x16xbf16>
    %93 = vector.shape_cast %90 : vector<8x16xbf16> to vector<1x1x8x16xbf16>
    tpu.vector_store %arg22[%c0_42, %c2, %c0_43, %c0_44], %93 {strides = array<i32>} : memref<1x4x8x16xbf16, #tpu.memory_space<vmem>>, vector<1x1x8x16xbf16>,
    %cst_45 = arith.constant dense<0.000000e+00> : vector<8x32xf32>
    %94 = tpu.matmul %90, %77, %cst_45 {dimension_numbers = #tpu.dot_dimension_numbers<[1], [0], [0], [1], [0, 0, 1, 1], [], []>} : vector<8x16xbf16>, vector<16x32xbf16>, vector<8x32xf32> -> vector<8x32xf32>
    %95 = arith.truncf %94 : vector<8x32xf32> to vector<8x32xbf16>
    %96 = vector.extract_strided_slice %32 {offsets = [0, 96], sizes = [8, 32], strides = [1, 1]} : vector<8x128xbf16> to vector<8x32xbf16>
    %c0_46 = arith.constant 0 : index
    %c96 = arith.constant 96 : index
    %97 = vector.load %arg24[%c0_46, %c96] : memref<16x256xbf16, #tpu.memory_space<vmem>>, vector<16x32xbf16>
    %c0_47 = arith.constant 0 : index
    %c224 = arith.constant 224 : index
    %98 = vector.load %arg24[%c0_47, %c224] : memref<16x256xbf16, #tpu.memory_space<vmem>>, vector<16x32xbf16>
    "tpu.trace_start"() <{level = 10 : i32, message = "qe,ke->qk"}> : () -> ()
    %cst_48 = arith.constant dense<0.000000e+00> : vector<8x16xf32>
    %99 = tpu.matmul %96, %97, %cst_48 {dimension_numbers = #tpu.dot_dimension_numbers<[1], [1], [0], [0], [0, 0, 1, 0], [], []>} : vector<8x32xbf16>, vector<16x32xbf16>, vector<8x16xf32> -> vector<8x16xf32>
    "tpu.trace_stop"() : () -> ()
    %cst_49 = arith.constant dense<0xFF800000> : vector<8xf32>
    %100 = vector.multi_reduction <maximumf>, %99, %cst_49 [1] : vector<8x16xf32> to vector<8xf32>
    %101 = vector.shape_cast %100 : vector<8xf32> to vector<8x1xf32>
    %102 = vector.broadcast %101 : vector<8x1xf32> to vector<8x16xf32>
    %103 = arith.subf %99, %102 : vector<8x16xf32>
    %104 = math.exp %103 : vector<8x16xf32>
    %cst_50 = arith.constant dense<0.000000e+00> : vector<8xf32>
    %105 = vector.multi_reduction <add>, %104, %cst_50 [1] : vector<8x16xf32> to vector<8xf32>
    %106 = vector.shape_cast %105 : vector<8xf32> to vector<8x1xf32>
    %cst_51 = arith.constant 1.000000e+00 : f32
    %107 = vector.broadcast %cst_51 : f32 to vector<8x1xf32>
    %108 = arith.divf %107, %106 : vector<8x1xf32>
    %109 = vector.broadcast %108 : vector<8x1xf32> to vector<8x16xf32>
    %110 = arith.mulf %104, %109 : vector<8x16xf32>
    %111 = arith.truncf %110 : vector<8x16xf32> to vector<8x16xbf16>
    %c0_52 = arith.constant 0 : index
    %c3 = arith.constant 3 : index
    %c0_53 = arith.constant 0 : index
    %c0_54 = arith.constant 0 : index
    %112 = vector.load %arg22[%c0_52, %c3, %c0_53, %c0_54] : memref<1x4x8x16xbf16, #tpu.memory_space<vmem>>, vector<1x1x8x16xbf16>
    %113 = vector.shape_cast %112 : vector<1x1x8x16xbf16> to vector<8x16xbf16>
    %114 = vector.shape_cast %111 : vector<8x16xbf16> to vector<1x1x8x16xbf16>
    tpu.vector_store %arg22[%c0_52, %c3, %c0_53, %c0_54], %114 {strides = array<i32>} : memref<1x4x8x16xbf16, #tpu.memory_space<vmem>>, vector<1x1x8x16xbf16>,
    %cst_55 = arith.constant dense<0.000000e+00> : vector<8x32xf32>
    %115 = tpu.matmul %111, %98, %cst_55 {dimension_numbers = #tpu.dot_dimension_numbers<[1], [0], [0], [1], [0, 0, 1, 1], [], []>} : vector<8x16xbf16>, vector<16x32xbf16>, vector<8x32xf32> -> vector<8x32xf32>
    %116 = arith.truncf %115 : vector<8x32xf32> to vector<8x32xbf16>
    %117 = tpu.concatenate %53, %74, %95, %116 in 1 : vector<8x32xbf16>, vector<8x32xbf16>, vector<8x32xbf16>, vector<8x32xbf16> -> vector<8x128xbf16>
    %c0_56 = arith.constant 0 : index
    %c0_57 = arith.constant 0 : index
    %118 = vector.load %arg7[%c0_56, %c0_57] : memref<128x128xbf16, #tpu.memory_space<vmem>>, vector<128x128xbf16>
    %cst_58 = arith.constant dense<0.000000e+00> : vector<8x128xf32>
    %119 = tpu.matmul %117, %118, %cst_58 {dimension_numbers = #tpu.dot_dimension_numbers<[1], [0], [0], [1], [0, 0, 1, 1], [], []>} : vector<8x128xbf16>, vector<128x128xbf16>, vector<8x128xf32> -> vector<8x128xf32>
    %120 = arith.addf %119, %4 : vector<8x128xf32>
    %cst_59 = arith.constant dense<0.000000e+00> : vector<8xf32>
    %121 = vector.multi_reduction <add>, %120, %cst_59 [1] : vector<8x128xf32> to vector<8xf32>
    %122 = vector.shape_cast %121 : vector<8xf32> to vector<8x1xf32>
    %cst_60 = arith.constant 1.280000e+02 : f32
    %123 = vector.broadcast %cst_60 : f32 to vector<8x1xf32>
    %124 = arith.divf %122, %123 : vector<8x1xf32>
    %125 = vector.broadcast %124 : vector<8x1xf32> to vector<8x128xf32>
    %126 = arith.subf %120, %125 : vector<8x128xf32>
    %127 = arith.mulf %126, %126 : vector<8x128xf32>
    %cst_61 = arith.constant dense<0.000000e+00> : vector<8xf32>
    %128 = vector.multi_reduction <add>, %127, %cst_61 [1] : vector<8x128xf32> to vector<8xf32>
    %129 = vector.shape_cast %128 : vector<8xf32> to vector<8x1xf32>
    %cst_62 = arith.constant 1.280000e+02 : f32
    %130 = vector.broadcast %cst_62 : f32 to vector<8x1xf32>
    %131 = arith.divf %129, %130 : vector<8x1xf32>
    %132 = vector.broadcast %124 : vector<8x1xf32> to vector<8x128xf32>
    %133 = arith.subf %120, %132 : vector<8x128xf32>
    %cst_63 = arith.constant 9.99999997E-7 : f32
    %134 = vector.broadcast %cst_63 : f32 to vector<8x1xf32>
    %135 = arith.addf %131, %134 : vector<8x1xf32>
    %136 = math.rsqrt %135 : vector<8x1xf32>
    %137 = vector.broadcast %136 : vector<8x1xf32> to vector<8x128xf32>
    %138 = arith.mulf %133, %137 : vector<8x128xf32>
    %c0_64 = arith.constant 0 : index
    %c0_65 = arith.constant 0 : index
    %139 = vector.load %arg13[%c0_64, %c0_65] : memref<1x128xf32, #tpu.memory_space<vmem>>, vector<1x128xf32>
    %140 = vector.broadcast %139 : vector<1x128xf32> to vector<8x128xf32>
    %141 = arith.mulf %138, %140 : vector<8x128xf32>
    %c0_66 = arith.constant 0 : index
    %c0_67 = arith.constant 0 : index
    %142 = vector.load %arg14[%c0_66, %c0_67] : memref<1x128xf32, #tpu.memory_space<vmem>>, vector<1x128xf32>
    %143 = vector.broadcast %142 : vector<1x128xf32> to vector<8x128xf32>
    %144 = arith.addf %141, %143 : vector<8x128xf32>
    %145 = arith.truncf %144 : vector<8x128xf32> to vector<8x128xbf16>
    %c0_68 = arith.constant 0 : index
    %c0_69 = arith.constant 0 : index
    %146 = vector.load %arg10[%c0_68, %c0_69] : memref<128x128xbf16, #tpu.memory_space<vmem>>, vector<128x128xbf16>
    %cst_70 = arith.constant dense<0.000000e+00> : vector<8x128xf32>
    %147 = tpu.matmul %145, %146, %cst_70 {dimension_numbers = #tpu.dot_dimension_numbers<[1], [0], [0], [1], [0, 0, 1, 1], [], []>} : vector<8x128xbf16>, vector<128x128xbf16>, vector<8x128xf32> -> vector<8x128xf32>
    %148 = arith.truncf %147 : vector<8x128xf32> to vector<8x128xbf16>
    %149 = vector.extract_strided_slice %148 {offsets = [0, 0], sizes = [8, 32], strides = [1, 1]} : vector<8x128xbf16> to vector<8x32xbf16>
    %c0_71 = arith.constant 0 : index
    %c0_72 = arith.constant 0 : index
    %150 = vector.load %arg25[%c0_71, %c0_72] : memref<32x256xbf16, #tpu.memory_space<vmem>>, vector<32x32xbf16>
    %c0_73 = arith.constant 0 : index
    %c128_74 = arith.constant 128 : index
    %151 = vector.load %arg25[%c0_73, %c128_74] : memref<32x256xbf16, #tpu.memory_space<vmem>>, vector<32x32xbf16>
    "tpu.trace_start"() <{level = 10 : i32, message = "qe,ke->qk"}> : () -> ()
    %cst_75 = arith.constant dense<0.000000e+00> : vector<8x32xf32>
    %152 = tpu.matmul %149, %150, %cst_75 {dimension_numbers = #tpu.dot_dimension_numbers<[1], [1], [0], [0], [0, 0, 1, 0], [], []>} : vector<8x32xbf16>, vector<32x32xbf16>, vector<8x32xf32> -> vector<8x32xf32>
    "tpu.trace_stop"() : () -> ()
    %cst_76 = arith.constant dense<0xFF800000> : vector<8xf32>
    %153 = vector.multi_reduction <maximumf>, %152, %cst_76 [1] : vector<8x32xf32> to vector<8xf32>
    %154 = vector.shape_cast %153 : vector<8xf32> to vector<8x1xf32>
    %155 = vector.broadcast %154 : vector<8x1xf32> to vector<8x32xf32>
    %156 = arith.subf %152, %155 : vector<8x32xf32>
    %157 = math.exp %156 : vector<8x32xf32>
    %cst_77 = arith.constant dense<0.000000e+00> : vector<8xf32>
    %158 = vector.multi_reduction <add>, %157, %cst_77 [1] : vector<8x32xf32> to vector<8xf32>
    %159 = vector.shape_cast %158 : vector<8xf32> to vector<8x1xf32>
    %cst_78 = arith.constant 1.000000e+00 : f32
    %160 = vector.broadcast %cst_78 : f32 to vector<8x1xf32>
    %161 = arith.divf %160, %159 : vector<8x1xf32>
    %162 = vector.broadcast %161 : vector<8x1xf32> to vector<8x32xf32>
    %163 = arith.mulf %157, %162 : vector<8x32xf32>
    %164 = arith.truncf %163 : vector<8x32xf32> to vector<8x32xbf16>
    %c0_79 = arith.constant 0 : index
    %c0_80 = arith.constant 0 : index
    %c0_81 = arith.constant 0 : index
    %c0_82 = arith.constant 0 : index
    %165 = vector.load %arg23[%c0_79, %c0_80, %c0_81, %c0_82] : memref<1x4x8x32xbf16, #tpu.memory_space<vmem>>, vector<1x1x8x32xbf16>
    %166 = vector.shape_cast %165 : vector<1x1x8x32xbf16> to vector<8x32xbf16>
    %167 = vector.shape_cast %164 : vector<8x32xbf16> to vector<1x1x8x32xbf16>
    tpu.vector_store %arg23[%c0_79, %c0_80, %c0_81, %c0_82], %167 {strides = array<i32>} : memref<1x4x8x32xbf16, #tpu.memory_space<vmem>>, vector<1x1x8x32xbf16>,
    %cst_83 = arith.constant dense<0.000000e+00> : vector<8x32xf32>
    %168 = tpu.matmul %164, %151, %cst_83 {dimension_numbers = #tpu.dot_dimension_numbers<[1], [0], [0], [1], [0, 0, 1, 1], [], []>} : vector<8x32xbf16>, vector<32x32xbf16>, vector<8x32xf32> -> vector<8x32xf32>
    %169 = arith.truncf %168 : vector<8x32xf32> to vector<8x32xbf16>
    %170 = vector.extract_strided_slice %148 {offsets = [0, 32], sizes = [8, 32], strides = [1, 1]} : vector<8x128xbf16> to vector<8x32xbf16>
    %c0_84 = arith.constant 0 : index
    %c32_85 = arith.constant 32 : index
    %171 = vector.load %arg25[%c0_84, %c32_85] : memref<32x256xbf16, #tpu.memory_space<vmem>>, vector<32x32xbf16>
    %c0_86 = arith.constant 0 : index
    %c160_87 = arith.constant 160 : index
    %172 = vector.load %arg25[%c0_86, %c160_87] : memref<32x256xbf16, #tpu.memory_space<vmem>>, vector<32x32xbf16>
    "tpu.trace_start"() <{level = 10 : i32, message = "qe,ke->qk"}> : () -> ()
    %cst_88 = arith.constant dense<0.000000e+00> : vector<8x32xf32>
    %173 = tpu.matmul %170, %171, %cst_88 {dimension_numbers = #tpu.dot_dimension_numbers<[1], [1], [0], [0], [0, 0, 1, 0], [], []>} : vector<8x32xbf16>, vector<32x32xbf16>, vector<8x32xf32> -> vector<8x32xf32>
    "tpu.trace_stop"() : () -> ()
    %cst_89 = arith.constant dense<0xFF800000> : vector<8xf32>
    %174 = vector.multi_reduction <maximumf>, %173, %cst_89 [1] : vector<8x32xf32> to vector<8xf32>
    %175 = vector.shape_cast %174 : vector<8xf32> to vector<8x1xf32>
    %176 = vector.broadcast %175 : vector<8x1xf32> to vector<8x32xf32>
    %177 = arith.subf %173, %176 : vector<8x32xf32>
    %178 = math.exp %177 : vector<8x32xf32>
    %cst_90 = arith.constant dense<0.000000e+00> : vector<8xf32>
    %179 = vector.multi_reduction <add>, %178, %cst_90 [1] : vector<8x32xf32> to vector<8xf32>
    %180 = vector.shape_cast %179 : vector<8xf32> to vector<8x1xf32>
    %cst_91 = arith.constant 1.000000e+00 : f32
    %181 = vector.broadcast %cst_91 : f32 to vector<8x1xf32>
    %182 = arith.divf %181, %180 : vector<8x1xf32>
    %183 = vector.broadcast %182 : vector<8x1xf32> to vector<8x32xf32>
    %184 = arith.mulf %178, %183 : vector<8x32xf32>
    %185 = arith.truncf %184 : vector<8x32xf32> to vector<8x32xbf16>
    %c0_92 = arith.constant 0 : index
    %c1_93 = arith.constant 1 : index
    %c0_94 = arith.constant 0 : index
    %c0_95 = arith.constant 0 : index
    %186 = vector.load %arg23[%c0_92, %c1_93, %c0_94, %c0_95] : memref<1x4x8x32xbf16, #tpu.memory_space<vmem>>, vector<1x1x8x32xbf16>
    %187 = vector.shape_cast %186 : vector<1x1x8x32xbf16> to vector<8x32xbf16>
    %188 = vector.shape_cast %185 : vector<8x32xbf16> to vector<1x1x8x32xbf16>
    tpu.vector_store %arg23[%c0_92, %c1_93, %c0_94, %c0_95], %188 {strides = array<i32>} : memref<1x4x8x32xbf16, #tpu.memory_space<vmem>>, vector<1x1x8x32xbf16>,
    %cst_96 = arith.constant dense<0.000000e+00> : vector<8x32xf32>
    %189 = tpu.matmul %185, %172, %cst_96 {dimension_numbers = #tpu.dot_dimension_numbers<[1], [0], [0], [1], [0, 0, 1, 1], [], []>} : vector<8x32xbf16>, vector<32x32xbf16>, vector<8x32xf32> -> vector<8x32xf32>
    %190 = arith.truncf %189 : vector<8x32xf32> to vector<8x32xbf16>
    %191 = vector.extract_strided_slice %148 {offsets = [0, 64], sizes = [8, 32], strides = [1, 1]} : vector<8x128xbf16> to vector<8x32xbf16>
    %c0_97 = arith.constant 0 : index
    %c64_98 = arith.constant 64 : index
    %192 = vector.load %arg25[%c0_97, %c64_98] : memref<32x256xbf16, #tpu.memory_space<vmem>>, vector<32x32xbf16>
    %c0_99 = arith.constant 0 : index
    %c192_100 = arith.constant 192 : index
    %193 = vector.load %arg25[%c0_99, %c192_100] : memref<32x256xbf16, #tpu.memory_space<vmem>>, vector<32x32xbf16>
    "tpu.trace_start"() <{level = 10 : i32, message = "qe,ke->qk"}> : () -> ()
    %cst_101 = arith.constant dense<0.000000e+00> : vector<8x32xf32>
    %194 = tpu.matmul %191, %192, %cst_101 {dimension_numbers = #tpu.dot_dimension_numbers<[1], [1], [0], [0], [0, 0, 1, 0], [], []>} : vector<8x32xbf16>, vector<32x32xbf16>, vector<8x32xf32> -> vector<8x32xf32>
    "tpu.trace_stop"() : () -> ()
    %cst_102 = arith.constant dense<0xFF800000> : vector<8xf32>
    %195 = vector.multi_reduction <maximumf>, %194, %cst_102 [1] : vector<8x32xf32> to vector<8xf32>
    %196 = vector.shape_cast %195 : vector<8xf32> to vector<8x1xf32>
    %197 = vector.broadcast %196 : vector<8x1xf32> to vector<8x32xf32>
    %198 = arith.subf %194, %197 : vector<8x32xf32>
    %199 = math.exp %198 : vector<8x32xf32>
    %cst_103 = arith.constant dense<0.000000e+00> : vector<8xf32>
    %200 = vector.multi_reduction <add>, %199, %cst_103 [1] : vector<8x32xf32> to vector<8xf32>
    %201 = vector.shape_cast %200 : vector<8xf32> to vector<8x1xf32>
    %cst_104 = arith.constant 1.000000e+00 : f32
    %202 = vector.broadcast %cst_104 : f32 to vector<8x1xf32>
    %203 = arith.divf %202, %201 : vector<8x1xf32>
    %204 = vector.broadcast %203 : vector<8x1xf32> to vector<8x32xf32>
    %205 = arith.mulf %199, %204 : vector<8x32xf32>
    %206 = arith.truncf %205 : vector<8x32xf32> to vector<8x32xbf16>
    %c0_105 = arith.constant 0 : index
    %c2_106 = arith.constant 2 : index
    %c0_107 = arith.constant 0 : index
    %c0_108 = arith.constant 0 : index
    %207 = vector.load %arg23[%c0_105, %c2_106, %c0_107, %c0_108] : memref<1x4x8x32xbf16, #tpu.memory_space<vmem>>, vector<1x1x8x32xbf16>
    %208 = vector.shape_cast %207 : vector<1x1x8x32xbf16> to vector<8x32xbf16>
    %209 = vector.shape_cast %206 : vector<8x32xbf16> to vector<1x1x8x32xbf16>
    tpu.vector_store %arg23[%c0_105, %c2_106, %c0_107, %c0_108], %209 {strides = array<i32>} : memref<1x4x8x32xbf16, #tpu.memory_space<vmem>>, vector<1x1x8x32xbf16>,
    %cst_109 = arith.constant dense<0.000000e+00> : vector<8x32xf32>
    %210 = tpu.matmul %206, %193, %cst_109 {dimension_numbers = #tpu.dot_dimension_numbers<[1], [0], [0], [1], [0, 0, 1, 1], [], []>} : vector<8x32xbf16>, vector<32x32xbf16>, vector<8x32xf32> -> vector<8x32xf32>
    %211 = arith.truncf %210 : vector<8x32xf32> to vector<8x32xbf16>
    %212 = vector.extract_strided_slice %148 {offsets = [0, 96], sizes = [8, 32], strides = [1, 1]} : vector<8x128xbf16> to vector<8x32xbf16>
    %c0_110 = arith.constant 0 : index
    %c96_111 = arith.constant 96 : index
    %213 = vector.load %arg25[%c0_110, %c96_111] : memref<32x256xbf16, #tpu.memory_space<vmem>>, vector<32x32xbf16>
    %c0_112 = arith.constant 0 : index
    %c224_113 = arith.constant 224 : index
    %214 = vector.load %arg25[%c0_112, %c224_113] : memref<32x256xbf16, #tpu.memory_space<vmem>>, vector<32x32xbf16>
    "tpu.trace_start"() <{level = 10 : i32, message = "qe,ke->qk"}> : () -> ()
    %cst_114 = arith.constant dense<0.000000e+00> : vector<8x32xf32>
    %215 = tpu.matmul %212, %213, %cst_114 {dimension_numbers = #tpu.dot_dimension_numbers<[1], [1], [0], [0], [0, 0, 1, 0], [], []>} : vector<8x32xbf16>, vector<32x32xbf16>, vector<8x32xf32> -> vector<8x32xf32>
    "tpu.trace_stop"() : () -> ()
    %cst_115 = arith.constant dense<0xFF800000> : vector<8xf32>
    %216 = vector.multi_reduction <maximumf>, %215, %cst_115 [1] : vector<8x32xf32> to vector<8xf32>
    %217 = vector.shape_cast %216 : vector<8xf32> to vector<8x1xf32>
    %218 = vector.broadcast %217 : vector<8x1xf32> to vector<8x32xf32>
    %219 = arith.subf %215, %218 : vector<8x32xf32>
    %220 = math.exp %219 : vector<8x32xf32>
    %cst_116 = arith.constant dense<0.000000e+00> : vector<8xf32>
    %221 = vector.multi_reduction <add>, %220, %cst_116 [1] : vector<8x32xf32> to vector<8xf32>
    %222 = vector.shape_cast %221 : vector<8xf32> to vector<8x1xf32>
    %cst_117 = arith.constant 1.000000e+00 : f32
    %223 = vector.broadcast %cst_117 : f32 to vector<8x1xf32>
    %224 = arith.divf %223, %222 : vector<8x1xf32>
    %225 = vector.broadcast %224 : vector<8x1xf32> to vector<8x32xf32>
    %226 = arith.mulf %220, %225 : vector<8x32xf32>
    %227 = arith.truncf %226 : vector<8x32xf32> to vector<8x32xbf16>
    %c0_118 = arith.constant 0 : index
    %c3_119 = arith.constant 3 : index
    %c0_120 = arith.constant 0 : index
    %c0_121 = arith.constant 0 : index
    %228 = vector.load %arg23[%c0_118, %c3_119, %c0_120, %c0_121] : memref<1x4x8x32xbf16, #tpu.memory_space<vmem>>, vector<1x1x8x32xbf16>
    %229 = vector.shape_cast %228 : vector<1x1x8x32xbf16> to vector<8x32xbf16>
    %230 = vector.shape_cast %227 : vector<8x32xbf16> to vector<1x1x8x32xbf16>
    tpu.vector_store %arg23[%c0_118, %c3_119, %c0_120, %c0_121], %230 {strides = array<i32>} : memref<1x4x8x32xbf16, #tpu.memory_space<vmem>>, vector<1x1x8x32xbf16>,
    %cst_122 = arith.constant dense<0.000000e+00> : vector<8x32xf32>
    %231 = tpu.matmul %227, %214, %cst_122 {dimension_numbers = #tpu.dot_dimension_numbers<[1], [0], [0], [1], [0, 0, 1, 1], [], []>} : vector<8x32xbf16>, vector<32x32xbf16>, vector<8x32xf32> -> vector<8x32xf32>
    %232 = arith.truncf %231 : vector<8x32xf32> to vector<8x32xbf16>
    %233 = tpu.concatenate %169, %190, %211, %232 in 1 : vector<8x32xbf16>, vector<8x32xbf16>, vector<8x32xbf16>, vector<8x32xbf16> -> vector<8x128xbf16>
    %c0_123 = arith.constant 0 : index
    %c0_124 = arith.constant 0 : index
    %234 = vector.load %arg12[%c0_123, %c0_124] : memref<128x128xbf16, #tpu.memory_space<vmem>>, vector<128x128xbf16>
    %cst_125 = arith.constant dense<0.000000e+00> : vector<8x128xf32>
    %235 = tpu.matmul %233, %234, %cst_125 {dimension_numbers = #tpu.dot_dimension_numbers<[1], [0], [0], [1], [0, 0, 1, 1], [], []>} : vector<8x128xbf16>, vector<128x128xbf16>, vector<8x128xf32> -> vector<8x128xf32>
    %236 = arith.addf %235, %120 : vector<8x128xf32>
    %cst_126 = arith.constant dense<0.000000e+00> : vector<8xf32>
    %237 = vector.multi_reduction <add>, %236, %cst_126 [1] : vector<8x128xf32> to vector<8xf32>
    %238 = vector.shape_cast %237 : vector<8xf32> to vector<8x1xf32>
    %cst_127 = arith.constant 1.280000e+02 : f32
    %239 = vector.broadcast %cst_127 : f32 to vector<8x1xf32>
    %240 = arith.divf %238, %239 : vector<8x1xf32>
    %241 = vector.broadcast %240 : vector<8x1xf32> to vector<8x128xf32>
    %242 = arith.subf %236, %241 : vector<8x128xf32>
    %243 = arith.mulf %242, %242 : vector<8x128xf32>
    %cst_128 = arith.constant dense<0.000000e+00> : vector<8xf32>
    %244 = vector.multi_reduction <add>, %243, %cst_128 [1] : vector<8x128xf32> to vector<8xf32>
    %245 = vector.shape_cast %244 : vector<8xf32> to vector<8x1xf32>
    %cst_129 = arith.constant 1.280000e+02 : f32
    %246 = vector.broadcast %cst_129 : f32 to vector<8x1xf32>
    %247 = arith.divf %245, %246 : vector<8x1xf32>
    %248 = vector.broadcast %240 : vector<8x1xf32> to vector<8x128xf32>
    %249 = arith.subf %236, %248 : vector<8x128xf32>
    %cst_130 = arith.constant 9.99999997E-7 : f32
    %250 = vector.broadcast %cst_130 : f32 to vector<8x1xf32>
    %251 = arith.addf %247, %250 : vector<8x1xf32>
    %252 = math.rsqrt %251 : vector<8x1xf32>
    %253 = vector.broadcast %252 : vector<8x1xf32> to vector<8x128xf32>
    %254 = arith.mulf %249, %253 : vector<8x128xf32>
    %c0_131 = arith.constant 0 : index
    %c0_132 = arith.constant 0 : index
    %255 = vector.load %arg19[%c0_131, %c0_132] : memref<1x128xf32, #tpu.memory_space<vmem>>, vector<1x128xf32>
    %256 = vector.broadcast %255 : vector<1x128xf32> to vector<8x128xf32>
    %257 = arith.mulf %254, %256 : vector<8x128xf32>
    %c0_133 = arith.constant 0 : index
    %c0_134 = arith.constant 0 : index
    %258 = vector.load %arg20[%c0_133, %c0_134] : memref<1x128xf32, #tpu.memory_space<vmem>>, vector<1x128xf32>
    %259 = vector.broadcast %258 : vector<1x128xf32> to vector<8x128xf32>
    %260 = arith.addf %257, %259 : vector<8x128xf32>
    %261 = arith.truncf %260 : vector<8x128xf32> to vector<8x128xbf16>
    %c0_135 = arith.constant 0 : index
    %c0_136 = arith.constant 0 : index
    %262 = vector.load %arg15[%c0_135, %c0_136] : memref<128x256xbf16, #tpu.memory_space<vmem>>, vector<128x256xbf16>
    %cst_137 = arith.constant dense<0.000000e+00> : vector<8x256xf32>
    %263 = tpu.matmul %261, %262, %cst_137 {dimension_numbers = #tpu.dot_dimension_numbers<[1], [0], [0], [1], [0, 0, 1, 1], [], []>} : vector<8x128xbf16>, vector<128x256xbf16>, vector<8x256xf32> -> vector<8x256xf32>
    %c0_138 = arith.constant 0 : index
    %c0_139 = arith.constant 0 : index
    %264 = vector.load %arg16[%c0_138, %c0_139] : memref<1x256xf32, #tpu.memory_space<vmem>>, vector<1x256xf32>
    %265 = vector.broadcast %264 : vector<1x256xf32> to vector<8x256xf32>
    %266 = arith.addf %263, %265 : vector<8x256xf32>
    %cst_140 = arith.constant 0.000000e+00 : f32
    %267 = vector.broadcast %cst_140 : f32 to vector<8x256xf32>
    %268 = arith.maximumf %266, %267 : vector<8x256xf32>
    %269 = arith.truncf %268 : vector<8x256xf32> to vector<8x256xbf16>
    %c0_141 = arith.constant 0 : index
    %c0_142 = arith.constant 0 : index
    %270 = vector.load %arg17[%c0_141, %c0_142] : memref<256x128xbf16, #tpu.memory_space<vmem>>, vector<256x128xbf16>
    %cst_143 = arith.constant dense<0.000000e+00> : vector<8x128xf32>
    %271 = tpu.matmul %269, %270, %cst_143 {dimension_numbers = #tpu.dot_dimension_numbers<[1], [0], [0], [1], [0, 0, 1, 1], [], []>} : vector<8x256xbf16>, vector<256x128xbf16>, vector<8x128xf32> -> vector<8x128xf32>
    %c0_144 = arith.constant 0 : index
    %c0_145 = arith.constant 0 : index
    %272 = vector.load %arg18[%c0_144, %c0_145] : memref<1x128xf32, #tpu.memory_space<vmem>>, vector<1x128xf32>
    %273 = vector.broadcast %272 : vector<1x128xf32> to vector<8x128xf32>
    %274 = arith.addf %271, %273 : vector<8x128xf32>
    %275 = arith.addf %274, %236 : vector<8x128xf32>
    %c0_146 = arith.constant 0 : index
    %c0_147 = arith.constant 0 : index
    %c0_148 = arith.constant 0 : index
    %276 = vector.load %arg21[%c0_146, %c0_147, %c0_148] : memref<1x8x128xf32, #tpu.memory_space<vmem>>, vector<1x8x128xf32>
    %277 = vector.shape_cast %276 : vector<1x8x128xf32> to vector<8x128xf32>
    %278 = vector.shape_cast %275 : vector<8x128xf32> to vector<1x8x128xf32>
    tpu.vector_store %arg21[%c0_146, %c0_147, %c0_148], %278 {strides = array<i32>} : memref<1x8x128xf32, #tpu.memory_space<vmem>>, vector<1x8x128xf32>,
    return
  }
  func.func @transform_0(%arg0: i32, %arg1: i32) -> (i32, i32, i32) {
    %c0_i32 = arith.constant 0 : i32
    %c0_i32_0 = arith.constant 0 : i32
    return %arg0, %arg1, %c0_i32 : i32, i32, i32
  }
  func.func @transform_1(%arg0: i32, %arg1: i32) -> (i32, i32, i32) {
    %c0_i32 = arith.constant 0 : i32
    %c0_i32_0 = arith.constant 0 : i32
    %c0_i32_1 = arith.constant 0 : i32
    return %arg0, %c0_i32, %c0_i32_0 : i32, i32, i32
  }
  func.func @transform_2(%arg0: i32, %arg1: i32) -> (i32, i32, i32) {
    %c0_i32 = arith.constant 0 : i32
    %c0_i32_0 = arith.constant 0 : i32
    %c0_i32_1 = arith.constant 0 : i32
    return %arg0, %c0_i32, %c0_i32_0 : i32, i32, i32
  }
  func.func @transform_3(%arg0: i32, %arg1: i32) -> (i32, i32) {
    %c0_i32 = arith.constant 0 : i32
    %c0_i32_0 = arith.constant 0 : i32
    %c0_i32_1 = arith.constant 0 : i32
    return %c0_i32, %c0_i32_0 : i32, i32
  }
  func.func @transform_4(%arg0: i32, %arg1: i32) -> (i32, i32) {
    %c0_i32 = arith.constant 0 : i32
    %c0_i32_0 = arith.constant 0 : i32
    %c0_i32_1 = arith.constant 0 : i32
    return %c0_i32, %c0_i32_0 : i32, i32
  }
  func.func @transform_5(%arg0: i32, %arg1: i32) -> (i32, i32) {
    %c0_i32 = arith.constant 0 : i32
    %c0_i32_0 = arith.constant 0 : i32
    %c0_i32_1 = arith.constant 0 : i32
    return %c0_i32, %c0_i32_0 : i32, i32
  }
  func.func @transform_6(%arg0: i32, %arg1: i32) -> (i32, i32) {
    %c0_i32 = arith.constant 0 : i32
    %c0_i32_0 = arith.constant 0 : i32
    %c0_i32_1 = arith.constant 0 : i32
    return %c0_i32, %c0_i32_0 : i32, i32
  }
  func.func @transform_7(%arg0: i32, %arg1: i32) -> (i32, i32) {
    %c0_i32 = arith.constant 0 : i32
    %c0_i32_0 = arith.constant 0 : i32
    %c0_i32_1 = arith.constant 0 : i32
    return %c0_i32, %c0_i32_0 : i32, i32
  }
  func.func @transform_8(%arg0: i32, %arg1: i32) -> (i32, i32) {
    %c0_i32 = arith.constant 0 : i32
    %c0_i32_0 = arith.constant 0 : i32
    %c0_i32_1 = arith.constant 0 : i32
    return %c0_i32, %c0_i32_0 : i32, i32
  }
  func.func @transform_9(%arg0: i32, %arg1: i32) -> (i32, i32) {
    %c0_i32 = arith.constant 0 : i32
    %c0_i32_0 = arith.constant 0 : i32
    %c0_i32_1 = arith.constant 0 : i32
    return %c0_i32, %c0_i32_0 : i32, i32
  }
  func.func @transform_10(%arg0: i32, %arg1: i32) -> (i32, i32) {
    %c0_i32 = arith.constant 0 : i32
    %c0_i32_0 = arith.constant 0 : i32
    %c0_i32_1 = arith.constant 0 : i32
    return %c0_i32, %c0_i32_0 : i32, i32
  }
  func.func @transform_11(%arg0: i32, %arg1: i32) -> (i32, i32) {
    %c0_i32 = arith.constant 0 : i32
    %c0_i32_0 = arith.constant 0 : i32
    %c0_i32_1 = arith.constant 0 : i32
    return %c0_i32, %c0_i32_0 : i32, i32
  }
  func.func @transform_12(%arg0: i32, %arg1: i32) -> (i32, i32) {
    %c0_i32 = arith.constant 0 : i32
    %c0_i32_0 = arith.constant 0 : i32
    %c0_i32_1 = arith.constant 0 : i32
    return %c0_i32, %c0_i32_0 : i32, i32
  }
  func.func @transform_13(%arg0: i32, %arg1: i32) -> (i32, i32) {
    %c0_i32 = arith.constant 0 : i32
    %c0_i32_0 = arith.constant 0 : i32
    %c0_i32_1 = arith.constant 0 : i32
    return %c0_i32, %c0_i32_0 : i32, i32
  }
  func.func @transform_14(%arg0: i32, %arg1: i32) -> (i32, i32) {
    %c0_i32 = arith.constant 0 : i32
    %c0_i32_0 = arith.constant 0 : i32
    %c0_i32_1 = arith.constant 0 : i32
    return %c0_i32, %c0_i32_0 : i32, i32
  }
  func.func @transform_15(%arg0: i32, %arg1: i32) -> (i32, i32) {
    %c0_i32 = arith.constant 0 : i32
    %c0_i32_0 = arith.constant 0 : i32
    %c0_i32_1 = arith.constant 0 : i32
    return %c0_i32, %c0_i32_0 : i32, i32
  }
  func.func @transform_16(%arg0: i32, %arg1: i32) -> (i32, i32) {
    %c0_i32 = arith.constant 0 : i32
    %c0_i32_0 = arith.constant 0 : i32
    %c0_i32_1 = arith.constant 0 : i32
    return %c0_i32, %c0_i32_0 : i32, i32
  }
  func.func @transform_17(%arg0: i32, %arg1: i32) -> (i32, i32) {
    %c0_i32 = arith.constant 0 : i32
    %c0_i32_0 = arith.constant 0 : i32
    %c0_i32_1 = arith.constant 0 : i32
    return %c0_i32, %c0_i32_0 : i32, i32
  }
  func.func @transform_18(%arg0: i32, %arg1: i32) -> (i32, i32) {
    %c0_i32 = arith.constant 0 : i32
    %c0_i32_0 = arith.constant 0 : i32
    %c0_i32_1 = arith.constant 0 : i32
    return %c0_i32, %c0_i32_0 : i32, i32
  }
  func.func @transform_19(%arg0: i32, %arg1: i32) -> (i32, i32, i32) {
    %c0_i32 = arith.constant 0 : i32
    %c0_i32_0 = arith.constant 0 : i32
    return %arg0, %arg1, %c0_i32 : i32, i32, i32
  }
  func.func @transform_20(%arg0: i32, %arg1: i32) -> (i32, i32, i32, i32) {
    %c0_i32 = arith.constant 0 : i32
    %c0_i32_0 = arith.constant 0 : i32
    %c0_i32_1 = arith.constant 0 : i32
    return %arg0, %c0_i32, %arg1, %c0_i32_0 : i32, i32, i32, i32
  }
  func.func @transform_21(%arg0: i32, %arg1: i32) -> (i32, i32, i32, i32) {
    %c0_i32 = arith.constant 0 : i32
    %c0_i32_0 = arith.constant 0 : i32
    %c0_i32_1 = arith.constant 0 : i32
    return %arg0, %c0_i32, %arg1, %c0_i32_0 : i32, i32, i32, i32
  }
}

</mosaic_0001>

<llo_original>
// kernel: tpu_custom_call.1
$region0: #{tpu_custom_call.1}
  #allocation0 [shape = 'u32[]', space=smem, size = 0x4, offset = 0x4, fixed_abs, tag = 'smem constant byte address 0x4 - core index']
  #allocation1 [shape = 'u32[72,128]{1,0:T(1,128)}', space=vmem, size = 0x9000, scoped, tag = 'internal scratch']
  #allocation2 [shape = 'bf16[16,256]{1,0:T(8,128)(2,1)}', space=vmem, size = 0x2000, scoped, tag = 'scratch operand']
  #allocation3 [shape = 'bf16[32,256]{1,0:T(8,128)(2,1)}', space=vmem, size = 0x4000, scoped, tag = 'scratch operand']
  %s0 = inlined_call_operand.hbm [shape: f32[2,16,128], index: 0, kind: input, shape index: {}]
  %s1 = inlined_call_operand.hbm [shape: f32[2,16,128], index: 1, kind: input, shape index: {}]
  %s2 = inlined_call_operand.hbm [shape: f32[2,32,128], index: 2, kind: input, shape index: {}]
  %s3 = inlined_call_operand.hbm [shape: bf16[128,128], index: 3, kind: input, shape index: {}]
  %s4 = inlined_call_operand.hbm [shape: bf16[128,256], index: 4, kind: input, shape index: {}]
  %s5 = inlined_call_operand.hbm [shape: bf16[128,128], index: 5, kind: input, shape index: {}]
  %s6 = inlined_call_operand.vmem [shape: f32[1,128], index: 6, kind: input, shape index: {}]
  %s7 = inlined_call_operand.vmem [shape: f32[1,128], index: 7, kind: input, shape index: {}]
  %s8 = inlined_call_operand.hbm [shape: bf16[128,128], index: 8, kind: input, shape index: {}]
  %s9 = inlined_call_operand.hbm [shape: bf16[128,256], index: 9, kind: input, shape index: {}]
  %s10 = inlined_call_operand.hbm [shape: bf16[128,128], index: 10, kind: input, shape index: {}]
  %s11 = inlined_call_operand.vmem [shape: f32[1,128], index: 11, kind: input, shape index: {}]
  %s12 = inlined_call_operand.vmem [shape: f32[1,128], index: 12, kind: input, shape index: {}]
  %s13 = inlined_call_operand.hbm [shape: bf16[128,256], index: 13, kind: input, shape index: {}]
  %s14 = inlined_call_operand.vmem [shape: f32[1,256], index: 14, kind: input, shape index: {}]
  %s15 = inlined_call_operand.hbm [shape: bf16[256,128], index: 15, kind: input, shape index: {}]
  %s16 = inlined_call_operand.vmem [shape: f32[1,128], index: 16, kind: input, shape index: {}]
  %s17 = inlined_call_operand.vmem [shape: f32[1,128], index: 17, kind: input, shape index: {}]
  %s18 = inlined_call_operand.vmem [shape: f32[1,128], index: 18, kind: input, shape index: {}]
  %s19 = inlined_call_operand.hbm [shape: f32[2,16,128], index: 19, kind: output, shape index: {0}]
  %s20 = inlined_call_operand.hbm [shape: bf16[2,4,16,16], index: 20, kind: output, shape index: {1}]
  %s21 = inlined_call_operand.hbm [shape: bf16[2,4,16,32], index: 21, kind: output, shape index: {2}]
  %22 = xla_tuple %s19, %s20, %s21
  %s23 = sld [smem:[#allocation0]]
  $region173: #{tpu_custom_call.1} parent=0
    _
  %s25 = ssub.s32 1, %s23
  %s26 = scalar_select 0, %s25, %s23
  $region1: #{tpu_custom_call.1} parent=0
    #allocation4 [shape = 'u8[8192]{0}', space=vmem, size = 0x2000, scoped, tag = 'input window, operand 0']
    #allocation5 [shape = 's32[2]{0}', space=sflag, size = 0x8, scoped, tag = 'scoped memory for tpu_custom_call.1']
    #allocation6 [shape = 's32[2]{0}', space=sflag, size = 0x8, scoped, tag = 'scoped memory for tpu_custom_call.1']
    #allocation7 [shape = 'u8[16384]{0}', space=vmem, size = 0x4000, scoped, tag = 'input window, operand 1']
    #allocation8 [shape = 's32[2]{0}', space=sflag, size = 0x8, scoped, tag = 'scoped memory for tpu_custom_call.1']
    #allocation9 [shape = 'u8[32768]{0}', space=vmem, size = 0x8000, scoped, tag = 'input window, operand 2']
    #allocation10 [shape = 'u8[32768]{0}', space=vmem, size = 0x8000, scoped, tag = 'input window, operand 3, single buffered']
    #allocation11 [shape = 's32[1]{0}', space=sflag, size = 0x4, scoped, tag = 'scoped memory for tpu_custom_call.1']
    #allocation12 [shape = 'u8[65536]{0}', space=vmem, size = 0x10000, scoped, tag = 'input window, operand 4, single buffered']
    #allocation13 [shape = 'u8[32768]{0}', space=vmem, size = 0x8000, scoped, tag = 'input window, operand 5, single buffered']
    #allocation14 [shape = 's32[1]{0}', space=sflag, size = 0x4, scoped, tag = 'scoped memory for tpu_custom_call.1']
    #allocation15 [shape = 'u8[32768]{0}', space=vmem, size = 0x8000, scoped, tag = 'input window, operand 8, single buffered']
    #allocation16 [shape = 'u8[65536]{0}', space=vmem, size = 0x10000, scoped, tag = 'input window, operand 9, single buffered']
    #allocation17 [shape = 's32[1]{0}', space=sflag, size = 0x4, scoped, tag = 'scoped memory for tpu_custom_call.1']
    #allocation18 [shape = 'u8[32768]{0}', space=vmem, size = 0x8000, scoped, tag = 'input window, operand 10, single buffered']
    #allocation19 [shape = 'u8[65536]{0}', space=vmem, size = 0x10000, scoped, tag = 'input window, operand 13, single buffered']
    #allocation20 [shape = 's32[1]{0}', space=sflag, size = 0x4, scoped, tag = 'scoped memory for tpu_custom_call.1']
    #allocation21 [shape = 'u8[65536]{0}', space=vmem, size = 0x10000, scoped, tag = 'input window, operand 15, single buffered']
    #allocation22 [shape = 'u8[8192]{0}', space=vmem, size = 0x2000, scoped, tag = 'output window, operand 0']
    #allocation23 [shape = 'u8[16384]{0}', space=vmem, size = 0x4000, scoped, tag = 'output window, operand 1']
    #allocation24 [shape = 's32[2]{0}', space=sflag, size = 0x8, scoped, tag = 'scoped memory for tpu_custom_call.1']
    #allocation25 [shape = 'u8[16384]{0}', space=vmem, size = 0x4000, scoped, tag = 'output window, operand 2']
    %27 = vsyncpa [#allocation5], 0
    %s28 = scalar_lea.sflag [#allocation5], 1
    %29 = vsyncpa %s28, 0
    %30 = vsyncpa [#allocation8], 0
    %s31 = scalar_lea.sflag [#allocation8], 1
    %32 = vsyncpa %s31, 0
    %33 = vsyncpa [#allocation11], 0
    %34 = vsyncpa [#allocation14], 0
    %35 = vsyncpa [#allocation17], 0
    %36 = vsyncpa [#allocation20], 0
    %37 = vsyncpa [#allocation6], 0
    %s38 = scalar_lea.sflag [#allocation6], 1
    %39 = vsyncpa %s38, 0
    %40 = vsyncpa [#allocation24], 0
    %s41 = scalar_lea.sflag [#allocation24], 1
    %42 = vsyncpa %s41, 0
    loop: start=0, step=1, limit=6
    $region2: #{tpu_custom_call.1} parent=1 // loop_pre_header
      _
    $region3: #{tpu_custom_call.1} parent=1 // loop_header
      %s44 = sphi 0, %s48
      %p45 = scmp.ge.s32.totalorder %s44, 6
      %s51 = sphi 0, %s63
      %s52 = sphi 0, %s59
      %s53 = sphi 0, %s51
      %s54 = sphi 0, %s52
      %s55 = sphi 0, %s53
      %s56 = sphi 0, %s54
      %s68 = sphi 0, %s70
      %s71 = sphi 0, %s68
      %s72 = sphi 0, %s71
      %s88 = sphi 0, %s72
      %s94 = sphi 0, %s96
      %s97 = sphi 0, %s94
      %s98 = sphi 0, %s97
      %s114 = sphi 0, %s98
      %s120 = sphi 0, %s122
      %s123 = sphi 0, %s120
      %s124 = sphi 0, %s123
      %s140 = sphi 0, %s124
      %s144 = sphi 0, %s144
      %s146 = sphi 0, %s144
      %s147 = sphi 0, %s146
      %s161 = sphi 0, %s147
      %s165 = sphi 0, %s165
      %s167 = sphi 0, %s165
      %s168 = sphi 0, %s167
      %s182 = sphi 0, %s168
      %s186 = sphi 0, %s186
      %s188 = sphi 0, %s186
      %s189 = sphi 0, %s188
      %s203 = sphi 0, %s189
      %s207 = sphi 0, %s207
      %s209 = sphi 0, %s207
      %s210 = sphi 0, %s209
      %s224 = sphi 0, %s210
      %s228 = sphi 0, %s228
      %s230 = sphi 0, %s228
      %s231 = sphi 0, %s230
      %s245 = sphi 0, %s231
      %s249 = sphi 0, %s249
      %s251 = sphi 0, %s249
      %s252 = sphi 0, %s251
      %s266 = sphi 0, %s252
      %s270 = sphi 0, %s270
      %s272 = sphi 0, %s270
      %s273 = sphi 0, %s272
      %s287 = sphi 0, %s273
      %s291 = sphi 0, %s291
      %s293 = sphi 0, %s291
      %s294 = sphi 0, %s293
      %s308 = sphi 0, %s294
      %s312 = sphi 0, %s312
      %s314 = sphi 0, %s312
      %s315 = sphi 0, %s314
      %s329 = sphi 0, %s315
      %s333 = sphi 0, %s333
      %s335 = sphi 0, %s333
      %s336 = sphi 0, %s335
      %s350 = sphi 0, %s336
      %s354 = sphi 0, %s354
      %s356 = sphi 0, %s354
      %s357 = sphi 0, %s356
      %s371 = sphi 0, %s357
      %s375 = sphi 0, %s375
      %s377 = sphi 0, %s375
      %s378 = sphi 0, %s377
      %s392 = sphi 0, %s378
      %s396 = sphi 0, %s396
      %s398 = sphi 0, %s396
      %s399 = sphi 0, %s398
      %s413 = sphi 0, %s399
      %s417 = sphi 0, %s417
      %s419 = sphi 0, %s417
      %s420 = sphi 0, %s419
      %s434 = sphi 0, %s420
      %s438 = sphi 0, %s438
      %s440 = sphi 0, %s438
      %s441 = sphi 0, %s440
      %s455 = sphi 0, %s441
      %s459 = sphi 0, %s459
      %s461 = sphi 0, %s459
      %s462 = sphi 0, %s461
      %s476 = sphi 0, %s462
      %s484 = sphi 0, %s486
      %s487 = sphi 0, %s484
      %s488 = sphi 0, %s487
      %s504 = sphi 0, %s488
      %s512 = sphi 0, %s514
      %s515 = sphi 0, %s512
      %s516 = sphi 0, %s515
      %s532 = sphi 0, %s516
      %s540 = sphi 0, %s542
      %s543 = sphi 0, %s540
      %s544 = sphi 0, %s543
      %s560 = sphi 0, %s544
    $region4: #{tpu_custom_call.1} parent=1 // loop_header_branch
      %47 = sbr.rel (%p45) target = $region8
    $region5: #{tpu_custom_call.1} parent=1 // loop_body
      %s49 = ssub.s32 %s44, 1
      %s50 = ssub.s32 %s44, 2
      %s57 = sadd.s32 1, %s52
      %p58 = scmp.ge.s32.totalorder %s57, 2
      %s59 = scalar_select %p58, 0, %s57
      %s60 = sadd.s32 1, %s51
      %s61 = scalar_select %p58, %s60, %s51
      %p62 = scmp.ge.s32.totalorder %s61, 2
      %s63 = scalar_select %p62, 0, %s61
      %s64 = ssub.s32 %s51, %s63
      %s65 = ssub.s32 %s52, %s59
      %s66 = sor.u32 %s64, %s65
      %p67 = scmp.eq.s32.totalorder %s66, 0
      %s69 = sadd.s32 %s68, 1
      %s70 = scalar_select %p67, %s68, %s69
      %p73 = pneg %p67
      %p74 = scmp.eq.s32.totalorder %s44, 3
      %p75 = por %p73, %p74
      %p76 = scmp.ne.s32.totalorder %s68, %s71
      %p77 = scmp.eq.s32.totalorder %s44, 0
      %p78 = por %p76, %p77
      %p79 = scmp.ne.s32.totalorder %s68, %s71
      %p80 = scmp.eq.s32.totalorder %s49, 3
      %p81 = por %p79, %p80
      %p82 = scmp.ne.s32.totalorder %s71, %s72
      %p83 = scmp.eq.s32.totalorder %s49, 0
      %p84 = por %p82, %p83
      %p85 = scmp.ne.s32.totalorder %s71, %s72
      %p86 = scmp.eq.s32.totalorder %s50, 3
      %p87 = por %p85, %p86
      %p89 = scmp.ne.s32.totalorder %s72, %s88
      %p90 = scmp.eq.s32.totalorder %s50, 0
      %p91 = por %p89, %p90
      %s92 = ssub.s32 %s51, %s63
      %p93 = scmp.eq.s32.totalorder %s92, 0
      %s95 = sadd.s32 %s94, 1
      %s96 = scalar_select %p93, %s94, %s95
      %p99 = pneg %p93
      %p100 = scmp.eq.s32.totalorder %s44, 3
      %p101 = por %p99, %p100
      %p102 = scmp.ne.s32.totalorder %s94, %s97
      %p103 = scmp.eq.s32.totalorder %s44, 0
      %p104 = por %p102, %p103
      %p105 = scmp.ne.s32.totalorder %s94, %s97
      %p106 = scmp.eq.s32.totalorder %s49, 3
      %p107 = por %p105, %p106
      %p108 = scmp.ne.s32.totalorder %s97, %s98
      %p109 = scmp.eq.s32.totalorder %s49, 0
      %p110 = por %p108, %p109
      %p111 = scmp.ne.s32.totalorder %s97, %s98
      %p112 = scmp.eq.s32.totalorder %s50, 3
      %p113 = por %p111, %p112
      %p115 = scmp.ne.s32.totalorder %s98, %s114
      %p116 = scmp.eq.s32.totalorder %s50, 0
      %p117 = por %p115, %p116
      %s118 = ssub.s32 %s51, %s63
      %p119 = scmp.eq.s32.totalorder %s118, 0
      %s121 = sadd.s32 %s120, 1
      %s122 = scalar_select %p119, %s120, %s121
      %p125 = pneg %p119
      %p126 = scmp.eq.s32.totalorder %s44, 3
      %p127 = por %p125, %p126
      %p128 = scmp.ne.s32.totalorder %s120, %s123
      %p129 = scmp.eq.s32.totalorder %s44, 0
      %p130 = por %p128, %p129
      %p131 = scmp.ne.s32.totalorder %s120, %s123
      %p132 = scmp.eq.s32.totalorder %s49, 3
      %p133 = por %p131, %p132
      %p134 = scmp.ne.s32.totalorder %s123, %s124
      %p135 = scmp.eq.s32.totalorder %s49, 0
      %p136 = por %p134, %p135
      %p137 = scmp.ne.s32.totalorder %s123, %s124
      %p138 = scmp.eq.s32.totalorder %s50, 3
      %p139 = por %p137, %p138
      %p141 = scmp.ne.s32.totalorder %s124, %s140
      %p142 = scmp.eq.s32.totalorder %s50, 0
      %p143 = por %p141, %p142
      %s145 = sadd.s32 %s144, 1
      %p148 = scmp.eq.s32.totalorder %s44, 3
      %p149 = scmp.ne.s32.totalorder %s144, %s146
      %p150 = scmp.eq.s32.totalorder %s44, 0
      %p151 = por %p149, %p150
      %p152 = scmp.ne.s32.totalorder %s144, %s146
      %p153 = scmp.eq.s32.totalorder %s49, 3
      %p154 = por %p152, %p153
      %p155 = scmp.ne.s32.totalorder %s146, %s147
      %p156 = scmp.eq.s32.totalorder %s49, 0
      %p157 = por %p155, %p156
      %p158 = scmp.ne.s32.totalorder %s146, %s147
      %p159 = scmp.eq.s32.totalorder %s50, 3
      %p160 = por %p158, %p159
      %p162 = scmp.ne.s32.totalorder %s147, %s161
      %p163 = scmp.eq.s32.totalorder %s50, 0
      %p164 = por %p162, %p163
      %s166 = sadd.s32 %s165, 1
      %p169 = scmp.eq.s32.totalorder %s44, 3
      %p170 = scmp.ne.s32.totalorder %s165, %s167
      %p171 = scmp.eq.s32.totalorder %s44, 0
      %p172 = por %p170, %p171
      %p173 = scmp.ne.s32.totalorder %s165, %s167
      %p174 = scmp.eq.s32.totalorder %s49, 3
      %p175 = por %p173, %p174
      %p176 = scmp.ne.s32.totalorder %s167, %s168
      %p177 = scmp.eq.s32.totalorder %s49, 0
      %p178 = por %p176, %p177
      %p179 = scmp.ne.s32.totalorder %s167, %s168
      %p180 = scmp.eq.s32.totalorder %s50, 3
      %p181 = por %p179, %p180
      %p183 = scmp.ne.s32.totalorder %s168, %s182
      %p184 = scmp.eq.s32.totalorder %s50, 0
      %p185 = por %p183, %p184
      %s187 = sadd.s32 %s186, 1
      %p190 = scmp.eq.s32.totalorder %s44, 3
      %p191 = scmp.ne.s32.totalorder %s186, %s188
      %p192 = scmp.eq.s32.totalorder %s44, 0
      %p193 = por %p191, %p192
      %p194 = scmp.ne.s32.totalorder %s186, %s188
      %p195 = scmp.eq.s32.totalorder %s49, 3
      %p196 = por %p194, %p195
      %p197 = scmp.ne.s32.totalorder %s188, %s189
      %p198 = scmp.eq.s32.totalorder %s49, 0
      %p199 = por %p197, %p198
      %p200 = scmp.ne.s32.totalorder %s188, %s189
      %p201 = scmp.eq.s32.totalorder %s50, 3
      %p202 = por %p200, %p201
      %p204 = scmp.ne.s32.totalorder %s189, %s203
      %p205 = scmp.eq.s32.totalorder %s50, 0
      %p206 = por %p204, %p205
      %s208 = sadd.s32 %s207, 1
      %p211 = scmp.eq.s32.totalorder %s44, 3
      %p212 = scmp.ne.s32.totalorder %s207, %s209
      %p213 = scmp.eq.s32.totalorder %s44, 0
      %p214 = por %p212, %p213
      %p215 = scmp.ne.s32.totalorder %s207, %s209
      %p216 = scmp.eq.s32.totalorder %s49, 3
      %p217 = por %p215, %p216
      %p218 = scmp.ne.s32.totalorder %s209, %s210
      %p219 = scmp.eq.s32.totalorder %s49, 0
      %p220 = por %p218, %p219
      %p221 = scmp.ne.s32.totalorder %s209, %s210
      %p222 = scmp.eq.s32.totalorder %s50, 3
      %p223 = por %p221, %p222
      %p225 = scmp.ne.s32.totalorder %s210, %s224
      %p226 = scmp.eq.s32.totalorder %s50, 0
      %p227 = por %p225, %p226
      %s229 = sadd.s32 %s228, 1
      %p232 = scmp.eq.s32.totalorder %s44, 3
      %p233 = scmp.ne.s32.totalorder %s228, %s230
      %p234 = scmp.eq.s32.totalorder %s44, 0
      %p235 = por %p233, %p234
      %p236 = scmp.ne.s32.totalorder %s228, %s230
      %p237 = scmp.eq.s32.totalorder %s49, 3
      %p238 = por %p236, %p237
      %p239 = scmp.ne.s32.totalorder %s230, %s231
      %p240 = scmp.eq.s32.totalorder %s49, 0
      %p241 = por %p239, %p240
      %p242 = scmp.ne.s32.totalorder %s230, %s231
      %p243 = scmp.eq.s32.totalorder %s50, 3
      %p244 = por %p242, %p243
      %p246 = scmp.ne.s32.totalorder %s231, %s245
      %p247 = scmp.eq.s32.totalorder %s50, 0
      %p248 = por %p246, %p247
      %s250 = sadd.s32 %s249, 1
      %p253 = scmp.eq.s32.totalorder %s44, 3
      %p254 = scmp.ne.s32.totalorder %s249, %s251
      %p255 = scmp.eq.s32.totalorder %s44, 0
      %p256 = por %p254, %p255
      %p257 = scmp.ne.s32.totalorder %s249, %s251
      %p258 = scmp.eq.s32.totalorder %s49, 3
      %p259 = por %p257, %p258
      %p260 = scmp.ne.s32.totalorder %s251, %s252
      %p261 = scmp.eq.s32.totalorder %s49, 0
      %p262 = por %p260, %p261
      %p263 = scmp.ne.s32.totalorder %s251, %s252
      %p264 = scmp.eq.s32.totalorder %s50, 3
      %p265 = por %p263, %p264
      %p267 = scmp.ne.s32.totalorder %s252, %s266
      %p268 = scmp.eq.s32.totalorder %s50, 0
      %p269 = por %p267, %p268
      %s271 = sadd.s32 %s270, 1
      %p274 = scmp.eq.s32.totalorder %s44, 3
      %p275 = scmp.ne.s32.totalorder %s270, %s272
      %p276 = scmp.eq.s32.totalorder %s44, 0
      %p277 = por %p275, %p276
      %p278 = scmp.ne.s32.totalorder %s270, %s272
      %p279 = scmp.eq.s32.totalorder %s49, 3
      %p280 = por %p278, %p279
      %p281 = scmp.ne.s32.totalorder %s272, %s273
      %p282 = scmp.eq.s32.totalorder %s49, 0
      %p283 = por %p281, %p282
      %p284 = scmp.ne.s32.totalorder %s272, %s273
      %p285 = scmp.eq.s32.totalorder %s50, 3
      %p286 = por %p284, %p285
      %p288 = scmp.ne.s32.totalorder %s273, %s287
      %p289 = scmp.eq.s32.totalorder %s50, 0
      %p290 = por %p288, %p289
      %s292 = sadd.s32 %s291, 1
      %p295 = scmp.eq.s32.totalorder %s44, 3
      %p296 = scmp.ne.s32.totalorder %s291, %s293
      %p297 = scmp.eq.s32.totalorder %s44, 0
      %p298 = por %p296, %p297
      %p299 = scmp.ne.s32.totalorder %s291, %s293
      %p300 = scmp.eq.s32.totalorder %s49, 3
      %p301 = por %p299, %p300
      %p302 = scmp.ne.s32.totalorder %s293, %s294
      %p303 = scmp.eq.s32.totalorder %s49, 0
      %p304 = por %p302, %p303
      %p305 = scmp.ne.s32.totalorder %s293, %s294
      %p306 = scmp.eq.s32.totalorder %s50, 3
      %p307 = por %p305, %p306
      %p309 = scmp.ne.s32.totalorder %s294, %s308
      %p310 = scmp.eq.s32.totalorder %s50, 0
      %p311 = por %p309, %p310
      %s313 = sadd.s32 %s312, 1
      %p316 = scmp.eq.s32.totalorder %s44, 3
      %p317 = scmp.ne.s32.totalorder %s312, %s314
      %p318 = scmp.eq.s32.totalorder %s44, 0
      %p319 = por %p317, %p318
      %p320 = scmp.ne.s32.totalorder %s312, %s314
      %p321 = scmp.eq.s32.totalorder %s49, 3
      %p322 = por %p320, %p321
      %p323 = scmp.ne.s32.totalorder %s314, %s315
      %p324 = scmp.eq.s32.totalorder %s49, 0
      %p325 = por %p323, %p324
      %p326 = scmp.ne.s32.totalorder %s314, %s315
      %p327 = scmp.eq.s32.totalorder %s50, 3
      %p328 = por %p326, %p327
      %p330 = scmp.ne.s32.totalorder %s315, %s329
      %p331 = scmp.eq.s32.totalorder %s50, 0
      %p332 = por %p330, %p331
      %s334 = sadd.s32 %s333, 1
      %p337 = scmp.eq.s32.totalorder %s44, 3
      %p338 = scmp.ne.s32.totalorder %s333, %s335
      %p339 = scmp.eq.s32.totalorder %s44, 0
      %p340 = por %p338, %p339
      %p341 = scmp.ne.s32.totalorder %s333, %s335
      %p342 = scmp.eq.s32.totalorder %s49, 3
      %p343 = por %p341, %p342
      %p344 = scmp.ne.s32.totalorder %s335, %s336
      %p345 = scmp.eq.s32.totalorder %s49, 0
      %p346 = por %p344, %p345
      %p347 = scmp.ne.s32.totalorder %s335, %s336
      %p348 = scmp.eq.s32.totalorder %s50, 3
      %p349 = por %p347, %p348
      %p351 = scmp.ne.s32.totalorder %s336, %s350
      %p352 = scmp.eq.s32.totalorder %s50, 0
      %p353 = por %p351, %p352
      %s355 = sadd.s32 %s354, 1
      %p358 = scmp.eq.s32.totalorder %s44, 3
      %p359 = scmp.ne.s32.totalorder %s354, %s356
      %p360 = scmp.eq.s32.totalorder %s44, 0
      %p361 = por %p359, %p360
      %p362 = scmp.ne.s32.totalorder %s354, %s356
      %p363 = scmp.eq.s32.totalorder %s49, 3
      %p364 = por %p362, %p363
      %p365 = scmp.ne.s32.totalorder %s356, %s357
      %p366 = scmp.eq.s32.totalorder %s49, 0
      %p367 = por %p365, %p366
      %p368 = scmp.ne.s32.totalorder %s356, %s357
      %p369 = scmp.eq.s32.totalorder %s50, 3
      %p370 = por %p368, %p369
      %p372 = scmp.ne.s32.totalorder %s357, %s371
      %p373 = scmp.eq.s32.totalorder %s50, 0
      %p374 = por %p372, %p373
      %s376 = sadd.s32 %s375, 1
      %p379 = scmp.eq.s32.totalorder %s44, 3
      %p380 = scmp.ne.s32.totalorder %s375, %s377
      %p381 = scmp.eq.s32.totalorder %s44, 0
      %p382 = por %p380, %p381
      %p383 = scmp.ne.s32.totalorder %s375, %s377
      %p384 = scmp.eq.s32.totalorder %s49, 3
      %p385 = por %p383, %p384
      %p386 = scmp.ne.s32.totalorder %s377, %s378
      %p387 = scmp.eq.s32.totalorder %s49, 0
      %p388 = por %p386, %p387
      %p389 = scmp.ne.s32.totalorder %s377, %s378
      %p390 = scmp.eq.s32.totalorder %s50, 3
      %p391 = por %p389, %p390
      %p393 = scmp.ne.s32.totalorder %s378, %s392
      %p394 = scmp.eq.s32.totalorder %s50, 0
      %p395 = por %p393, %p394
      %s397 = sadd.s32 %s396, 1
      %p400 = scmp.eq.s32.totalorder %s44, 3
      %p401 = scmp.ne.s32.totalorder %s396, %s398
      %p402 = scmp.eq.s32.totalorder %s44, 0
      %p403 = por %p401, %p402
      %p404 = scmp.ne.s32.totalorder %s396, %s398
      %p405 = scmp.eq.s32.totalorder %s49, 3
      %p406 = por %p404, %p405
      %p407 = scmp.ne.s32.totalorder %s398, %s399
      %p408 = scmp.eq.s32.totalorder %s49, 0
      %p409 = por %p407, %p408
      %p410 = scmp.ne.s32.totalorder %s398, %s399
      %p411 = scmp.eq.s32.totalorder %s50, 3
      %p412 = por %p410, %p411
      %p414 = scmp.ne.s32.totalorder %s399, %s413
      %p415 = scmp.eq.s32.totalorder %s50, 0
      %p416 = por %p414, %p415
      %s418 = sadd.s32 %s417, 1
      %p421 = scmp.eq.s32.totalorder %s44, 3
      %p422 = scmp.ne.s32.totalorder %s417, %s419
      %p423 = scmp.eq.s32.totalorder %s44, 0
      %p424 = por %p422, %p423
      %p425 = scmp.ne.s32.totalorder %s417, %s419
      %p426 = scmp.eq.s32.totalorder %s49, 3
      %p427 = por %p425, %p426
      %p428 = scmp.ne.s32.totalorder %s419, %s420
      %p429 = scmp.eq.s32.totalorder %s49, 0
      %p430 = por %p428, %p429
      %p431 = scmp.ne.s32.totalorder %s419, %s420
      %p432 = scmp.eq.s32.totalorder %s50, 3
      %p433 = por %p431, %p432
      %p435 = scmp.ne.s32.totalorder %s420, %s434
      %p436 = scmp.eq.s32.totalorder %s50, 0
      %p437 = por %p435, %p436
      %s439 = sadd.s32 %s438, 1
      %p442 = scmp.eq.s32.totalorder %s44, 3
      %p443 = scmp.ne.s32.totalorder %s438, %s440
      %p444 = scmp.eq.s32.totalorder %s44, 0
      %p445 = por %p443, %p444
      %p446 = scmp.ne.s32.totalorder %s438, %s440
      %p447 = scmp.eq.s32.totalorder %s49, 3
      %p448 = por %p446, %p447
      %p449 = scmp.ne.s32.totalorder %s440, %s441
      %p450 = scmp.eq.s32.totalorder %s49, 0
      %p451 = por %p449, %p450
      %p452 = scmp.ne.s32.totalorder %s440, %s441
      %p453 = scmp.eq.s32.totalorder %s50, 3
      %p454 = por %p452, %p453
      %p456 = scmp.ne.s32.totalorder %s441, %s455
      %p457 = scmp.eq.s32.totalorder %s50, 0
      %p458 = por %p456, %p457
      %s460 = sadd.s32 %s459, 1
      %p463 = scmp.eq.s32.totalorder %s44, 3
      %p464 = scmp.ne.s32.totalorder %s459, %s461
      %p465 = scmp.eq.s32.totalorder %s44, 0
      %p466 = por %p464, %p465
      %p467 = scmp.ne.s32.totalorder %s459, %s461
      %p468 = scmp.eq.s32.totalorder %s49, 3
      %p469 = por %p467, %p468
      %p470 = scmp.ne.s32.totalorder %s461, %s462
      %p471 = scmp.eq.s32.totalorder %s49, 0
      %p472 = por %p470, %p471
      %p473 = scmp.ne.s32.totalorder %s461, %s462
      %p474 = scmp.eq.s32.totalorder %s50, 3
      %p475 = por %p473, %p474
      %p477 = scmp.ne.s32.totalorder %s462, %s476
      %p478 = scmp.eq.s32.totalorder %s50, 0
      %p479 = por %p477, %p478
      %s480 = ssub.s32 %s51, %s63
      %s481 = ssub.s32 %s52, %s59
      %s482 = sor.u32 %s480, %s481
      %p483 = scmp.eq.s32.totalorder %s482, 0
      %s485 = sadd.s32 %s484, 1
      %s486 = scalar_select %p483, %s484, %s485
      %p489 = pneg %p483
      %p490 = scmp.eq.s32.totalorder %s44, 3
      %p491 = por %p489, %p490
      %p492 = scmp.ne.s32.totalorder %s484, %s487
      %p493 = scmp.eq.s32.totalorder %s44, 0
      %p494 = por %p492, %p493
      %p495 = scmp.ne.s32.totalorder %s484, %s487
      %p496 = scmp.eq.s32.totalorder %s49, 3
      %p497 = por %p495, %p496
      %p498 = scmp.ne.s32.totalorder %s487, %s488
      %p499 = scmp.eq.s32.totalorder %s49, 0
      %p500 = por %p498, %p499
      %p501 = scmp.ne.s32.totalorder %s487, %s488
      %p502 = scmp.eq.s32.totalorder %s50, 3
      %p503 = por %p501, %p502
      %p505 = scmp.ne.s32.totalorder %s488, %s504
      %p506 = scmp.eq.s32.totalorder %s50, 0
      %p507 = por %p505, %p506
      %s508 = ssub.s32 %s51, %s63
      %s509 = ssub.s32 %s52, %s59
      %s510 = sor.u32 %s508, %s509
      %p511 = scmp.eq.s32.totalorder %s510, 0
      %s513 = sadd.s32 %s512, 1
      %s514 = scalar_select %p511, %s512, %s513
      %p517 = pneg %p511
      %p518 = scmp.eq.s32.totalorder %s44, 3
      %p519 = por %p517, %p518
      %p520 = scmp.ne.s32.totalorder %s512, %s515
      %p521 = scmp.eq.s32.totalorder %s44, 0
      %p522 = por %p520, %p521
      %p523 = scmp.ne.s32.totalorder %s512, %s515
      %p524 = scmp.eq.s32.totalorder %s49, 3
      %p525 = por %p523, %p524
      %p526 = scmp.ne.s32.totalorder %s515, %s516
      %p527 = scmp.eq.s32.totalorder %s49, 0
      %p528 = por %p526, %p527
      %p529 = scmp.ne.s32.totalorder %s515, %s516
      %p530 = scmp.eq.s32.totalorder %s50, 3
      %p531 = por %p529, %p530
      %p533 = scmp.ne.s32.totalorder %s516, %s532
      %p534 = scmp.eq.s32.totalorder %s50, 0
      %p535 = por %p533, %p534
      %s536 = ssub.s32 %s51, %s63
      %s537 = ssub.s32 %s52, %s59
      %s538 = sor.u32 %s536, %s537
      %p539 = scmp.eq.s32.totalorder %s538, 0
      %s541 = sadd.s32 %s540, 1
      %s542 = scalar_select %p539, %s540, %s541
      %p545 = pneg %p539
      %p546 = scmp.eq.s32.totalorder %s44, 3
      %p547 = por %p545, %p546
      %p548 = scmp.ne.s32.totalorder %s540, %s543
      %p549 = scmp.eq.s32.totalorder %s44, 0
      %p550 = por %p548, %p549
      %p551 = scmp.ne.s32.totalorder %s540, %s543
      %p552 = scmp.eq.s32.totalorder %s49, 3
      %p553 = por %p551, %p552
      %p554 = scmp.ne.s32.totalorder %s543, %s544
      %p555 = scmp.eq.s32.totalorder %s49, 0
      %p556 = por %p554, %p555
      %p557 = scmp.ne.s32.totalorder %s543, %s544
      %p558 = scmp.eq.s32.totalorder %s50, 3
      %p559 = por %p557, %p558
      %p561 = scmp.ne.s32.totalorder %s544, %s560
      %p562 = scmp.eq.s32.totalorder %s50, 0
      %p563 = por %p561, %p562
      %p564 = scmp.le.s32.totalorder 1, %s44
      %p565 = scmp.lt.s32.totalorder %s44, 5
      %p566 = pnand %p564, %p565
      %p567 = pneg %p566
      // Predicated region
      $region9: #{tpu_custom_call.1} parent=5 // pred_check
        _
      $region10: #{tpu_custom_call.1} parent=5 // pred_check_branch
        %569 = sbr.rel (%p566) target = $region12
      $region11: #{tpu_custom_call.1} parent=5 // pred_region
        %s570 = ssub.s32 %s44, 1
        // Predicated region
        $region13: #{tpu_custom_call.1} parent=11 // pred_check
          %p571 = pneg %p157
        $region14: #{tpu_custom_call.1} parent=11 // pred_check_branch
          %573 = sbr.rel (%p571) target = $region16
        $region15: #{tpu_custom_call.1} parent=11 // pred_region
          %575 = vsyncadd [#allocation11], 0
          %s576 = sshll.u32 %s3, 4
          %s577 = int_to_ptr.hbm [resolvable:$true] %s576
          %s578 = sshll.u32 [#allocation10], 4
          %s579 = int_to_ptr.vmem [resolvable:$true] %s578
          %584 = dma.hbm_to_vmem [thread:$0]  %s577, 1024, %s579, [#allocation11], 64, 64, 4
        $region16: #{tpu_custom_call.1} parent=11 // pred_fallthru
          _
        // Predicated region
        $region17: #{tpu_custom_call.1} parent=11 // pred_check
          %p585 = pneg %p178
        $region18: #{tpu_custom_call.1} parent=11 // pred_check_branch
          %587 = sbr.rel (%p585) target = $region20
        $region19: #{tpu_custom_call.1} parent=11 // pred_region
          %589 = vsyncadd [#allocation11], 0
          %s590 = sshll.u32 %s4, 4
          %s591 = int_to_ptr.hbm [resolvable:$true] %s590
          %s592 = sshll.u32 [#allocation12], 4
          %s593 = int_to_ptr.vmem [resolvable:$true] %s592
          %598 = dma.hbm_to_vmem [thread:$0]  %s591, 2048, %s593, [#allocation11], 128, 128, 8
        $region20: #{tpu_custom_call.1} parent=11 // pred_fallthru
          _
        // Predicated region
        $region21: #{tpu_custom_call.1} parent=11 // pred_check
          %p599 = pneg %p199
        $region22: #{tpu_custom_call.1} parent=11 // pred_check_branch
          %601 = sbr.rel (%p599) target = $region24
        $region23: #{tpu_custom_call.1} parent=11 // pred_region
          %603 = vsyncadd [#allocation14], 0
          %s604 = sshll.u32 %s5, 4
          %s605 = int_to_ptr.hbm [resolvable:$true] %s604
          %s606 = sshll.u32 [#allocation13], 4
          %s607 = int_to_ptr.vmem [resolvable:$true] %s606
          %612 = dma.hbm_to_vmem [thread:$0]  %s605, 1024, %s607, [#allocation14], 64, 64, 4
        $region24: #{tpu_custom_call.1} parent=11 // pred_fallthru
          _
        // Predicated region
        $region25: #{tpu_custom_call.1} parent=11 // pred_check
          %p613 = pneg %p220
        $region26: #{tpu_custom_call.1} parent=11 // pred_check_branch
          %615 = sbr.rel (%p613) target = $region28
        $region27: #{tpu_custom_call.1} parent=11 // pred_region
          _
        $region28: #{tpu_custom_call.1} parent=11 // pred_fallthru
          _
        // Predicated region
        $region29: #{tpu_custom_call.1} parent=11 // pred_check
          %p616 = pneg %p241
        $region30: #{tpu_custom_call.1} parent=11 // pred_check_branch
          %618 = sbr.rel (%p616) target = $region32
        $region31: #{tpu_custom_call.1} parent=11 // pred_region
          _
        $region32: #{tpu_custom_call.1} parent=11 // pred_fallthru
          _
        // Predicated region
        $region33: #{tpu_custom_call.1} parent=11 // pred_check
          %p619 = pneg %p262
        $region34: #{tpu_custom_call.1} parent=11 // pred_check_branch
          %621 = sbr.rel (%p619) target = $region36
        $region35: #{tpu_custom_call.1} parent=11 // pred_region
          %623 = vsyncadd [#allocation14], 0
          %s624 = sshll.u32 %s8, 4
          %s625 = int_to_ptr.hbm [resolvable:$true] %s624
          %s626 = sshll.u32 [#allocation15], 4
          %s627 = int_to_ptr.vmem [resolvable:$true] %s626
          %632 = dma.hbm_to_vmem [thread:$0]  %s625, 1024, %s627, [#allocation14], 64, 64, 4
        $region36: #{tpu_custom_call.1} parent=11 // pred_fallthru
          _
        // Predicated region
        $region37: #{tpu_custom_call.1} parent=11 // pred_check
          %p633 = pneg %p283
        $region38: #{tpu_custom_call.1} parent=11 // pred_check_branch
          %635 = sbr.rel (%p633) target = $region40
        $region39: #{tpu_custom_call.1} parent=11 // pred_region
          %637 = vsyncadd [#allocation17], 0
          %s638 = sshll.u32 %s9, 4
          %s639 = int_to_ptr.hbm [resolvable:$true] %s638
          %s640 = sshll.u32 [#allocation16], 4
          %s641 = int_to_ptr.vmem [resolvable:$true] %s640
          %646 = dma.hbm_to_vmem [thread:$0]  %s639, 2048, %s641, [#allocation17], 128, 128, 8
        $region40: #{tpu_custom_call.1} parent=11 // pred_fallthru
          _
        // Predicated region
        $region41: #{tpu_custom_call.1} parent=11 // pred_check
          %p647 = pneg %p304
        $region42: #{tpu_custom_call.1} parent=11 // pred_check_branch
          %649 = sbr.rel (%p647) target = $region44
        $region43: #{tpu_custom_call.1} parent=11 // pred_region
          %651 = vsyncadd [#allocation17], 0
          %s652 = sshll.u32 %s10, 4
          %s653 = int_to_ptr.hbm [resolvable:$true] %s652
          %s654 = sshll.u32 [#allocation18], 4
          %s655 = int_to_ptr.vmem [resolvable:$true] %s654
          %660 = dma.hbm_to_vmem [thread:$0]  %s653, 1024, %s655, [#allocation17], 64, 64, 4
        $region44: #{tpu_custom_call.1} parent=11 // pred_fallthru
          _
        // Predicated region
        $region45: #{tpu_custom_call.1} parent=11 // pred_check
          %p661 = pneg %p325
        $region46: #{tpu_custom_call.1} parent=11 // pred_check_branch
          %663 = sbr.rel (%p661) target = $region48
        $region47: #{tpu_custom_call.1} parent=11 // pred_region
          _
        $region48: #{tpu_custom_call.1} parent=11 // pred_fallthru
          _
        // Predicated region
        $region49: #{tpu_custom_call.1} parent=11 // pred_check
          %p664 = pneg %p346
        $region50: #{tpu_custom_call.1} parent=11 // pred_check_branch
          %666 = sbr.rel (%p664) target = $region52
        $region51: #{tpu_custom_call.1} parent=11 // pred_region
          _
        $region52: #{tpu_custom_call.1} parent=11 // pred_fallthru
          _
        // Predicated region
        $region53: #{tpu_custom_call.1} parent=11 // pred_check
          %p667 = pneg %p367
        $region54: #{tpu_custom_call.1} parent=11 // pred_check_branch
          %669 = sbr.rel (%p667) target = $region56
        $region55: #{tpu_custom_call.1} parent=11 // pred_region
          %671 = vsyncadd [#allocation20], 0
          %s672 = sshll.u32 %s13, 4
          %s673 = int_to_ptr.hbm [resolvable:$true] %s672
          %s674 = sshll.u32 [#allocation19], 4
          %s675 = int_to_ptr.vmem [resolvable:$true] %s674
          %680 = dma.hbm_to_vmem [thread:$0]  %s673, 2048, %s675, [#allocation20], 128, 128, 8
        $region56: #{tpu_custom_call.1} parent=11 // pred_fallthru
          _
        // Predicated region
        $region57: #{tpu_custom_call.1} parent=11 // pred_check
          %p681 = pneg %p388
        $region58: #{tpu_custom_call.1} parent=11 // pred_check_branch
          %683 = sbr.rel (%p681) target = $region60
        $region59: #{tpu_custom_call.1} parent=11 // pred_region
          _
        $region60: #{tpu_custom_call.1} parent=11 // pred_fallthru
          _
        // Predicated region
        $region61: #{tpu_custom_call.1} parent=11 // pred_check
          %p684 = pneg %p409
        $region62: #{tpu_custom_call.1} parent=11 // pred_check_branch
          %686 = sbr.rel (%p684) target = $region64
        $region63: #{tpu_custom_call.1} parent=11 // pred_region
          %688 = vsyncadd [#allocation20], 0
          %s689 = sshll.u32 %s15, 4
          %s690 = int_to_ptr.hbm [resolvable:$true] %s689
          %s691 = sshll.u32 [#allocation21], 4
          %s692 = int_to_ptr.vmem [resolvable:$true] %s691
          %697 = dma.hbm_to_vmem [thread:$0]  %s690, 2048, %s692, [#allocation20], 64, 64, 4
        $region64: #{tpu_custom_call.1} parent=11 // pred_fallthru
          _
        // Predicated region
        $region65: #{tpu_custom_call.1} parent=11 // pred_check
          %p698 = pneg %p430
        $region66: #{tpu_custom_call.1} parent=11 // pred_check_branch
          %700 = sbr.rel (%p698) target = $region68
        $region67: #{tpu_custom_call.1} parent=11 // pred_region
          _
        $region68: #{tpu_custom_call.1} parent=11 // pred_fallthru
          _
        // Predicated region
        $region69: #{tpu_custom_call.1} parent=11 // pred_check
          %p701 = pneg %p451
        $region70: #{tpu_custom_call.1} parent=11 // pred_check_branch
          %703 = sbr.rel (%p701) target = $region72
        $region71: #{tpu_custom_call.1} parent=11 // pred_region
          _
        $region72: #{tpu_custom_call.1} parent=11 // pred_fallthru
          _
        // Predicated region
        $region73: #{tpu_custom_call.1} parent=11 // pred_check
          %p704 = pneg %p472
        $region74: #{tpu_custom_call.1} parent=11 // pred_check_branch
          %706 = sbr.rel (%p704) target = $region76
        $region75: #{tpu_custom_call.1} parent=11 // pred_region
          _
        $region76: #{tpu_custom_call.1} parent=11 // pred_fallthru
          _
      $region12: #{tpu_custom_call.1} parent=5 // pred_fallthru
        _
      %p707 = scmp.lt.s32.totalorder %s44, 4
      // Predicated region
      $region77: #{tpu_custom_call.1} parent=5 // pred_check
        %p708 = pneg %p707
      $region78: #{tpu_custom_call.1} parent=5 // pred_check_branch
        %710 = sbr.rel (%p708) target = $region80
      $region79: #{tpu_custom_call.1} parent=5 // pred_region
        // Predicated region
        $region81: #{tpu_custom_call.1} parent=79 // pred_check
          %p711 = pneg %p78
        $region82: #{tpu_custom_call.1} parent=79 // pred_check_branch
          %713 = sbr.rel (%p711) target = $region84
        $region83: #{tpu_custom_call.1} parent=79 // pred_region
          %s714 = sand.u32 %s68, 1
          %s715 = scalar_lea.sflag [#allocation5], %s714
          %s716 = sand.u32 %s68, 1
          %s717 = smul.addr %s716, 8
          %s718 = scalar_lea.vmem [#allocation4], %s717
          %720 = vsyncadd %s715, 0
          %s721 = smul.addr %s51, 2
          %s722 = sadd.s32 %s52, %s721
          %s723 = smul.addr %s722, 8
          %s724 = scalar_lea.hbm %s0, %s723
          %s726 = sshll.u32 %s724, 4
          %s727 = int_to_ptr.hbm [resolvable:$true] %s726
          %s728 = sshll.u32 %s718, 4
          %s729 = int_to_ptr.vmem [resolvable:$true] %s728
          %731 = dma.hbm_to_vmem [thread:$0]  %s727, 128, %s729, %s715
        $region84: #{tpu_custom_call.1} parent=79 // pred_fallthru
          _
        // Predicated region
        $region85: #{tpu_custom_call.1} parent=79 // pred_check
          %p732 = pneg %p104
        $region86: #{tpu_custom_call.1} parent=79 // pred_check_branch
          %734 = sbr.rel (%p732) target = $region88
        $region87: #{tpu_custom_call.1} parent=79 // pred_region
          %s735 = sand.u32 %s44, 1
          %s736 = scalar_lea.sflag [#allocation8], %s735
          %s737 = sand.u32 %s94, 1
          %s738 = smul.addr %s737, 16
          %s739 = scalar_lea.vmem [#allocation7], %s738
          %741 = vsyncadd %s736, 0
          %s742 = smul.addr %s51, 2
          %s743 = smul.addr %s742, 8
          %s744 = scalar_lea.hbm %s1, %s743
          %s745 = sshll.u32 %s744, 4
          %s746 = int_to_ptr.hbm [resolvable:$true] %s745
          %s747 = sshll.u32 %s739, 4
          %s748 = int_to_ptr.vmem [resolvable:$true] %s747
          %753 = dma.hbm_to_vmem [thread:$0]  %s746, 256, %s748, %s736, 128, 128, 8
        $region88: #{tpu_custom_call.1} parent=79 // pred_fallthru
          _
        // Predicated region
        $region89: #{tpu_custom_call.1} parent=79 // pred_check
          %p754 = pneg %p130
        $region90: #{tpu_custom_call.1} parent=79 // pred_check_branch
          %756 = sbr.rel (%p754) target = $region92
        $region91: #{tpu_custom_call.1} parent=79 // pred_region
          %s757 = sand.u32 %s44, 1
          %s758 = scalar_lea.sflag [#allocation8], %s757
          %s759 = sand.u32 %s120, 1
          %s760 = smul.addr %s759, 32
          %s761 = scalar_lea.vmem [#allocation9], %s760
          %763 = vsyncadd %s758, 0
          %s764 = smul.addr %s51, 4
          %s765 = smul.addr %s764, 8
          %s766 = scalar_lea.hbm %s2, %s765
          %s767 = sshll.u32 %s766, 4
          %s768 = int_to_ptr.hbm [resolvable:$true] %s767
          %s769 = sshll.u32 %s761, 4
          %s770 = int_to_ptr.vmem [resolvable:$true] %s769
          %775 = dma.hbm_to_vmem [thread:$0]  %s768, 512, %s770, %s758, 128, 128, 8
        $region92: #{tpu_custom_call.1} parent=79 // pred_fallthru
          _
      $region80: #{tpu_custom_call.1} parent=5 // pred_fallthru
        _
      %p776 = scmp.le.s32.totalorder 1, %s44
      %p777 = scmp.lt.s32.totalorder %s44, 5
      %p778 = pnand %p776, %p777
      %p779 = pneg %p778
      // Predicated region
      $region93: #{tpu_custom_call.1} parent=5 // pred_check
        _
      $region94: #{tpu_custom_call.1} parent=5 // pred_check_branch
        %781 = sbr.rel (%p778) target = $region96
      $region95: #{tpu_custom_call.1} parent=5 // pred_region
        %s782 = ssub.s32 %s44, 1
        %s783 = sand.u32 %s71, 1
        %s784 = scalar_lea.sflag [#allocation5], %s783
        %s785 = sand.u32 %s71, 1
        %s786 = smul.addr %s785, 8
        %s787 = scalar_lea.vmem [#allocation4], %s786
        // Predicated region
        $region97: #{tpu_custom_call.1} parent=95 // pred_check
          %p788 = pneg %p84
        $region98: #{tpu_custom_call.1} parent=95 // pred_check_branch
          %790 = sbr.rel (%p788) target = $region100
        $region99: #{tpu_custom_call.1} parent=95 // pred_region
          %792 = dma.done %s784, 128
        $region100: #{tpu_custom_call.1} parent=95 // pred_fallthru
          _
        %s793 = sand.u32 %s49, 1
        %s794 = scalar_lea.sflag [#allocation8], %s793
        %s795 = sand.u32 %s97, 1
        %s796 = smul.addr %s795, 16
        %s797 = scalar_lea.vmem [#allocation7], %s796
        // Predicated region
        $region101: #{tpu_custom_call.1} parent=95 // pred_check
          %p798 = pneg %p110
        $region102: #{tpu_custom_call.1} parent=95 // pred_check_branch
          %800 = sbr.rel (%p798) target = $region104
        $region103: #{tpu_custom_call.1} parent=95 // pred_region
          %802 = dma.done %s794, 256
        $region104: #{tpu_custom_call.1} parent=95 // pred_fallthru
          _
        %s803 = sand.u32 %s49, 1
        %s804 = scalar_lea.sflag [#allocation8], %s803
        %s805 = sand.u32 %s123, 1
        %s806 = smul.addr %s805, 32
        %s807 = scalar_lea.vmem [#allocation9], %s806
        // Predicated region
        $region105: #{tpu_custom_call.1} parent=95 // pred_check
          %p808 = pneg %p136
        $region106: #{tpu_custom_call.1} parent=95 // pred_check_branch
          %810 = sbr.rel (%p808) target = $region108
        $region107: #{tpu_custom_call.1} parent=95 // pred_region
          %812 = dma.done %s804, 512
        $region108: #{tpu_custom_call.1} parent=95 // pred_fallthru
          _
        // Predicated region
        $region109: #{tpu_custom_call.1} parent=95 // pred_check
          %p813 = pneg %p157
        $region110: #{tpu_custom_call.1} parent=95 // pred_check_branch
          %815 = sbr.rel (%p813) target = $region112
        $region111: #{tpu_custom_call.1} parent=95 // pred_region
          %817 = dma.done [#allocation11], 1024
        $region112: #{tpu_custom_call.1} parent=95 // pred_fallthru
          _
        // Predicated region
        $region113: #{tpu_custom_call.1} parent=95 // pred_check
          %p818 = pneg %p178
        $region114: #{tpu_custom_call.1} parent=95 // pred_check_branch
          %820 = sbr.rel (%p818) target = $region116
        $region115: #{tpu_custom_call.1} parent=95 // pred_region
          %822 = dma.done [#allocation11], 2048
        $region116: #{tpu_custom_call.1} parent=95 // pred_fallthru
          _
        // Predicated region
        $region117: #{tpu_custom_call.1} parent=95 // pred_check
          %p823 = pneg %p199
        $region118: #{tpu_custom_call.1} parent=95 // pred_check_branch
          %825 = sbr.rel (%p823) target = $region120
        $region119: #{tpu_custom_call.1} parent=95 // pred_region
          %827 = dma.done [#allocation14], 1024
        $region120: #{tpu_custom_call.1} parent=95 // pred_fallthru
          _
        // Predicated region
        $region121: #{tpu_custom_call.1} parent=95 // pred_check
          %p828 = pneg %p262
        $region122: #{tpu_custom_call.1} parent=95 // pred_check_branch
          %830 = sbr.rel (%p828) target = $region124
        $region123: #{tpu_custom_call.1} parent=95 // pred_region
          %832 = dma.done [#allocation14], 1024
        $region124: #{tpu_custom_call.1} parent=95 // pred_fallthru
          _
        // Predicated region
        $region125: #{tpu_custom_call.1} parent=95 // pred_check
          %p833 = pneg %p283
        $region126: #{tpu_custom_call.1} parent=95 // pred_check_branch
          %835 = sbr.rel (%p833) target = $region128
        $region127: #{tpu_custom_call.1} parent=95 // pred_region
          %837 = dma.done [#allocation17], 2048
        $region128: #{tpu_custom_call.1} parent=95 // pred_fallthru
          _
        // Predicated region
        $region129: #{tpu_custom_call.1} parent=95 // pred_check
          %p838 = pneg %p304
        $region130: #{tpu_custom_call.1} parent=95 // pred_check_branch
          %840 = sbr.rel (%p838) target = $region132
        $region131: #{tpu_custom_call.1} parent=95 // pred_region
          %842 = dma.done [#allocation17], 1024
        $region132: #{tpu_custom_call.1} parent=95 // pred_fallthru
          _
        // Predicated region
        $region133: #{tpu_custom_call.1} parent=95 // pred_check
          %p843 = pneg %p367
        $region134: #{tpu_custom_call.1} parent=95 // pred_check_branch
          %845 = sbr.rel (%p843) target = $region136
        $region135: #{tpu_custom_call.1} parent=95 // pred_region
          %847 = dma.done [#allocation20], 2048
        $region136: #{tpu_custom_call.1} parent=95 // pred_fallthru
          _
        // Predicated region
        $region137: #{tpu_custom_call.1} parent=95 // pred_check
          %p848 = pneg %p409
        $region138: #{tpu_custom_call.1} parent=95 // pred_check_branch
          %850 = sbr.rel (%p848) target = $region140
        $region139: #{tpu_custom_call.1} parent=95 // pred_region
          %852 = dma.done [#allocation20], 2048
        $region140: #{tpu_custom_call.1} parent=95 // pred_fallthru
          _
        %s853 = sand.u32 %s71, 1
        %s854 = scalar_lea.sflag [#allocation5], %s853
        %s855 = sand.u32 %s71, 1
        %s856 = smul.addr %s855, 8
        %s857 = scalar_lea.vmem [#allocation4], %s856
        %p858 = pneg %p84
        %p859 = pneg %p81
        %s860 = sand.u32 %s49, 1
        %s861 = scalar_lea.sflag [#allocation8], %s860
        %s862 = sand.u32 %s97, 1
        %s863 = smul.addr %s862, 16
        %s864 = scalar_lea.vmem [#allocation7], %s863
        %p865 = pneg %p110
        %p866 = pneg %p107
        %s867 = sand.u32 %s49, 1
        %s868 = scalar_lea.sflag [#allocation8], %s867
        %s869 = sand.u32 %s123, 1
        %s870 = smul.addr %s869, 32
        %s871 = scalar_lea.vmem [#allocation9], %s870
        %p872 = pneg %p136
        %p873 = pneg %p133
        %p874 = pneg %p157
        %p875 = pneg %p154
        %p876 = pneg %p178
        %p877 = pneg %p175
        %p878 = pneg %p199
        %p879 = pneg %p196
        %p880 = pneg %p220
        %p881 = pneg %p217
        %p882 = pneg %p241
        %p883 = pneg %p238
        %p884 = pneg %p262
        %p885 = pneg %p259
        %p886 = pneg %p283
        %p887 = pneg %p280
        %p888 = pneg %p304
        %p889 = pneg %p301
        %p890 = pneg %p325
        %p891 = pneg %p322
        %p892 = pneg %p346
        %p893 = pneg %p343
        %p894 = pneg %p367
        %p895 = pneg %p364
        %p896 = pneg %p388
        %p897 = pneg %p385
        %p898 = pneg %p409
        %p899 = pneg %p406
        %p900 = pneg %p430
        %p901 = pneg %p427
        %p902 = pneg %p451
        %p903 = pneg %p448
        %p904 = pneg %p472
        %p905 = pneg %p469
        %p906 = pneg %p500
        %p907 = pneg %p497
        %s908 = sand.u32 %s487, 1
        %s909 = scalar_lea.sflag [#allocation6], %s908
        %s910 = sand.u32 %s487, 1
        %s911 = smul.addr %s910, 8
        %s912 = scalar_lea.vmem [#allocation22], %s911
        %p913 = pneg %p528
        %p914 = pneg %p525
        %s915 = sand.u32 %s49, 1
        %s916 = scalar_lea.sflag [#allocation24], %s915
        %s917 = sand.u32 %s515, 1
        %s918 = smul.addr %s917, 16
        %s919 = scalar_lea.vmem [#allocation23], %s918
        %p920 = pneg %p556
        %p921 = pneg %p553
        %s922 = sand.u32 %s49, 1
        %s923 = scalar_lea.sflag [#allocation24], %s922
        %s924 = sand.u32 %s543, 1
        %s925 = smul.addr %s924, 16
        %s926 = scalar_lea.vmem [#allocation25], %s925
        %p928 = scmp.eq.s32.totalorder %s54, 0
        // Predicated region
        $region141: #{tpu_custom_call.1} parent=95 // pred_check
          %p929 = pneg %p928
        $region142: #{tpu_custom_call.1} parent=95 // pred_check_branch
          %931 = sbr.rel (%p929) target = $region144
        $region143: #{tpu_custom_call.1} parent=95 // pred_region
          %v932 = vld [vmem:[%s797] sm:$0xff]
          %v933 = vld [vmem:[%s797 + $0x8] sm:$0xff]
          %v934 = vpack.c.bf16 %v933, %v932
          %v935 = vld [vmem:[#allocation12] sm:$0xff]
          %v936 = vld [vmem:[#allocation12 + $0x8] sm:$0xff]
          %v937 = vld [vmem:[#allocation12 + $0x10] sm:$0xff]
          %v938 = vld [vmem:[#allocation12 + $0x18] sm:$0xff]
          %v939 = vld [vmem:[#allocation12 + $0x20] sm:$0xff]
          %v940 = vld [vmem:[#allocation12 + $0x28] sm:$0xff]
          %v941 = vld [vmem:[#allocation12 + $0x30] sm:$0xff]
          %v942 = vld [vmem:[#allocation12 + $0x38] sm:$0xff]
          %v943 = vld [vmem:[#allocation12 + $0x40] sm:$0xff]
          %v944 = vld [vmem:[#allocation12 + $0x48] sm:$0xff]
          %v945 = vld [vmem:[#allocation12 + $0x50] sm:$0xff]
          %v946 = vld [vmem:[#allocation12 + $0x58] sm:$0xff]
          %v947 = vld [vmem:[#allocation12 + $0x60] sm:$0xff]
          %v948 = vld [vmem:[#allocation12 + $0x68] sm:$0xff]
          %v949 = vld [vmem:[#allocation12 + $0x70] sm:$0xff]
          %v950 = vld [vmem:[#allocation12 + $0x78] sm:$0xff]
          %v967 = vunpack.c.l.b16 %v935
          %v968 = vunpack.c.h.b16 %v935
          %v969 = vunpack.c.l.b16 %v936
          %v970 = vunpack.c.h.b16 %v936
          %v971 = vunpack.c.l.b16 %v937
          %v972 = vunpack.c.h.b16 %v937
          %v973 = vunpack.c.l.b16 %v938
          %v974 = vunpack.c.h.b16 %v938
          %v975 = vunpack.c.l.b16 %v939
          %v976 = vunpack.c.h.b16 %v939
          %v977 = vunpack.c.l.b16 %v940
          %v978 = vunpack.c.h.b16 %v940
          %v979 = vunpack.c.l.b16 %v941
          %v980 = vunpack.c.h.b16 %v941
          %v981 = vunpack.c.l.b16 %v942
          %v982 = vunpack.c.h.b16 %v942
          %v983 = vunpack.c.l.b16 %v943
          %v984 = vunpack.c.h.b16 %v943
          %v985 = vunpack.c.l.b16 %v944
          %v986 = vunpack.c.h.b16 %v944
          %v987 = vunpack.c.l.b16 %v945
          %v988 = vunpack.c.h.b16 %v945
          %v989 = vunpack.c.l.b16 %v946
          %v990 = vunpack.c.h.b16 %v946
          %v991 = vunpack.c.l.b16 %v947
          %v992 = vunpack.c.h.b16 %v947
          %v993 = vunpack.c.l.b16 %v948
          %v994 = vunpack.c.h.b16 %v948
          %v995 = vunpack.c.l.b16 %v949
          %v996 = vunpack.c.h.b16 %v949
          %v997 = vunpack.c.l.b16 %v950
          %v998 = vunpack.c.h.b16 %v950
          %v999 = vpack.c.b16 %v969, %v967
          %v1000 = vpack.c.b16 %v970, %v968
          %v1001 = vpack.c.b16 %v973, %v971
          %v1002 = vpack.c.b16 %v974, %v972
          %v1003 = vpack.c.b16 %v977, %v975
          %v1004 = vpack.c.b16 %v978, %v976
          %v1005 = vpack.c.b16 %v981, %v979
          %v1006 = vpack.c.b16 %v982, %v980
          %v1007 = vpack.c.b16 %v985, %v983
          %v1008 = vpack.c.b16 %v986, %v984
          %v1009 = vpack.c.b16 %v989, %v987
          %v1010 = vpack.c.b16 %v990, %v988
          %v1011 = vpack.c.b16 %v993, %v991
          %v1012 = vpack.c.b16 %v994, %v992
          %v1013 = vpack.c.b16 %v997, %v995
          %v1014 = vpack.c.b16 %v998, %v996
          %1031 = vmatpush.bf16.msra.mxu0 %v1013
          %1032 = vmatpush.bf16.msra.mxu0 %v1011
          %1033 = vmatpush.bf16.msra.mxu0 %v1009
          %1034 = vmatpush.bf16.msra.mxu0 %v1007
          %1035 = vmatpush.bf16.msra.mxu0 %v1005
          %1036 = vmatpush.bf16.msra.mxu0 %v1003
          %1037 = vmatpush.bf16.msra.mxu0 %v1001
          %1038 = vmatpush.bf16.msra.mxu0 %v999
          %1039 = vmatmul.bf16.gmra.mxu0 %v934
          %v1040 = vpop.f32.mrf.mxu0
          %v1041 = vadd.f32 0.0, %v1040
          %v1042 = vpop.f32.mrf.mxu0
          %v1043 = vadd.f32 0.0, %v1042
          %1044 = vdwg.mxu0
          %1045 = vmatpush.bf16.msra.mxu0 %v1014
          %1046 = vmatpush.bf16.msra.mxu0 %v1012
          %1047 = vmatpush.bf16.msra.mxu0 %v1010
          %1048 = vmatpush.bf16.msra.mxu0 %v1008
          %1049 = vmatpush.bf16.msra.mxu0 %v1006
          %1050 = vmatpush.bf16.msra.mxu0 %v1004
          %1051 = vmatpush.bf16.msra.mxu0 %v1002
          %1052 = vmatpush.bf16.msra.mxu0 %v1000
          %1053 = vmatmul.bf16.gmra.mxu0 %v934
          %v1054 = vpop.f32.mrf.mxu0
          %v1055 = vadd.f32 0.0, %v1054
          %v1056 = vpop.f32.mrf.mxu0
          %v1057 = vadd.f32 0.0, %v1056
          %1058 = vdwg.mxu0
          %v1059 = vpack.c.bf16 %v1055, %v1041
          %v1060 = vpack.c.bf16 %v1057, %v1043
          %1061 = vst [vmem:[#allocation2] sm:$0xff] %v1059
          %1062 = vst [vmem:[#allocation2 + $0x8] sm:$0xff] %v1060
          %v1063 = vld [vmem:[%s807] sm:$0xff]
          %v1064 = vld [vmem:[%s807 + $0x8] sm:$0xff]
          %v1065 = vld [vmem:[%s807 + $0x10] sm:$0xff]
          %v1066 = vld [vmem:[%s807 + $0x18] sm:$0xff]
          %v1067 = vpack.c.bf16 %v1064, %v1063
          %v1068 = vpack.c.bf16 %v1066, %v1065
          %v1069 = vld [vmem:[#allocation16] sm:$0xff]
          %v1070 = vld [vmem:[#allocation16 + $0x8] sm:$0xff]
          %v1071 = vld [vmem:[#allocation16 + $0x10] sm:$0xff]
          %v1072 = vld [vmem:[#allocation16 + $0x18] sm:$0xff]
          %v1073 = vld [vmem:[#allocation16 + $0x20] sm:$0xff]
          %v1074 = vld [vmem:[#allocation16 + $0x28] sm:$0xff]
          %v1075 = vld [vmem:[#allocation16 + $0x30] sm:$0xff]
          %v1076 = vld [vmem:[#allocation16 + $0x38] sm:$0xff]
          %v1077 = vld [vmem:[#allocation16 + $0x40] sm:$0xff]
          %v1078 = vld [vmem:[#allocation16 + $0x48] sm:$0xff]
          %v1079 = vld [vmem:[#allocation16 + $0x50] sm:$0xff]
          %v1080 = vld [vmem:[#allocation16 + $0x58] sm:$0xff]
          %v1081 = vld [vmem:[#allocation16 + $0x60] sm:$0xff]
          %v1082 = vld [vmem:[#allocation16 + $0x68] sm:$0xff]
          %v1083 = vld [vmem:[#allocation16 + $0x70] sm:$0xff]
          %v1084 = vld [vmem:[#allocation16 + $0x78] sm:$0xff]
          %v1101 = vunpack.c.l.b16 %v1069
          %v1102 = vunpack.c.h.b16 %v1069
          %v1103 = vunpack.c.l.b16 %v1070
          %v1104 = vunpack.c.h.b16 %v1070
          %v1105 = vunpack.c.l.b16 %v1071
          %v1106 = vunpack.c.h.b16 %v1071
          %v1107 = vunpack.c.l.b16 %v1072
          %v1108 = vunpack.c.h.b16 %v1072
          %v1109 = vunpack.c.l.b16 %v1073
          %v1110 = vunpack.c.h.b16 %v1073
          %v1111 = vunpack.c.l.b16 %v1074
          %v1112 = vunpack.c.h.b16 %v1074
          %v1113 = vunpack.c.l.b16 %v1075
          %v1114 = vunpack.c.h.b16 %v1075
          %v1115 = vunpack.c.l.b16 %v1076
          %v1116 = vunpack.c.h.b16 %v1076
          %v1117 = vunpack.c.l.b16 %v1077
          %v1118 = vunpack.c.h.b16 %v1077
          %v1119 = vunpack.c.l.b16 %v1078
          %v1120 = vunpack.c.h.b16 %v1078
          %v1121 = vunpack.c.l.b16 %v1079
          %v1122 = vunpack.c.h.b16 %v1079
          %v1123 = vunpack.c.l.b16 %v1080
          %v1124 = vunpack.c.h.b16 %v1080
          %v1125 = vunpack.c.l.b16 %v1081
          %v1126 = vunpack.c.h.b16 %v1081
          %v1127 = vunpack.c.l.b16 %v1082
          %v1128 = vunpack.c.h.b16 %v1082
          %v1129 = vunpack.c.l.b16 %v1083
          %v1130 = vunpack.c.h.b16 %v1083
          %v1131 = vunpack.c.l.b16 %v1084
          %v1132 = vunpack.c.h.b16 %v1084
          %v1133 = vpack.c.b16 %v1103, %v1101
          %v1134 = vpack.c.b16 %v1104, %v1102
          %v1135 = vpack.c.b16 %v1107, %v1105
          %v1136 = vpack.c.b16 %v1108, %v1106
          %v1137 = vpack.c.b16 %v1111, %v1109
          %v1138 = vpack.c.b16 %v1112, %v1110
          %v1139 = vpack.c.b16 %v1115, %v1113
          %v1140 = vpack.c.b16 %v1116, %v1114
          %v1141 = vpack.c.b16 %v1119, %v1117
          %v1142 = vpack.c.b16 %v1120, %v1118
          %v1143 = vpack.c.b16 %v1123, %v1121
          %v1144 = vpack.c.b16 %v1124, %v1122
          %v1145 = vpack.c.b16 %v1127, %v1125
          %v1146 = vpack.c.b16 %v1128, %v1126
          %v1147 = vpack.c.b16 %v1131, %v1129
          %v1148 = vpack.c.b16 %v1132, %v1130
          %1165 = vmatpush.bf16.msra.mxu0 %v1147
          %1166 = vmatpush.bf16.msra.mxu0 %v1145
          %1167 = vmatpush.bf16.msra.mxu0 %v1143
          %1168 = vmatpush.bf16.msra.mxu0 %v1141
          %1169 = vmatpush.bf16.msra.mxu0 %v1139
          %1170 = vmatpush.bf16.msra.mxu0 %v1137
          %1171 = vmatpush.bf16.msra.mxu0 %v1135
          %1172 = vmatpush.bf16.msra.mxu0 %v1133
          %1173 = vmatmul.bf16.gmra.mxu0 %v1067
          %v1174 = vpop.f32.mrf.mxu0
          %v1175 = vadd.f32 0.0, %v1174
          %v1176 = vpop.f32.mrf.mxu0
          %v1177 = vadd.f32 0.0, %v1176
          %1178 = vmatmul.bf16.gmra.mxu0 %v1068
          %v1179 = vpop.f32.mrf.mxu0
          %v1180 = vadd.f32 0.0, %v1179
          %v1181 = vpop.f32.mrf.mxu0
          %v1182 = vadd.f32 0.0, %v1181
          %1183 = vdwg.mxu0
          %1184 = vmatpush.bf16.msra.mxu0 %v1148
          %1185 = vmatpush.bf16.msra.mxu0 %v1146
          %1186 = vmatpush.bf16.msra.mxu0 %v1144
          %1187 = vmatpush.bf16.msra.mxu0 %v1142
          %1188 = vmatpush.bf16.msra.mxu0 %v1140
          %1189 = vmatpush.bf16.msra.mxu0 %v1138
          %1190 = vmatpush.bf16.msra.mxu0 %v1136
          %1191 = vmatpush.bf16.msra.mxu0 %v1134
          %1192 = vmatmul.bf16.gmra.mxu0 %v1067
          %v1193 = vpop.f32.mrf.mxu0
          %v1194 = vadd.f32 0.0, %v1193
          %v1195 = vpop.f32.mrf.mxu0
          %v1196 = vadd.f32 0.0, %v1195
          %1197 = vmatmul.bf16.gmra.mxu0 %v1068
          %v1198 = vpop.f32.mrf.mxu0
          %v1199 = vadd.f32 0.0, %v1198
          %v1200 = vpop.f32.mrf.mxu0
          %v1201 = vadd.f32 0.0, %v1200
          %1202 = vdwg.mxu0
          %v1203 = vpack.c.bf16 %v1194, %v1175
          %v1204 = vpack.c.bf16 %v1196, %v1177
          %v1205 = vpack.c.bf16 %v1199, %v1180
          %v1206 = vpack.c.bf16 %v1201, %v1182
          %1207 = vst [vmem:[#allocation3] sm:$0xff] %v1203
          %1208 = vst [vmem:[#allocation3 + $0x8] sm:$0xff] %v1204
          %1209 = vst [vmem:[#allocation3 + $0x10] sm:$0xff] %v1205
          %1210 = vst [vmem:[#allocation3 + $0x18] sm:$0xff] %v1206
        $region144: #{tpu_custom_call.1} parent=95 // pred_fallthru
          _
        %v1211 = vld [vmem:[%s787] sm:$0xff]
        %1212 = vadd.xlane.f32.xlu0 %v1211
        %v1213 = vpop.xlane.xlu0 %1212
        %v1214 = vrcp.pop 128.0
        %v1215 = vmul.f32 128.0, %v1214
        %v1216 = vsub.f32 1.0, %v1215
        %v1217 = vmul.f32 %v1214, %v1216
        %v1218 = vadd.f32 %v1214, %v1217
        %vm1219 = vweird.f32 %v1214
        %v1220 = vsel %vm1219, %v1214, %v1218
        %v1221 = vmul.f32 %v1213, %v1220
        %v1222 = vsub.f32 %v1211, %v1221
        %v1223 = vmul.f32 %v1222, %v1222
        %1224 = vadd.xlane.f32.xlu0 %v1223
        %v1225 = vpop.xlane.xlu0 %1224
        %v1226 = vmul.f32 %v1225, %v1220
        %v1227 = vadd.f32 %v1226, 1e-06
        %v1228 = vrsqrt.pop %v1227
        %v1229 = vmul.f32 %v1228, %v1227
        %v1230 = vmul.f32 %v1229, %v1228
        %v1231 = vmul.f32 0.5, %v1230
        %v1232 = vsub.f32 1.5, %v1231
        %v1233 = vmul.f32 %v1228, %v1232
        %vm1234 = vweird.f32 %v1227
        %vm1235 = vweird.f32 %v1228
        %vm1236 = vmor %vm1234, %vm1235
        %v1237 = vsel %vm1236, %v1228, %v1233
        %v1238 = vmul.f32 %v1222, %v1237
        %v1239 = vld [vmem:[%s6] sm:$0x1]
        %v1241 = vperm.slane %v1239, 0
        %v1243 = vmul.f32 %v1238, %v1241
        %v1244 = vld [vmem:[%s7] sm:$0x1]
        %v1246 = vperm.slane %v1244, 0
        %v1248 = vadd.f32 %v1243, %v1246
        %v1249 = vpack.c.bf16 %v1248, %v1248
        %v1250 = vld [vmem:[#allocation10] sm:$0xf]
        %v1251 = vld [vmem:[#allocation10 + $0x4] sm:$0xf]
        %v1252 = vld [vmem:[#allocation10 + $0x8] sm:$0xf]
        %v1253 = vld [vmem:[#allocation10 + $0xc] sm:$0xf]
        %v1254 = vld [vmem:[#allocation10 + $0x10] sm:$0xf]
        %v1255 = vld [vmem:[#allocation10 + $0x14] sm:$0xf]
        %v1256 = vld [vmem:[#allocation10 + $0x18] sm:$0xf]
        %v1257 = vld [vmem:[#allocation10 + $0x1c] sm:$0xf]
        %v1258 = vld [vmem:[#allocation10 + $0x20] sm:$0xf]
        %v1259 = vld [vmem:[#allocation10 + $0x24] sm:$0xf]
        %v1260 = vld [vmem:[#allocation10 + $0x28] sm:$0xf]
        %v1261 = vld [vmem:[#allocation10 + $0x2c] sm:$0xf]
        %v1262 = vld [vmem:[#allocation10 + $0x30] sm:$0xf]
        %v1263 = vld [vmem:[#allocation10 + $0x34] sm:$0xf]
        %v1264 = vld [vmem:[#allocation10 + $0x38] sm:$0xf]
        %v1265 = vld [vmem:[#allocation10 + $0x3c] sm:$0xf]
        %v1282 = vunpack.c.l.b16 %v1250
        %v1283 = vunpack.c.l.b16 %v1251
        %v1284 = vunpack.c.l.b16 %v1252
        %v1285 = vunpack.c.l.b16 %v1253
        %v1286 = vunpack.c.l.b16 %v1254
        %v1287 = vunpack.c.l.b16 %v1255
        %v1288 = vunpack.c.l.b16 %v1256
        %v1289 = vunpack.c.l.b16 %v1257
        %v1290 = vunpack.c.l.b16 %v1258
        %v1291 = vunpack.c.l.b16 %v1259
        %v1292 = vunpack.c.l.b16 %v1260
        %v1293 = vunpack.c.l.b16 %v1261
        %v1294 = vunpack.c.l.b16 %v1262
        %v1295 = vunpack.c.l.b16 %v1263
        %v1296 = vunpack.c.l.b16 %v1264
        %v1297 = vunpack.c.l.b16 %v1265
        %v1298 = vpack.c.b16 %v1283, %v1282
        %v1299 = vpack.c.b16 %v1285, %v1284
        %v1300 = vpack.c.b16 %v1287, %v1286
        %v1301 = vpack.c.b16 %v1289, %v1288
        %v1302 = vpack.c.b16 %v1291, %v1290
        %v1303 = vpack.c.b16 %v1293, %v1292
        %v1304 = vpack.c.b16 %v1295, %v1294
        %v1305 = vpack.c.b16 %v1297, %v1296
        %1314 = vmatpush.bf16.msra.mxu0 %v1305
        %1315 = vmatpush.bf16.msra.mxu0 %v1304
        %1316 = vmatpush.bf16.msra.mxu0 %v1303
        %1317 = vmatpush.bf16.msra.mxu0 %v1302
        %1318 = vmatpush.bf16.msra.mxu0 %v1301
        %1319 = vmatpush.bf16.msra.mxu0 %v1300
        %1320 = vmatpush.bf16.msra.mxu0 %v1299
        %1321 = vmatpush.bf16.msra.mxu0 %v1298
        %1322 = vmatmul.bf16.gmra.mxu0 %v1249
        %v1323 = vpop.f32.mrf.mxu0
        %v1324 = vadd.f32 0.0, %v1323
        %v1325 = vpop.f32.mrf.mxu0
        %1326 = vdwg.mxu0
        %v1327 = vpack.c.bf16 %v1324, %v1324
        %v1328 = vld [vmem:[#allocation2] sm:$0xf]
        %v1329 = vld [vmem:[#allocation2 + $0x8] sm:$0xf]
        %v1330 = vld [vmem:[#allocation2 + $0x4] sm:$0xf]
        %v1331 = vld [vmem:[#allocation2 + $0xc] sm:$0xf]
        %v1334 = vunpack.c.l.b16 %v1328
        %v1335 = vunpack.c.l.b16 %v1329
        %v1336 = vpack.c.b16 %v1335, %v1334
        %vm1337 = vcmask 261120
        %v1339 = vsel %vm1337, %v1327, 0
        %v1342 = vsel %vm1337, %v1336, 0
        %1344 = vmatpush.bf16.xpose.msra.mxu0 0
        %1345 = vmatpush.bf16.xpose.msra.mxu0 0
        %1346 = vmatpush.bf16.xpose.msra.mxu0 0
        %1347 = vmatpush.bf16.xpose.msra.mxu0 0
        %1348 = vmatpush.bf16.xpose.msra.mxu0 0
        %1349 = vmatpush.bf16.xpose.msra.mxu0 0
        %1350 = vmatpush.bf16.xpose.msra.mxu0 0
        %1351 = vmatpush.bf16.xpose.msra.mxu0 %v1342
        %1352 = vmatmul.bf16.gmra.mxu0 %v1339
        %v1353 = vpop.f32.mrf.mxu0
        %v1354 = vadd.f32 0.0, %v1353
        %v1355 = vpop.f32.mrf.mxu0
        %1356 = vdwg.mxu0
        %vm1357 = vcmask 130048
        %v1358 = vsel %vm1357, %v1354, -inf
        %1359 = vmax.xlane.f32.xlu0 %v1358
        %v1360 = vpop.xlane.xlu0 %1359
        %v1361 = vsub.f32 %v1354, %v1360
        %v1362 = vmul.f32 %v1361, 1.442695
        %v1363 = vpow.pop %v1362
        %v1364 = vsel %vm1357, %v1363, 0.0
        %1365 = vadd.xlane.f32.xlu0 %v1364
        %v1366 = vpop.xlane.xlu0 %1365
        %v1367 = vrcp.pop %v1366
        %v1368 = vmul.f32 %v1366, %v1367
        %v1369 = vsub.f32 1.0, %v1368
        %v1370 = vmul.f32 %v1367, %v1369
        %v1371 = vadd.f32 %v1367, %v1370
        %vm1372 = vweird.f32 %v1366
        %vm1373 = vweird.f32 %v1367
        %vm1374 = vmor %vm1372, %vm1373
        %v1375 = vsel %vm1374, %v1367, %v1371
        %v1376 = vand.u32 2147483647, %v1366
        %vm1377 = vcmp.eq.f32.partialorder %v1376, 8.507059e+37
        %v1378 = vand.u32 %v1366, 2147483648
        %v1379 = vor.u32 1.1754944e-38, %v1378
        %v1380 = vsel %vm1377, %v1379, %v1375
        %v1381 = vmul.f32 1.0, %v1380
        %v1382 = vmul.f32 %v1363, %v1381
        %v1383 = vpack.c.bf16 %v1382, %v1382
        %vm1384 = vcmask 125952
        %1385 = vst.msk [vmem:[%s919] sm:$0xf] %vm1384, %v1383
        %v1388 = vunpack.c.l.b16 %v1330
        %v1389 = vunpack.c.l.b16 %v1331
        %v1390 = vpack.c.b16 %v1389, %v1388
        %v1393 = vsel %vm1357, %v1383, 0
        %1395 = vmatpush.bf16.msra.mxu0 0
        %1396 = vmatpush.bf16.msra.mxu0 0
        %1397 = vmatpush.bf16.msra.mxu0 0
        %1398 = vmatpush.bf16.msra.mxu0 0
        %1399 = vmatpush.bf16.msra.mxu0 0
        %1400 = vmatpush.bf16.msra.mxu0 0
        %1401 = vmatpush.bf16.msra.mxu0 0
        %1402 = vmatpush.bf16.msra.mxu0 %v1390
        %1403 = vmatmul.bf16.gmra.mxu0 %v1393
        %v1404 = vpop.f32.mrf.mxu0
        %v1405 = vadd.f32 0.0, %v1404
        %v1406 = vpop.f32.mrf.mxu0
        %1407 = vdwg.mxu0
        %v1408 = vpack.c.bf16 %v1405, %v1405
        %v1409 = vld [vmem:[#allocation2] sm:$0xf]
        %v1410 = vld [vmem:[#allocation2 + $0x8] sm:$0xf]
        %v1411 = vld [vmem:[#allocation2 + $0x4] sm:$0xf]
        %v1412 = vld [vmem:[#allocation2 + $0xc] sm:$0xf]
        %v1414 = vunpack.c.l.b16 %v1327
        %v1415 = vpack.c.b16 %v1414, %v1414
        %1416 = vrot.lane.b32.xlu0 %v1415, 96
        %v1417 = vpop.permute.xlu0 %1416
        %v1420 = vunpack.c.l.b16 %v1409
        %v1421 = vunpack.c.l.b16 %v1410
        %v1422 = vpack.c.b16 %v1421, %v1420
        %1423 = vrot.lane.b32.xlu0 %v1422, 96
        %v1424 = vpop.permute.xlu0 %1423
        %v1426 = vsel %vm1337, %v1417, 0
        %v1429 = vsel %vm1337, %v1424, 0
        %1431 = vmatpush.bf16.xpose.msra.mxu0 0
        %1432 = vmatpush.bf16.xpose.msra.mxu0 0
        %1433 = vmatpush.bf16.xpose.msra.mxu0 0
        %1434 = vmatpush.bf16.xpose.msra.mxu0 0
        %1435 = vmatpush.bf16.xpose.msra.mxu0 0
        %1436 = vmatpush.bf16.xpose.msra.mxu0 0
        %1437 = vmatpush.bf16.xpose.msra.mxu0 0
        %1438 = vmatpush.bf16.xpose.msra.mxu0 %v1429
        %1439 = vmatmul.bf16.gmra.mxu0 %v1426
        %v1440 = vpop.f32.mrf.mxu0
        %v1441 = vadd.f32 0.0, %v1440
        %v1442 = vpop.f32.mrf.mxu0
        %1443 = vdwg.mxu0
        %v1444 = vsel %vm1357, %v1441, -inf
        %1445 = vmax.xlane.f32.xlu0 %v1444
        %v1446 = vpop.xlane.xlu0 %1445
        %v1447 = vsub.f32 %v1441, %v1446
        %v1448 = vmul.f32 %v1447, 1.442695
        %v1449 = vpow.pop %v1448
        %v1450 = vsel %vm1357, %v1449, 0.0
        %1451 = vadd.xlane.f32.xlu0 %v1450
        %v1452 = vpop.xlane.xlu0 %1451
        %v1453 = vrcp.pop %v1452
        %v1454 = vmul.f32 %v1452, %v1453
        %v1455 = vsub.f32 1.0, %v1454
        %v1456 = vmul.f32 %v1453, %v1455
        %v1457 = vadd.f32 %v1453, %v1456
        %vm1458 = vweird.f32 %v1452
        %vm1459 = vweird.f32 %v1453
        %vm1460 = vmor %vm1458, %vm1459
        %v1461 = vsel %vm1460, %v1453, %v1457
        %v1462 = vand.u32 2147483647, %v1452
        %vm1463 = vcmp.eq.f32.partialorder %v1462, 8.507059e+37
        %v1464 = vand.u32 %v1452, 2147483648
        %v1465 = vor.u32 1.1754944e-38, %v1464
        %v1466 = vsel %vm1463, %v1465, %v1461
        %v1467 = vmul.f32 1.0, %v1466
        %v1468 = vmul.f32 %v1449, %v1467
        %v1469 = vpack.c.bf16 %v1468, %v1468
        %s1470 = scalar_lea.vmem %s919, 4 [#allocation23]
        %1471 = vst.msk [vmem:[%s1470] sm:$0xf] %vm1384, %v1469
        %v1474 = vunpack.c.l.b16 %v1411
        %v1475 = vunpack.c.l.b16 %v1412
        %v1476 = vpack.c.b16 %v1475, %v1474
        %1477 = vrot.lane.b32.xlu0 %v1476, 96
        %v1478 = vpop.permute.xlu0 %1477
        %v1481 = vsel %vm1357, %v1469, 0
        %1483 = vmatpush.bf16.msra.mxu0 0
        %1484 = vmatpush.bf16.msra.mxu0 0
        %1485 = vmatpush.bf16.msra.mxu0 0
        %1486 = vmatpush.bf16.msra.mxu0 0
        %1487 = vmatpush.bf16.msra.mxu0 0
        %1488 = vmatpush.bf16.msra.mxu0 0
        %1489 = vmatpush.bf16.msra.mxu0 0
        %1490 = vmatpush.bf16.msra.mxu0 %v1478
        %1491 = vmatmul.bf16.gmra.mxu0 %v1481
        %v1492 = vpop.f32.mrf.mxu0
        %v1493 = vadd.f32 0.0, %v1492
        %v1494 = vpop.f32.mrf.mxu0
        %1495 = vdwg.mxu0
        %v1496 = vpack.c.bf16 %v1493, %v1493
        %v1497 = vld [vmem:[#allocation2] sm:$0xf]
        %v1498 = vld [vmem:[#allocation2 + $0x8] sm:$0xf]
        %v1499 = vld [vmem:[#allocation2 + $0x4] sm:$0xf]
        %v1500 = vld [vmem:[#allocation2 + $0xc] sm:$0xf]
        %1501 = vrot.lane.b32.xlu0 %v1415, 64
        %v1502 = vpop.permute.xlu0 %1501
        %v1505 = vunpack.c.l.b16 %v1497
        %v1506 = vunpack.c.l.b16 %v1498
        %v1507 = vpack.c.b16 %v1506, %v1505
        %1508 = vrot.lane.b32.xlu0 %v1507, 64
        %v1509 = vpop.permute.xlu0 %1508
        %v1511 = vsel %vm1337, %v1502, 0
        %v1514 = vsel %vm1337, %v1509, 0
        %1516 = vmatpush.bf16.xpose.msra.mxu0 0
        %1517 = vmatpush.bf16.xpose.msra.mxu0 0
        %1518 = vmatpush.bf16.xpose.msra.mxu0 0
        %1519 = vmatpush.bf16.xpose.msra.mxu0 0
        %1520 = vmatpush.bf16.xpose.msra.mxu0 0
        %1521 = vmatpush.bf16.xpose.msra.mxu0 0
        %1522 = vmatpush.bf16.xpose.msra.mxu0 0
        %1523 = vmatpush.bf16.xpose.msra.mxu0 %v1514
        %1524 = vmatmul.bf16.gmra.mxu0 %v1511
        %v1525 = vpop.f32.mrf.mxu0
        %v1526 = vadd.f32 0.0, %v1525
        %v1527 = vpop.f32.mrf.mxu0
        %1528 = vdwg.mxu0
        %v1529 = vsel %vm1357, %v1526, -inf
        %1530 = vmax.xlane.f32.xlu0 %v1529
        %v1531 = vpop.xlane.xlu0 %1530
        %v1532 = vsub.f32 %v1526, %v1531
        %v1533 = vmul.f32 %v1532, 1.442695
        %v1534 = vpow.pop %v1533
        %v1535 = vsel %vm1357, %v1534, 0.0
        %1536 = vadd.xlane.f32.xlu0 %v1535
        %v1537 = vpop.xlane.xlu0 %1536
        %v1538 = vrcp.pop %v1537
        %v1539 = vmul.f32 %v1537, %v1538
        %v1540 = vsub.f32 1.0, %v1539
        %v1541 = vmul.f32 %v1538, %v1540
        %v1542 = vadd.f32 %v1538, %v1541
        %vm1543 = vweird.f32 %v1537
        %vm1544 = vweird.f32 %v1538
        %vm1545 = vmor %vm1543, %vm1544
        %v1546 = vsel %vm1545, %v1538, %v1542
        %v1547 = vand.u32 2147483647, %v1537
        %vm1548 = vcmp.eq.f32.partialorder %v1547, 8.507059e+37
        %v1549 = vand.u32 %v1537, 2147483648
        %v1550 = vor.u32 1.1754944e-38, %v1549
        %v1551 = vsel %vm1548, %v1550, %v1546
        %v1552 = vmul.f32 1.0, %v1551
        %v1553 = vmul.f32 %v1534, %v1552
        %v1554 = vpack.c.bf16 %v1553, %v1553
        %s1555 = scalar_lea.vmem %s919, 8 [#allocation23]
        %1556 = vst.msk [vmem:[%s1555] sm:$0xf] %vm1384, %v1554
        %v1559 = vunpack.c.l.b16 %v1499
        %v1560 = vunpack.c.l.b16 %v1500
        %v1561 = vpack.c.b16 %v1560, %v1559
        %1562 = vrot.lane.b32.xlu0 %v1561, 64
        %v1563 = vpop.permute.xlu0 %1562
        %v1566 = vsel %vm1357, %v1554, 0
        %1568 = vmatpush.bf16.msra.mxu0 0
        %1569 = vmatpush.bf16.msra.mxu0 0
        %1570 = vmatpush.bf16.msra.mxu0 0
        %1571 = vmatpush.bf16.msra.mxu0 0
        %1572 = vmatpush.bf16.msra.mxu0 0
        %1573 = vmatpush.bf16.msra.mxu0 0
        %1574 = vmatpush.bf16.msra.mxu0 0
        %1575 = vmatpush.bf16.msra.mxu0 %v1563
        %1576 = vmatmul.bf16.gmra.mxu0 %v1566
        %v1577 = vpop.f32.mrf.mxu0
        %v1578 = vadd.f32 0.0, %v1577
        %v1579 = vpop.f32.mrf.mxu0
        %1580 = vdwg.mxu0
        %v1581 = vpack.c.bf16 %v1578, %v1578
        %v1582 = vld [vmem:[#allocation2] sm:$0xf]
        %v1583 = vld [vmem:[#allocation2 + $0x8] sm:$0xf]
        %v1584 = vld [vmem:[#allocation2 + $0x4] sm:$0xf]
        %v1585 = vld [vmem:[#allocation2 + $0xc] sm:$0xf]
        %1586 = vrot.lane.b32.xlu0 %v1415, 32
        %v1587 = vpop.permute.xlu0 %1586
        %v1590 = vunpack.c.l.b16 %v1582
        %v1591 = vunpack.c.l.b16 %v1583
        %v1592 = vpack.c.b16 %v1591, %v1590
        %1593 = vrot.lane.b32.xlu0 %v1592, 32
        %v1594 = vpop.permute.xlu0 %1593
        %v1596 = vsel %vm1337, %v1587, 0
        %v1599 = vsel %vm1337, %v1594, 0
        %1601 = vmatpush.bf16.xpose.msra.mxu0 0
        %1602 = vmatpush.bf16.xpose.msra.mxu0 0
        %1603 = vmatpush.bf16.xpose.msra.mxu0 0
        %1604 = vmatpush.bf16.xpose.msra.mxu0 0
        %1605 = vmatpush.bf16.xpose.msra.mxu0 0
        %1606 = vmatpush.bf16.xpose.msra.mxu0 0
        %1607 = vmatpush.bf16.xpose.msra.mxu0 0
        %1608 = vmatpush.bf16.xpose.msra.mxu0 %v1599
        %1609 = vmatmul.bf16.gmra.mxu0 %v1596
        %v1610 = vpop.f32.mrf.mxu0
        %v1611 = vadd.f32 0.0, %v1610
        %v1612 = vpop.f32.mrf.mxu0
        %1613 = vdwg.mxu0
        %v1614 = vsel %vm1357, %v1611, -inf
        %1615 = vmax.xlane.f32.xlu0 %v1614
        %v1616 = vpop.xlane.xlu0 %1615
        %v1617 = vsub.f32 %v1611, %v1616
        %v1618 = vmul.f32 %v1617, 1.442695
        %v1619 = vpow.pop %v1618
        %v1620 = vsel %vm1357, %v1619, 0.0
        %1621 = vadd.xlane.f32.xlu0 %v1620
        %v1622 = vpop.xlane.xlu0 %1621
        %v1623 = vrcp.pop %v1622
        %v1624 = vmul.f32 %v1622, %v1623
        %v1625 = vsub.f32 1.0, %v1624
        %v1626 = vmul.f32 %v1623, %v1625
        %v1627 = vadd.f32 %v1623, %v1626
        %vm1628 = vweird.f32 %v1622
        %vm1629 = vweird.f32 %v1623
        %vm1630 = vmor %vm1628, %vm1629
        %v1631 = vsel %vm1630, %v1623, %v1627
        %v1632 = vand.u32 2147483647, %v1622
        %vm1633 = vcmp.eq.f32.partialorder %v1632, 8.507059e+37
        %v1634 = vand.u32 %v1622, 2147483648
        %v1635 = vor.u32 1.1754944e-38, %v1634
        %v1636 = vsel %vm1633, %v1635, %v1631
        %v1637 = vmul.f32 1.0, %v1636
        %v1638 = vmul.f32 %v1619, %v1637
        %v1639 = vpack.c.bf16 %v1638, %v1638
        %s1640 = scalar_lea.vmem %s919, 12 [#allocation23]
        %1641 = vst.msk [vmem:[%s1640] sm:$0xf] %vm1384, %v1639
        %v1644 = vunpack.c.l.b16 %v1584
        %v1645 = vunpack.c.l.b16 %v1585
        %v1646 = vpack.c.b16 %v1645, %v1644
        %1647 = vrot.lane.b32.xlu0 %v1646, 32
        %v1648 = vpop.permute.xlu0 %1647
        %v1651 = vsel %vm1357, %v1639, 0
        %1653 = vmatpush.bf16.msra.mxu0 0
        %1654 = vmatpush.bf16.msra.mxu0 0
        %1655 = vmatpush.bf16.msra.mxu0 0
        %1656 = vmatpush.bf16.msra.mxu0 0
        %1657 = vmatpush.bf16.msra.mxu0 0
        %1658 = vmatpush.bf16.msra.mxu0 0
        %1659 = vmatpush.bf16.msra.mxu0 0
        %1660 = vmatpush.bf16.msra.mxu0 %v1648
        %1661 = vmatmul.bf16.gmra.mxu0 %v1651
        %v1662 = vpop.f32.mrf.mxu0
        %v1663 = vadd.f32 0.0, %v1662
        %v1664 = vpop.f32.mrf.mxu0
        %1665 = vdwg.mxu0
        %v1666 = vpack.c.bf16 %v1663, %v1663
        %v1668 = vunpack.c.l.b16 %v1496
        %v1669 = vpack.c.b16 %v1668, %v1668
        %1670 = vrot.lane.b32.xlu0 %v1669, 32
        %v1671 = vpop.permute.xlu0 %1670
        %v1673 = vunpack.c.l.b16 %v1581
        %v1674 = vpack.c.b16 %v1673, %v1673
        %1675 = vrot.lane.b32.xlu0 %v1674, 64
        %v1676 = vpop.permute.xlu0 %1675
        %v1678 = vunpack.c.l.b16 %v1666
        %v1679 = vpack.c.b16 %v1678, %v1678
        %1680 = vrot.lane.b32.xlu0 %v1679, 96
        %v1681 = vpop.permute.xlu0 %1680
        %v1684 = vsel %vm1337, %v1408, %v1671
        %vm1685 = vcmask 523264
        %v1687 = vsel %vm1685, %v1684, %v1676
        %vm1688 = vcmask 785408
        %v1690 = vsel %vm1688, %v1687, %v1681
        %v1692 = vld [vmem:[#allocation13] sm:$0xf]
        %v1693 = vld [vmem:[#allocation13 + $0x4] sm:$0xf]
        %v1694 = vld [vmem:[#allocation13 + $0x8] sm:$0xf]
        %v1695 = vld [vmem:[#allocation13 + $0xc] sm:$0xf]
        %v1696 = vld [vmem:[#allocation13 + $0x10] sm:$0xf]
        %v1697 = vld [vmem:[#allocation13 + $0x14] sm:$0xf]
        %v1698 = vld [vmem:[#allocation13 + $0x18] sm:$0xf]
        %v1699 = vld [vmem:[#allocation13 + $0x1c] sm:$0xf]
        %v1700 = vld [vmem:[#allocation13 + $0x20] sm:$0xf]
        %v1701 = vld [vmem:[#allocation13 + $0x24] sm:$0xf]
        %v1702 = vld [vmem:[#allocation13 + $0x28] sm:$0xf]
        %v1703 = vld [vmem:[#allocation13 + $0x2c] sm:$0xf]
        %v1704 = vld [vmem:[#allocation13 + $0x30] sm:$0xf]
        %v1705 = vld [vmem:[#allocation13 + $0x34] sm:$0xf]
        %v1706 = vld [vmem:[#allocation13 + $0x38] sm:$0xf]
        %v1707 = vld [vmem:[#allocation13 + $0x3c] sm:$0xf]
        %v1724 = vunpack.c.l.b16 %v1692
        %v1725 = vunpack.c.l.b16 %v1693
        %v1726 = vunpack.c.l.b16 %v1694
        %v1727 = vunpack.c.l.b16 %v1695
        %v1728 = vunpack.c.l.b16 %v1696
        %v1729 = vunpack.c.l.b16 %v1697
        %v1730 = vunpack.c.l.b16 %v1698
        %v1731 = vunpack.c.l.b16 %v1699
        %v1732 = vunpack.c.l.b16 %v1700
        %v1733 = vunpack.c.l.b16 %v1701
        %v1734 = vunpack.c.l.b16 %v1702
        %v1735 = vunpack.c.l.b16 %v1703
        %v1736 = vunpack.c.l.b16 %v1704
        %v1737 = vunpack.c.l.b16 %v1705
        %v1738 = vunpack.c.l.b16 %v1706
        %v1739 = vunpack.c.l.b16 %v1707
        %v1740 = vpack.c.b16 %v1725, %v1724
        %v1741 = vpack.c.b16 %v1727, %v1726
        %v1742 = vpack.c.b16 %v1729, %v1728
        %v1743 = vpack.c.b16 %v1731, %v1730
        %v1744 = vpack.c.b16 %v1733, %v1732
        %v1745 = vpack.c.b16 %v1735, %v1734
        %v1746 = vpack.c.b16 %v1737, %v1736
        %v1747 = vpack.c.b16 %v1739, %v1738
        %1756 = vmatpush.bf16.msra.mxu0 %v1747
        %1757 = vmatpush.bf16.msra.mxu0 %v1746
        %1758 = vmatpush.bf16.msra.mxu0 %v1745
        %1759 = vmatpush.bf16.msra.mxu0 %v1744
        %1760 = vmatpush.bf16.msra.mxu0 %v1743
        %1761 = vmatpush.bf16.msra.mxu0 %v1742
        %1762 = vmatpush.bf16.msra.mxu0 %v1741
        %1763 = vmatpush.bf16.msra.mxu0 %v1740
        %1764 = vmatmul.bf16.gmra.mxu0 %v1690
        %v1765 = vpop.f32.mrf.mxu0
        %v1766 = vadd.f32 %v1211, %v1765
        %v1767 = vpop.f32.mrf.mxu0
        %1768 = vdwg.mxu0
        %1769 = vadd.xlane.f32.xlu0 %v1766
        %v1770 = vpop.xlane.xlu0 %1769
        %v1771 = vmul.f32 %v1770, %v1220
        %v1772 = vsub.f32 %v1766, %v1771
        %v1773 = vmul.f32 %v1772, %v1772
        %1774 = vadd.xlane.f32.xlu0 %v1773
        %v1775 = vpop.xlane.xlu0 %1774
        %v1776 = vmul.f32 %v1775, %v1220
        %v1777 = vadd.f32 %v1776, 1e-06
        %v1778 = vrsqrt.pop %v1777
        %v1779 = vmul.f32 %v1778, %v1777
        %v1780 = vmul.f32 %v1779, %v1778
        %v1781 = vmul.f32 0.5, %v1780
        %v1782 = vsub.f32 1.5, %v1781
        %v1783 = vmul.f32 %v1778, %v1782
        %vm1784 = vweird.f32 %v1777
        %vm1785 = vweird.f32 %v1778
        %vm1786 = vmor %vm1784, %vm1785
        %v1787 = vsel %vm1786, %v1778, %v1783
        %v1788 = vmul.f32 %v1772, %v1787
        %v1789 = vld [vmem:[%s11] sm:$0x1]
        %v1791 = vperm.slane %v1789, 0
        %v1793 = vmul.f32 %v1788, %v1791
        %v1794 = vld [vmem:[%s12] sm:$0x1]
        %v1796 = vperm.slane %v1794, 0
        %v1798 = vadd.f32 %v1793, %v1796
        %v1799 = vpack.c.bf16 %v1798, %v1798
        %v1800 = vld [vmem:[#allocation15] sm:$0xf]
        %v1801 = vld [vmem:[#allocation15 + $0x4] sm:$0xf]
        %v1802 = vld [vmem:[#allocation15 + $0x8] sm:$0xf]
        %v1803 = vld [vmem:[#allocation15 + $0xc] sm:$0xf]
        %v1804 = vld [vmem:[#allocation15 + $0x10] sm:$0xf]
        %v1805 = vld [vmem:[#allocation15 + $0x14] sm:$0xf]
        %v1806 = vld [vmem:[#allocation15 + $0x18] sm:$0xf]
        %v1807 = vld [vmem:[#allocation15 + $0x1c] sm:$0xf]
        %v1808 = vld [vmem:[#allocation15 + $0x20] sm:$0xf]
        %v1809 = vld [vmem:[#allocation15 + $0x24] sm:$0xf]
        %v1810 = vld [vmem:[#allocation15 + $0x28] sm:$0xf]
        %v1811 = vld [vmem:[#allocation15 + $0x2c] sm:$0xf]
        %v1812 = vld [vmem:[#allocation15 + $0x30] sm:$0xf]
        %v1813 = vld [vmem:[#allocation15 + $0x34] sm:$0xf]
        %v1814 = vld [vmem:[#allocation15 + $0x38] sm:$0xf]
        %v1815 = vld [vmem:[#allocation15 + $0x3c] sm:$0xf]
        %v1832 = vunpack.c.l.b16 %v1800
        %v1833 = vunpack.c.l.b16 %v1801
        %v1834 = vunpack.c.l.b16 %v1802
        %v1835 = vunpack.c.l.b16 %v1803
        %v1836 = vunpack.c.l.b16 %v1804
        %v1837 = vunpack.c.l.b16 %v1805
        %v1838 = vunpack.c.l.b16 %v1806
        %v1839 = vunpack.c.l.b16 %v1807
        %v1840 = vunpack.c.l.b16 %v1808
        %v1841 = vunpack.c.l.b16 %v1809
        %v1842 = vunpack.c.l.b16 %v1810
        %v1843 = vunpack.c.l.b16 %v1811
        %v1844 = vunpack.c.l.b16 %v1812
        %v1845 = vunpack.c.l.b16 %v1813
        %v1846 = vunpack.c.l.b16 %v1814
        %v1847 = vunpack.c.l.b16 %v1815
        %v1848 = vpack.c.b16 %v1833, %v1832
        %v1849 = vpack.c.b16 %v1835, %v1834
        %v1850 = vpack.c.b16 %v1837, %v1836
        %v1851 = vpack.c.b16 %v1839, %v1838
        %v1852 = vpack.c.b16 %v1841, %v1840
        %v1853 = vpack.c.b16 %v1843, %v1842
        %v1854 = vpack.c.b16 %v1845, %v1844
        %v1855 = vpack.c.b16 %v1847, %v1846
        %1864 = vmatpush.bf16.msra.mxu0 %v1855
        %1865 = vmatpush.bf16.msra.mxu0 %v1854
        %1866 = vmatpush.bf16.msra.mxu0 %v1853
        %1867 = vmatpush.bf16.msra.mxu0 %v1852
        %1868 = vmatpush.bf16.msra.mxu0 %v1851
        %1869 = vmatpush.bf16.msra.mxu0 %v1850
        %1870 = vmatpush.bf16.msra.mxu0 %v1849
        %1871 = vmatpush.bf16.msra.mxu0 %v1848
        %1872 = vmatmul.bf16.gmra.mxu0 %v1799
        %v1873 = vpop.f32.mrf.mxu0
        %v1874 = vadd.f32 0.0, %v1873
        %v1875 = vpop.f32.mrf.mxu0
        %1876 = vdwg.mxu0
        %v1877 = vpack.c.bf16 %v1874, %v1874
        %v1878 = vld [vmem:[#allocation3] sm:$0xf]
        %v1879 = vld [vmem:[#allocation3 + $0x8] sm:$0xf]
        %v1880 = vld [vmem:[#allocation3 + $0x10] sm:$0xf]
        %v1881 = vld [vmem:[#allocation3 + $0x18] sm:$0xf]
        %v1882 = vld [vmem:[#allocation3 + $0x4] sm:$0xf]
        %v1883 = vld [vmem:[#allocation3 + $0xc] sm:$0xf]
        %v1884 = vld [vmem:[#allocation3 + $0x14] sm:$0xf]
        %v1885 = vld [vmem:[#allocation3 + $0x1c] sm:$0xf]
        %v1890 = vunpack.c.l.b16 %v1878
        %v1891 = vunpack.c.l.b16 %v1879
        %v1892 = vunpack.c.l.b16 %v1880
        %v1893 = vunpack.c.l.b16 %v1881
        %v1894 = vpack.c.b16 %v1891, %v1890
        %v1895 = vpack.c.b16 %v1893, %v1892
        %v1897 = vsel %vm1337, %v1877, 0
        %v1900 = vsel %vm1337, %v1894, 0
        %v1903 = vsel %vm1337, %v1895, 0
        %1905 = vmatpush.bf16.xpose.msra.mxu0 0
        %1906 = vmatpush.bf16.xpose.msra.mxu0 0
        %1907 = vmatpush.bf16.xpose.msra.mxu0 0
        %1908 = vmatpush.bf16.xpose.msra.mxu0 0
        %1909 = vmatpush.bf16.xpose.msra.mxu0 0
        %1910 = vmatpush.bf16.xpose.msra.mxu0 0
        %1911 = vmatpush.bf16.xpose.msra.mxu0 %v1903
        %1912 = vmatpush.bf16.xpose.msra.mxu0 %v1900
        %1913 = vmatmul.bf16.gmra.mxu0 %v1897
        %v1914 = vpop.f32.mrf.mxu0
        %v1915 = vadd.f32 0.0, %v1914
        %v1916 = vpop.f32.mrf.mxu0
        %1917 = vdwg.mxu0
        %v1918 = vsel %vm1337, %v1915, -inf
        %1919 = vmax.xlane.f32.xlu0 %v1918
        %v1920 = vpop.xlane.xlu0 %1919
        %v1921 = vsub.f32 %v1915, %v1920
        %v1922 = vmul.f32 %v1921, 1.442695
        %v1923 = vpow.pop %v1922
        %v1924 = vsel %vm1337, %v1923, 0.0
        %1925 = vadd.xlane.f32.xlu0 %v1924
        %v1926 = vpop.xlane.xlu0 %1925
        %v1927 = vrcp.pop %v1926
        %v1928 = vmul.f32 %v1926, %v1927
        %v1929 = vsub.f32 1.0, %v1928
        %v1930 = vmul.f32 %v1927, %v1929
        %v1931 = vadd.f32 %v1927, %v1930
        %vm1932 = vweird.f32 %v1926
        %vm1933 = vweird.f32 %v1927
        %vm1934 = vmor %vm1932, %vm1933
        %v1935 = vsel %vm1934, %v1927, %v1931
        %v1936 = vand.u32 2147483647, %v1926
        %vm1937 = vcmp.eq.f32.partialorder %v1936, 8.507059e+37
        %v1938 = vand.u32 %v1926, 2147483648
        %v1939 = vor.u32 1.1754944e-38, %v1938
        %v1940 = vsel %vm1937, %v1939, %v1935
        %v1941 = vmul.f32 1.0, %v1940
        %v1942 = vmul.f32 %v1923, %v1941
        %v1943 = vpack.c.bf16 %v1942, %v1942
        %vm1944 = vcmask 257024
        %1945 = vst.msk [vmem:[%s926] sm:$0xf] %vm1944, %v1943
        %v1950 = vunpack.c.l.b16 %v1882
        %v1951 = vunpack.c.l.b16 %v1883
        %v1952 = vunpack.c.l.b16 %v1884
        %v1953 = vunpack.c.l.b16 %v1885
        %v1954 = vpack.c.b16 %v1951, %v1950
        %v1955 = vpack.c.b16 %v1953, %v1952
        %v1959 = vsel %vm1337, %v1943, 0
        %1961 = vmatpush.bf16.msra.mxu0 0
        %1962 = vmatpush.bf16.msra.mxu0 0
        %1963 = vmatpush.bf16.msra.mxu0 0
        %1964 = vmatpush.bf16.msra.mxu0 0
        %1965 = vmatpush.bf16.msra.mxu0 0
        %1966 = vmatpush.bf16.msra.mxu0 0
        %1967 = vmatpush.bf16.msra.mxu0 %v1955
        %1968 = vmatpush.bf16.msra.mxu0 %v1954
        %1969 = vmatmul.bf16.gmra.mxu0 %v1959
        %v1970 = vpop.f32.mrf.mxu0
        %v1971 = vadd.f32 0.0, %v1970
        %v1972 = vpop.f32.mrf.mxu0
        %1973 = vdwg.mxu0
        %v1974 = vpack.c.bf16 %v1971, %v1971
        %v1975 = vld [vmem:[#allocation3] sm:$0xf]
        %v1976 = vld [vmem:[#allocation3 + $0x8] sm:$0xf]
        %v1977 = vld [vmem:[#allocation3 + $0x10] sm:$0xf]
        %v1978 = vld [vmem:[#allocation3 + $0x18] sm:$0xf]
        %v1979 = vld [vmem:[#allocation3 + $0x4] sm:$0xf]
        %v1980 = vld [vmem:[#allocation3 + $0xc] sm:$0xf]
        %v1981 = vld [vmem:[#allocation3 + $0x14] sm:$0xf]
        %v1982 = vld [vmem:[#allocation3 + $0x1c] sm:$0xf]
        %v1984 = vunpack.c.l.b16 %v1877
        %v1985 = vpack.c.b16 %v1984, %v1984
        %1986 = vrot.lane.b32.xlu0 %v1985, 96
        %v1987 = vpop.permute.xlu0 %1986
        %v1992 = vunpack.c.l.b16 %v1975
        %v1993 = vunpack.c.l.b16 %v1976
        %v1994 = vunpack.c.l.b16 %v1977
        %v1995 = vunpack.c.l.b16 %v1978
        %v1996 = vpack.c.b16 %v1993, %v1992
        %v1997 = vpack.c.b16 %v1995, %v1994
        %1998 = vrot.lane.b32.xlu0 %v1996, 96
        %v1999 = vpop.permute.xlu0 %1998
        %2000 = vrot.lane.b32.xlu0 %v1997, 96
        %v2001 = vpop.permute.xlu0 %2000
        %v2003 = vsel %vm1337, %v1987, 0
        %v2006 = vsel %vm1337, %v1999, 0
        %v2009 = vsel %vm1337, %v2001, 0
        %2011 = vmatpush.bf16.xpose.msra.mxu0 0
        %2012 = vmatpush.bf16.xpose.msra.mxu0 0
        %2013 = vmatpush.bf16.xpose.msra.mxu0 0
        %2014 = vmatpush.bf16.xpose.msra.mxu0 0
        %2015 = vmatpush.bf16.xpose.msra.mxu0 0
        %2016 = vmatpush.bf16.xpose.msra.mxu0 0
        %2017 = vmatpush.bf16.xpose.msra.mxu0 %v2009
        %2018 = vmatpush.bf16.xpose.msra.mxu0 %v2006
        %2019 = vmatmul.bf16.gmra.mxu0 %v2003
        %v2020 = vpop.f32.mrf.mxu0
        %v2021 = vadd.f32 0.0, %v2020
        %v2022 = vpop.f32.mrf.mxu0
        %2023 = vdwg.mxu0
        %v2024 = vsel %vm1337, %v2021, -inf
        %2025 = vmax.xlane.f32.xlu0 %v2024
        %v2026 = vpop.xlane.xlu0 %2025
        %v2027 = vsub.f32 %v2021, %v2026
        %v2028 = vmul.f32 %v2027, 1.442695
        %v2029 = vpow.pop %v2028
        %v2030 = vsel %vm1337, %v2029, 0.0
        %2031 = vadd.xlane.f32.xlu0 %v2030
        %v2032 = vpop.xlane.xlu0 %2031
        %v2033 = vrcp.pop %v2032
        %v2034 = vmul.f32 %v2032, %v2033
        %v2035 = vsub.f32 1.0, %v2034
        %v2036 = vmul.f32 %v2033, %v2035
        %v2037 = vadd.f32 %v2033, %v2036
        %vm2038 = vweird.f32 %v2032
        %vm2039 = vweird.f32 %v2033
        %vm2040 = vmor %vm2038, %vm2039
        %v2041 = vsel %vm2040, %v2033, %v2037
        %v2042 = vand.u32 2147483647, %v2032
        %vm2043 = vcmp.eq.f32.partialorder %v2042, 8.507059e+37
        %v2044 = vand.u32 %v2032, 2147483648
        %v2045 = vor.u32 1.1754944e-38, %v2044
        %v2046 = vsel %vm2043, %v2045, %v2041
        %v2047 = vmul.f32 1.0, %v2046
        %v2048 = vmul.f32 %v2029, %v2047
        %v2049 = vpack.c.bf16 %v2048, %v2048
        %s2050 = scalar_lea.vmem %s926, 4 [#allocation25]
        %2051 = vst.msk [vmem:[%s2050] sm:$0xf] %vm1944, %v2049
        %v2056 = vunpack.c.l.b16 %v1979
        %v2057 = vunpack.c.l.b16 %v1980
        %v2058 = vunpack.c.l.b16 %v1981
        %v2059 = vunpack.c.l.b16 %v1982
        %v2060 = vpack.c.b16 %v2057, %v2056
        %v2061 = vpack.c.b16 %v2059, %v2058
        %2062 = vrot.lane.b32.xlu0 %v2060, 96
        %v2063 = vpop.permute.xlu0 %2062
        %2064 = vrot.lane.b32.xlu0 %v2061, 96
        %v2065 = vpop.permute.xlu0 %2064
        %v2069 = vsel %vm1337, %v2049, 0
        %2071 = vmatpush.bf16.msra.mxu0 0
        %2072 = vmatpush.bf16.msra.mxu0 0
        %2073 = vmatpush.bf16.msra.mxu0 0
        %2074 = vmatpush.bf16.msra.mxu0 0
        %2075 = vmatpush.bf16.msra.mxu0 0
        %2076 = vmatpush.bf16.msra.mxu0 0
        %2077 = vmatpush.bf16.msra.mxu0 %v2065
        %2078 = vmatpush.bf16.msra.mxu0 %v2063
        %2079 = vmatmul.bf16.gmra.mxu0 %v2069
        %v2080 = vpop.f32.mrf.mxu0
        %v2081 = vadd.f32 0.0, %v2080
        %v2082 = vpop.f32.mrf.mxu0
        %2083 = vdwg.mxu0
        %v2084 = vpack.c.bf16 %v2081, %v2081
        %v2085 = vld [vmem:[#allocation3] sm:$0xf]
        %v2086 = vld [vmem:[#allocation3 + $0x8] sm:$0xf]
        %v2087 = vld [vmem:[#allocation3 + $0x10] sm:$0xf]
        %v2088 = vld [vmem:[#allocation3 + $0x18] sm:$0xf]
        %v2089 = vld [vmem:[#allocation3 + $0x4] sm:$0xf]
        %v2090 = vld [vmem:[#allocation3 + $0xc] sm:$0xf]
        %v2091 = vld [vmem:[#allocation3 + $0x14] sm:$0xf]
        %v2092 = vld [vmem:[#allocation3 + $0x1c] sm:$0xf]
        %2093 = vrot.lane.b32.xlu0 %v1985, 64
        %v2094 = vpop.permute.xlu0 %2093
        %v2099 = vunpack.c.l.b16 %v2085
        %v2100 = vunpack.c.l.b16 %v2086
        %v2101 = vunpack.c.l.b16 %v2087
        %v2102 = vunpack.c.l.b16 %v2088
        %v2103 = vpack.c.b16 %v2100, %v2099
        %v2104 = vpack.c.b16 %v2102, %v2101
        %2105 = vrot.lane.b32.xlu0 %v2103, 64
        %v2106 = vpop.permute.xlu0 %2105
        %2107 = vrot.lane.b32.xlu0 %v2104, 64
        %v2108 = vpop.permute.xlu0 %2107
        %v2110 = vsel %vm1337, %v2094, 0
        %v2113 = vsel %vm1337, %v2106, 0
        %v2116 = vsel %vm1337, %v2108, 0
        %2118 = vmatpush.bf16.xpose.msra.mxu0 0
        %2119 = vmatpush.bf16.xpose.msra.mxu0 0
        %2120 = vmatpush.bf16.xpose.msra.mxu0 0
        %2121 = vmatpush.bf16.xpose.msra.mxu0 0
        %2122 = vmatpush.bf16.xpose.msra.mxu0 0
        %2123 = vmatpush.bf16.xpose.msra.mxu0 0
        %2124 = vmatpush.bf16.xpose.msra.mxu0 %v2116
        %2125 = vmatpush.bf16.xpose.msra.mxu0 %v2113
        %2126 = vmatmul.bf16.gmra.mxu0 %v2110
        %v2127 = vpop.f32.mrf.mxu0
        %v2128 = vadd.f32 0.0, %v2127
        %v2129 = vpop.f32.mrf.mxu0
        %2130 = vdwg.mxu0
        %v2131 = vsel %vm1337, %v2128, -inf
        %2132 = vmax.xlane.f32.xlu0 %v2131
        %v2133 = vpop.xlane.xlu0 %2132
        %v2134 = vsub.f32 %v2128, %v2133
        %v2135 = vmul.f32 %v2134, 1.442695
        %v2136 = vpow.pop %v2135
        %v2137 = vsel %vm1337, %v2136, 0.0
        %2138 = vadd.xlane.f32.xlu0 %v2137
        %v2139 = vpop.xlane.xlu0 %2138
        %v2140 = vrcp.pop %v2139
        %v2141 = vmul.f32 %v2139, %v2140
        %v2142 = vsub.f32 1.0, %v2141
        %v2143 = vmul.f32 %v2140, %v2142
        %v2144 = vadd.f32 %v2140, %v2143
        %vm2145 = vweird.f32 %v2139
        %vm2146 = vweird.f32 %v2140
        %vm2147 = vmor %vm2145, %vm2146
        %v2148 = vsel %vm2147, %v2140, %v2144
        %v2149 = vand.u32 2147483647, %v2139
        %vm2150 = vcmp.eq.f32.partialorder %v2149, 8.507059e+37
        %v2151 = vand.u32 %v2139, 2147483648
        %v2152 = vor.u32 1.1754944e-38, %v2151
        %v2153 = vsel %vm2150, %v2152, %v2148
        %v2154 = vmul.f32 1.0, %v2153
        %v2155 = vmul.f32 %v2136, %v2154
        %v2156 = vpack.c.bf16 %v2155, %v2155
        %s2157 = scalar_lea.vmem %s926, 8 [#allocation25]
        %2158 = vst.msk [vmem:[%s2157] sm:$0xf] %vm1944, %v2156
        %v2163 = vunpack.c.l.b16 %v2089
        %v2164 = vunpack.c.l.b16 %v2090
        %v2165 = vunpack.c.l.b16 %v2091
        %v2166 = vunpack.c.l.b16 %v2092
        %v2167 = vpack.c.b16 %v2164, %v2163
        %v2168 = vpack.c.b16 %v2166, %v2165
        %2169 = vrot.lane.b32.xlu0 %v2167, 64
        %v2170 = vpop.permute.xlu0 %2169
        %2171 = vrot.lane.b32.xlu0 %v2168, 64
        %v2172 = vpop.permute.xlu0 %2171
        %v2176 = vsel %vm1337, %v2156, 0
        %2178 = vmatpush.bf16.msra.mxu0 0
        %2179 = vmatpush.bf16.msra.mxu0 0
        %2180 = vmatpush.bf16.msra.mxu0 0
        %2181 = vmatpush.bf16.msra.mxu0 0
        %2182 = vmatpush.bf16.msra.mxu0 0
        %2183 = vmatpush.bf16.msra.mxu0 0
        %2184 = vmatpush.bf16.msra.mxu0 %v2172
        %2185 = vmatpush.bf16.msra.mxu0 %v2170
        %2186 = vmatmul.bf16.gmra.mxu0 %v2176
        %v2187 = vpop.f32.mrf.mxu0
        %v2188 = vadd.f32 0.0, %v2187
        %v2189 = vpop.f32.mrf.mxu0
        %2190 = vdwg.mxu0
        %v2191 = vpack.c.bf16 %v2188, %v2188
        %v2192 = vld [vmem:[#allocation3] sm:$0xf]
        %v2193 = vld [vmem:[#allocation3 + $0x8] sm:$0xf]
        %v2194 = vld [vmem:[#allocation3 + $0x10] sm:$0xf]
        %v2195 = vld [vmem:[#allocation3 + $0x18] sm:$0xf]
        %v2196 = vld [vmem:[#allocation3 + $0x4] sm:$0xf]
        %v2197 = vld [vmem:[#allocation3 + $0xc] sm:$0xf]
        %v2198 = vld [vmem:[#allocation3 + $0x14] sm:$0xf]
        %v2199 = vld [vmem:[#allocation3 + $0x1c] sm:$0xf]
        %2200 = vrot.lane.b32.xlu0 %v1985, 32
        %v2201 = vpop.permute.xlu0 %2200
        %v2206 = vunpack.c.l.b16 %v2192
        %v2207 = vunpack.c.l.b16 %v2193
        %v2208 = vunpack.c.l.b16 %v2194
        %v2209 = vunpack.c.l.b16 %v2195
        %v2210 = vpack.c.b16 %v2207, %v2206
        %v2211 = vpack.c.b16 %v2209, %v2208
        %2212 = vrot.lane.b32.xlu0 %v2210, 32
        %v2213 = vpop.permute.xlu0 %2212
        %2214 = vrot.lane.b32.xlu0 %v2211, 32
        %v2215 = vpop.permute.xlu0 %2214
        %v2217 = vsel %vm1337, %v2201, 0
        %v2220 = vsel %vm1337, %v2213, 0
        %v2223 = vsel %vm1337, %v2215, 0
        %2225 = vmatpush.bf16.xpose.msra.mxu0 0
        %2226 = vmatpush.bf16.xpose.msra.mxu0 0
        %2227 = vmatpush.bf16.xpose.msra.mxu0 0
        %2228 = vmatpush.bf16.xpose.msra.mxu0 0
        %2229 = vmatpush.bf16.xpose.msra.mxu0 0
        %2230 = vmatpush.bf16.xpose.msra.mxu0 0
        %2231 = vmatpush.bf16.xpose.msra.mxu0 %v2223
        %2232 = vmatpush.bf16.xpose.msra.mxu0 %v2220
        %2233 = vmatmul.bf16.gmra.mxu0 %v2217
        %v2234 = vpop.f32.mrf.mxu0
        %v2235 = vadd.f32 0.0, %v2234
        %v2236 = vpop.f32.mrf.mxu0
        %2237 = vdwg.mxu0
        %v2238 = vsel %vm1337, %v2235, -inf
        %2239 = vmax.xlane.f32.xlu0 %v2238
        %v2240 = vpop.xlane.xlu0 %2239
        %v2241 = vsub.f32 %v2235, %v2240
        %v2242 = vmul.f32 %v2241, 1.442695
        %v2243 = vpow.pop %v2242
        %v2244 = vsel %vm1337, %v2243, 0.0
        %2245 = vadd.xlane.f32.xlu0 %v2244
        %v2246 = vpop.xlane.xlu0 %2245
        %v2247 = vrcp.pop %v2246
        %v2248 = vmul.f32 %v2246, %v2247
        %v2249 = vsub.f32 1.0, %v2248
        %v2250 = vmul.f32 %v2247, %v2249
        %v2251 = vadd.f32 %v2247, %v2250
        %vm2252 = vweird.f32 %v2246
        %vm2253 = vweird.f32 %v2247
        %vm2254 = vmor %vm2252, %vm2253
        %v2255 = vsel %vm2254, %v2247, %v2251
        %v2256 = vand.u32 2147483647, %v2246
        %vm2257 = vcmp.eq.f32.partialorder %v2256, 8.507059e+37
        %v2258 = vand.u32 %v2246, 2147483648
        %v2259 = vor.u32 1.1754944e-38, %v2258
        %v2260 = vsel %vm2257, %v2259, %v2255
        %v2261 = vmul.f32 1.0, %v2260
        %v2262 = vmul.f32 %v2243, %v2261
        %v2263 = vpack.c.bf16 %v2262, %v2262
        %s2264 = scalar_lea.vmem %s926, 12 [#allocation25]
        %2265 = vst.msk [vmem:[%s2264] sm:$0xf] %vm1944, %v2263
        %v2270 = vunpack.c.l.b16 %v2196
        %v2271 = vunpack.c.l.b16 %v2197
        %v2272 = vunpack.c.l.b16 %v2198
        %v2273 = vunpack.c.l.b16 %v2199
        %v2274 = vpack.c.b16 %v2271, %v2270
        %v2275 = vpack.c.b16 %v2273, %v2272
        %2276 = vrot.lane.b32.xlu0 %v2274, 32
        %v2277 = vpop.permute.xlu0 %2276
        %2278 = vrot.lane.b32.xlu0 %v2275, 32
        %v2279 = vpop.permute.xlu0 %2278
        %v2283 = vsel %vm1337, %v2263, 0
        %2285 = vmatpush.bf16.msra.mxu0 0
        %2286 = vmatpush.bf16.msra.mxu0 0
        %2287 = vmatpush.bf16.msra.mxu0 0
        %2288 = vmatpush.bf16.msra.mxu0 0
        %2289 = vmatpush.bf16.msra.mxu0 0
        %2290 = vmatpush.bf16.msra.mxu0 0
        %2291 = vmatpush.bf16.msra.mxu0 %v2279
        %2292 = vmatpush.bf16.msra.mxu0 %v2277
        %2293 = vmatmul.bf16.gmra.mxu0 %v2283
        %v2294 = vpop.f32.mrf.mxu0
        %v2295 = vadd.f32 0.0, %v2294
        %v2296 = vpop.f32.mrf.mxu0
        %2297 = vdwg.mxu0
        %v2298 = vpack.c.bf16 %v2295, %v2295
        %v2300 = vunpack.c.l.b16 %v2084
        %v2301 = vpack.c.b16 %v2300, %v2300
        %2302 = vrot.lane.b32.xlu0 %v2301, 32
        %v2303 = vpop.permute.xlu0 %2302
        %v2305 = vunpack.c.l.b16 %v2191
        %v2306 = vpack.c.b16 %v2305, %v2305
        %2307 = vrot.lane.b32.xlu0 %v2306, 64
        %v2308 = vpop.permute.xlu0 %2307
        %v2310 = vunpack.c.l.b16 %v2298
        %v2311 = vpack.c.b16 %v2310, %v2310
        %2312 = vrot.lane.b32.xlu0 %v2311, 96
        %v2313 = vpop.permute.xlu0 %2312
        %v2316 = vsel %vm1337, %v1974, %v2303
        %v2318 = vsel %vm1685, %v2316, %v2308
        %v2320 = vsel %vm1688, %v2318, %v2313
        %v2322 = vld [vmem:[#allocation18] sm:$0xf]
        %v2323 = vld [vmem:[#allocation18 + $0x4] sm:$0xf]
        %v2324 = vld [vmem:[#allocation18 + $0x8] sm:$0xf]
        %v2325 = vld [vmem:[#allocation18 + $0xc] sm:$0xf]
        %v2326 = vld [vmem:[#allocation18 + $0x10] sm:$0xf]
        %v2327 = vld [vmem:[#allocation18 + $0x14] sm:$0xf]
        %v2328 = vld [vmem:[#allocation18 + $0x18] sm:$0xf]
        %v2329 = vld [vmem:[#allocation18 + $0x1c] sm:$0xf]
        %v2330 = vld [vmem:[#allocation18 + $0x20] sm:$0xf]
        %v2331 = vld [vmem:[#allocation18 + $0x24] sm:$0xf]
        %v2332 = vld [vmem:[#allocation18 + $0x28] sm:$0xf]
        %v2333 = vld [vmem:[#allocation18 + $0x2c] sm:$0xf]
        %v2334 = vld [vmem:[#allocation18 + $0x30] sm:$0xf]
        %v2335 = vld [vmem:[#allocation18 + $0x34] sm:$0xf]
        %v2336 = vld [vmem:[#allocation18 + $0x38] sm:$0xf]
        %v2337 = vld [vmem:[#allocation18 + $0x3c] sm:$0xf]
        %v2354 = vunpack.c.l.b16 %v2322
        %v2355 = vunpack.c.l.b16 %v2323
        %v2356 = vunpack.c.l.b16 %v2324
        %v2357 = vunpack.c.l.b16 %v2325
        %v2358 = vunpack.c.l.b16 %v2326
        %v2359 = vunpack.c.l.b16 %v2327
        %v2360 = vunpack.c.l.b16 %v2328
        %v2361 = vunpack.c.l.b16 %v2329
        %v2362 = vunpack.c.l.b16 %v2330
        %v2363 = vunpack.c.l.b16 %v2331
        %v2364 = vunpack.c.l.b16 %v2332
        %v2365 = vunpack.c.l.b16 %v2333
        %v2366 = vunpack.c.l.b16 %v2334
        %v2367 = vunpack.c.l.b16 %v2335
        %v2368 = vunpack.c.l.b16 %v2336
        %v2369 = vunpack.c.l.b16 %v2337
        %v2370 = vpack.c.b16 %v2355, %v2354
        %v2371 = vpack.c.b16 %v2357, %v2356
        %v2372 = vpack.c.b16 %v2359, %v2358
        %v2373 = vpack.c.b16 %v2361, %v2360
        %v2374 = vpack.c.b16 %v2363, %v2362
        %v2375 = vpack.c.b16 %v2365, %v2364
        %v2376 = vpack.c.b16 %v2367, %v2366
        %v2377 = vpack.c.b16 %v2369, %v2368
        %2386 = vmatpush.bf16.msra.mxu0 %v2377
        %2387 = vmatpush.bf16.msra.mxu0 %v2376
        %2388 = vmatpush.bf16.msra.mxu0 %v2375
        %2389 = vmatpush.bf16.msra.mxu0 %v2374
        %2390 = vmatpush.bf16.msra.mxu0 %v2373
        %2391 = vmatpush.bf16.msra.mxu0 %v2372
        %2392 = vmatpush.bf16.msra.mxu0 %v2371
        %2393 = vmatpush.bf16.msra.mxu0 %v2370
        %2394 = vmatmul.bf16.gmra.mxu0 %v2320
        %v2395 = vpop.f32.mrf.mxu0
        %v2396 = vadd.f32 %v1766, %v2395
        %v2397 = vpop.f32.mrf.mxu0
        %2398 = vdwg.mxu0
        %2399 = vadd.xlane.f32.xlu0 %v2396
        %v2400 = vpop.xlane.xlu0 %2399
        %v2401 = vmul.f32 %v2400, %v1220
        %v2402 = vsub.f32 %v2396, %v2401
        %v2403 = vmul.f32 %v2402, %v2402
        %2404 = vadd.xlane.f32.xlu0 %v2403
        %v2405 = vpop.xlane.xlu0 %2404
        %v2406 = vmul.f32 %v2405, %v1220
        %v2407 = vadd.f32 %v2406, 1e-06
        %v2408 = vrsqrt.pop %v2407
        %v2409 = vmul.f32 %v2408, %v2407
        %v2410 = vmul.f32 %v2409, %v2408
        %v2411 = vmul.f32 0.5, %v2410
        %v2412 = vsub.f32 1.5, %v2411
        %v2413 = vmul.f32 %v2408, %v2412
        %vm2414 = vweird.f32 %v2407
        %vm2415 = vweird.f32 %v2408
        %vm2416 = vmor %vm2414, %vm2415
        %v2417 = vsel %vm2416, %v2408, %v2413
        %v2418 = vmul.f32 %v2402, %v2417
        %v2419 = vld [vmem:[%s17] sm:$0x1]
        %v2421 = vperm.slane %v2419, 0
        %v2423 = vmul.f32 %v2418, %v2421
        %v2424 = vld [vmem:[%s18] sm:$0x1]
        %v2426 = vperm.slane %v2424, 0
        %v2428 = vadd.f32 %v2423, %v2426
        %v2429 = vpack.c.bf16 %v2428, %v2428
        %v2430 = vld [vmem:[#allocation19] sm:$0xff]
        %v2431 = vld [vmem:[#allocation19 + $0x8] sm:$0xff]
        %v2432 = vld [vmem:[#allocation19 + $0x10] sm:$0xff]
        %v2433 = vld [vmem:[#allocation19 + $0x18] sm:$0xff]
        %v2434 = vld [vmem:[#allocation19 + $0x20] sm:$0xff]
        %v2435 = vld [vmem:[#allocation19 + $0x28] sm:$0xff]
        %v2436 = vld [vmem:[#allocation19 + $0x30] sm:$0xff]
        %v2437 = vld [vmem:[#allocation19 + $0x38] sm:$0xff]
        %v2438 = vld [vmem:[#allocation19 + $0x40] sm:$0xff]
        %v2439 = vld [vmem:[#allocation19 + $0x48] sm:$0xff]
        %v2440 = vld [vmem:[#allocation19 + $0x50] sm:$0xff]
        %v2441 = vld [vmem:[#allocation19 + $0x58] sm:$0xff]
        %v2442 = vld [vmem:[#allocation19 + $0x60] sm:$0xff]
        %v2443 = vld [vmem:[#allocation19 + $0x68] sm:$0xff]
        %v2444 = vld [vmem:[#allocation19 + $0x70] sm:$0xff]
        %v2445 = vld [vmem:[#allocation19 + $0x78] sm:$0xff]
        %v2446 = vld [vmem:[%s14] sm:$0x3]
        %v2448 = vperm.slane %v2446, 0
        %v2449 = vperm.slane %v2446, 1
        %v2468 = vunpack.c.l.b16 %v2430
        %v2469 = vunpack.c.h.b16 %v2430
        %v2470 = vunpack.c.l.b16 %v2431
        %v2471 = vunpack.c.h.b16 %v2431
        %v2472 = vunpack.c.l.b16 %v2432
        %v2473 = vunpack.c.h.b16 %v2432
        %v2474 = vunpack.c.l.b16 %v2433
        %v2475 = vunpack.c.h.b16 %v2433
        %v2476 = vunpack.c.l.b16 %v2434
        %v2477 = vunpack.c.h.b16 %v2434
        %v2478 = vunpack.c.l.b16 %v2435
        %v2479 = vunpack.c.h.b16 %v2435
        %v2480 = vunpack.c.l.b16 %v2436
        %v2481 = vunpack.c.h.b16 %v2436
        %v2482 = vunpack.c.l.b16 %v2437
        %v2483 = vunpack.c.h.b16 %v2437
        %v2484 = vunpack.c.l.b16 %v2438
        %v2485 = vunpack.c.h.b16 %v2438
        %v2486 = vunpack.c.l.b16 %v2439
        %v2487 = vunpack.c.h.b16 %v2439
        %v2488 = vunpack.c.l.b16 %v2440
        %v2489 = vunpack.c.h.b16 %v2440
        %v2490 = vunpack.c.l.b16 %v2441
        %v2491 = vunpack.c.h.b16 %v2441
        %v2492 = vunpack.c.l.b16 %v2442
        %v2493 = vunpack.c.h.b16 %v2442
        %v2494 = vunpack.c.l.b16 %v2443
        %v2495 = vunpack.c.h.b16 %v2443
        %v2496 = vunpack.c.l.b16 %v2444
        %v2497 = vunpack.c.h.b16 %v2444
        %v2498 = vunpack.c.l.b16 %v2445
        %v2499 = vunpack.c.h.b16 %v2445
        %v2500 = vpack.c.b16 %v2470, %v2468
        %v2501 = vpack.c.b16 %v2471, %v2469
        %v2502 = vpack.c.b16 %v2474, %v2472
        %v2503 = vpack.c.b16 %v2475, %v2473
        %v2504 = vpack.c.b16 %v2478, %v2476
        %v2505 = vpack.c.b16 %v2479, %v2477
        %v2506 = vpack.c.b16 %v2482, %v2480
        %v2507 = vpack.c.b16 %v2483, %v2481
        %v2508 = vpack.c.b16 %v2486, %v2484
        %v2509 = vpack.c.b16 %v2487, %v2485
        %v2510 = vpack.c.b16 %v2490, %v2488
        %v2511 = vpack.c.b16 %v2491, %v2489
        %v2512 = vpack.c.b16 %v2494, %v2492
        %v2513 = vpack.c.b16 %v2495, %v2493
        %v2514 = vpack.c.b16 %v2498, %v2496
        %v2515 = vpack.c.b16 %v2499, %v2497
        %2532 = vmatpush.bf16.msra.mxu0 %v2514
        %2533 = vmatpush.bf16.msra.mxu0 %v2512
        %2534 = vmatpush.bf16.msra.mxu0 %v2510
        %2535 = vmatpush.bf16.msra.mxu0 %v2508
        %2536 = vmatpush.bf16.msra.mxu0 %v2506
        %2537 = vmatpush.bf16.msra.mxu0 %v2504
        %2538 = vmatpush.bf16.msra.mxu0 %v2502
        %2539 = vmatpush.bf16.msra.mxu0 %v2500
        %2540 = vmatmul.bf16.gmra.mxu0 %v2429
        %v2541 = vpop.f32.mrf.mxu0
        %v2542 = vadd.f32 %v2448, %v2541
        %v2543 = vpop.f32.mrf.mxu0
        %2544 = vdwg.mxu0
        %2545 = vmatpush.bf16.msra.mxu0 %v2515
        %2546 = vmatpush.bf16.msra.mxu0 %v2513
        %2547 = vmatpush.bf16.msra.mxu0 %v2511
        %2548 = vmatpush.bf16.msra.mxu0 %v2509
        %2549 = vmatpush.bf16.msra.mxu0 %v2507
        %2550 = vmatpush.bf16.msra.mxu0 %v2505
        %2551 = vmatpush.bf16.msra.mxu0 %v2503
        %2552 = vmatpush.bf16.msra.mxu0 %v2501
        %2553 = vmatmul.bf16.gmra.mxu0 %v2429
        %v2554 = vpop.f32.mrf.mxu0
        %v2555 = vadd.f32 %v2449, %v2554
        %v2556 = vpop.f32.mrf.mxu0
        %2557 = vdwg.mxu0
        %v2558 = vmax.f32 %v2542, 0.0
        %v2559 = vmax.f32 %v2555, 0.0
        %v2560 = vpack.c.bf16 %v2558, %v2558
        %v2561 = vpack.c.bf16 %v2559, %v2559
        %v2562 = vld [vmem:[#allocation21] sm:$0xf]
        %v2563 = vld [vmem:[#allocation21 + $0x4] sm:$0xf]
        %v2564 = vld [vmem:[#allocation21 + $0x8] sm:$0xf]
        %v2565 = vld [vmem:[#allocation21 + $0xc] sm:$0xf]
        %v2566 = vld [vmem:[#allocation21 + $0x10] sm:$0xf]
        %v2567 = vld [vmem:[#allocation21 + $0x14] sm:$0xf]
        %v2568 = vld [vmem:[#allocation21 + $0x18] sm:$0xf]
        %v2569 = vld [vmem:[#allocation21 + $0x1c] sm:$0xf]
        %v2570 = vld [vmem:[#allocation21 + $0x20] sm:$0xf]
        %v2571 = vld [vmem:[#allocation21 + $0x24] sm:$0xf]
        %v2572 = vld [vmem:[#allocation21 + $0x28] sm:$0xf]
        %v2573 = vld [vmem:[#allocation21 + $0x2c] sm:$0xf]
        %v2574 = vld [vmem:[#allocation21 + $0x30] sm:$0xf]
        %v2575 = vld [vmem:[#allocation21 + $0x34] sm:$0xf]
        %v2576 = vld [vmem:[#allocation21 + $0x38] sm:$0xf]
        %v2577 = vld [vmem:[#allocation21 + $0x3c] sm:$0xf]
        %v2578 = vld [vmem:[#allocation21 + $0x40] sm:$0xf]
        %v2579 = vld [vmem:[#allocation21 + $0x44] sm:$0xf]
        %v2580 = vld [vmem:[#allocation21 + $0x48] sm:$0xf]
        %v2581 = vld [vmem:[#allocation21 + $0x4c] sm:$0xf]
        %v2582 = vld [vmem:[#allocation21 + $0x50] sm:$0xf]
        %v2583 = vld [vmem:[#allocation21 + $0x54] sm:$0xf]
        %v2584 = vld [vmem:[#allocation21 + $0x58] sm:$0xf]
        %v2585 = vld [vmem:[#allocation21 + $0x5c] sm:$0xf]
        %v2586 = vld [vmem:[#allocation21 + $0x60] sm:$0xf]
        %v2587 = vld [vmem:[#allocation21 + $0x64] sm:$0xf]
        %v2588 = vld [vmem:[#allocation21 + $0x68] sm:$0xf]
        %v2589 = vld [vmem:[#allocation21 + $0x6c] sm:$0xf]
        %v2590 = vld [vmem:[#allocation21 + $0x70] sm:$0xf]
        %v2591 = vld [vmem:[#allocation21 + $0x74] sm:$0xf]
        %v2592 = vld [vmem:[#allocation21 + $0x78] sm:$0xf]
        %v2593 = vld [vmem:[#allocation21 + $0x7c] sm:$0xf]
        %v2594 = vld [vmem:[%s16] sm:$0x1]
        %v2596 = vperm.slane %v2594, 0
        %v2630 = vunpack.c.l.b16 %v2562
        %v2631 = vunpack.c.l.b16 %v2563
        %v2632 = vunpack.c.l.b16 %v2564
        %v2633 = vunpack.c.l.b16 %v2565
        %v2634 = vunpack.c.l.b16 %v2566
        %v2635 = vunpack.c.l.b16 %v2567
        %v2636 = vunpack.c.l.b16 %v2568
        %v2637 = vunpack.c.l.b16 %v2569
        %v2638 = vunpack.c.l.b16 %v2570
        %v2639 = vunpack.c.l.b16 %v2571
        %v2640 = vunpack.c.l.b16 %v2572
        %v2641 = vunpack.c.l.b16 %v2573
        %v2642 = vunpack.c.l.b16 %v2574
        %v2643 = vunpack.c.l.b16 %v2575
        %v2644 = vunpack.c.l.b16 %v2576
        %v2645 = vunpack.c.l.b16 %v2577
        %v2646 = vunpack.c.l.b16 %v2578
        %v2647 = vunpack.c.l.b16 %v2579
        %v2648 = vunpack.c.l.b16 %v2580
        %v2649 = vunpack.c.l.b16 %v2581
        %v2650 = vunpack.c.l.b16 %v2582
        %v2651 = vunpack.c.l.b16 %v2583
        %v2652 = vunpack.c.l.b16 %v2584
        %v2653 = vunpack.c.l.b16 %v2585
        %v2654 = vunpack.c.l.b16 %v2586
        %v2655 = vunpack.c.l.b16 %v2587
        %v2656 = vunpack.c.l.b16 %v2588
        %v2657 = vunpack.c.l.b16 %v2589
        %v2658 = vunpack.c.l.b16 %v2590
        %v2659 = vunpack.c.l.b16 %v2591
        %v2660 = vunpack.c.l.b16 %v2592
        %v2661 = vunpack.c.l.b16 %v2593
        %v2662 = vpack.c.b16 %v2631, %v2630
        %v2663 = vpack.c.b16 %v2633, %v2632
        %v2664 = vpack.c.b16 %v2635, %v2634
        %v2665 = vpack.c.b16 %v2637, %v2636
        %v2666 = vpack.c.b16 %v2639, %v2638
        %v2667 = vpack.c.b16 %v2641, %v2640
        %v2668 = vpack.c.b16 %v2643, %v2642
        %v2669 = vpack.c.b16 %v2645, %v2644
        %v2670 = vpack.c.b16 %v2647, %v2646
        %v2671 = vpack.c.b16 %v2649, %v2648
        %v2672 = vpack.c.b16 %v2651, %v2650
        %v2673 = vpack.c.b16 %v2653, %v2652
        %v2674 = vpack.c.b16 %v2655, %v2654
        %v2675 = vpack.c.b16 %v2657, %v2656
        %v2676 = vpack.c.b16 %v2659, %v2658
        %v2677 = vpack.c.b16 %v2661, %v2660
        %2694 = vmatpush.bf16.msra.mxu0 %v2669
        %2695 = vmatpush.bf16.msra.mxu0 %v2668
        %2696 = vmatpush.bf16.msra.mxu0 %v2667
        %2697 = vmatpush.bf16.msra.mxu0 %v2666
        %2698 = vmatpush.bf16.msra.mxu0 %v2665
        %2699 = vmatpush.bf16.msra.mxu0 %v2664
        %2700 = vmatpush.bf16.msra.mxu0 %v2663
        %2701 = vmatpush.bf16.msra.mxu0 %v2662
        %2702 = vmatmul.bf16.gmra.mxu0 %v2560
        %v2703 = vpop.f32.mrf.mxu0
        %v2704 = vadd.f32 %v2596, %v2703
        %v2705 = vpop.f32.mrf.mxu0
        %2706 = vdwg.mxu0
        %2707 = vmatpush.bf16.msra.mxu0 %v2677
        %2708 = vmatpush.bf16.msra.mxu0 %v2676
        %2709 = vmatpush.bf16.msra.mxu0 %v2675
        %2710 = vmatpush.bf16.msra.mxu0 %v2674
        %2711 = vmatpush.bf16.msra.mxu0 %v2673
        %2712 = vmatpush.bf16.msra.mxu0 %v2672
        %2713 = vmatpush.bf16.msra.mxu0 %v2671
        %2714 = vmatpush.bf16.msra.mxu0 %v2670
        %2715 = vmatmul.bf16.gmra.mxu0 %v2561
        %v2716 = vpop.f32.mrf.mxu0
        %v2717 = vadd.f32 %v2704, %v2716
        %v2718 = vpop.f32.mrf.mxu0
        %2719 = vdwg.mxu0
        %v2720 = vadd.f32 %v2717, %v2396
        %2721 = vst [vmem:[%s912] sm:$0xff] %v2720
        %s2722 = sand.u32 %s487, 1
        %s2723 = scalar_lea.sflag [#allocation6], %s2722
        %s2724 = sand.u32 %s487, 1
        %s2725 = smul.addr %s2724, 8
        %s2726 = scalar_lea.vmem [#allocation22], %s2725
        %s2727 = sand.u32 %s49, 1
        %s2728 = scalar_lea.sflag [#allocation24], %s2727
        %s2729 = sand.u32 %s515, 1
        %s2730 = smul.addr %s2729, 16
        %s2731 = scalar_lea.vmem [#allocation23], %s2730
        %s2732 = sand.u32 %s49, 1
        %s2733 = scalar_lea.sflag [#allocation24], %s2732
        %s2734 = sand.u32 %s543, 1
        %s2735 = smul.addr %s2734, 16
        %s2736 = scalar_lea.vmem [#allocation25], %s2735
        // Predicated region
        $region145: #{tpu_custom_call.1} parent=95 // pred_check
          %p2737 = pneg %p497
        $region146: #{tpu_custom_call.1} parent=95 // pred_check_branch
          %2739 = sbr.rel (%p2737) target = $region148
        $region147: #{tpu_custom_call.1} parent=95 // pred_region
          %2741 = vsyncadd %s2723, 0
          %s2742 = smul.addr %s53, 2
          %s2743 = sadd.s32 %s54, %s2742
          %s2744 = smul.addr %s2743, 8
          %s2745 = scalar_lea.hbm %s19, %s2744
          %s2747 = sshll.u32 %s2726, 4
          %s2748 = int_to_ptr.vmem [resolvable:$true] %s2747
          %s2749 = sshll.u32 %s2745, 4
          %s2750 = int_to_ptr.hbm [resolvable:$true] %s2749
          %2752 = dma.vmem_to_hbm [thread:$0]  %s2748, 128, %s2750, %s2723
        $region148: #{tpu_custom_call.1} parent=95 // pred_fallthru
          _
        // Predicated region
        $region149: #{tpu_custom_call.1} parent=95 // pred_check
          %p2753 = pneg %p525
        $region150: #{tpu_custom_call.1} parent=95 // pred_check_branch
          %2755 = sbr.rel (%p2753) target = $region152
        $region151: #{tpu_custom_call.1} parent=95 // pred_region
          %2757 = vsyncadd %s2728, 0
          %s2758 = smul.addr %s53, 8
          %s2759 = sadd.s32 %s54, %s2758
          %s2760 = smul.addr %s2759, 4
          %s2761 = scalar_lea.hbm %s20, %s2760
          %s2762 = sshll.u32 %s2731, 4
          %s2763 = int_to_ptr.vmem [resolvable:$true] %s2762
          %s2764 = sshll.u32 %s2761, 4
          %s2765 = int_to_ptr.hbm [resolvable:$true] %s2764
          %2770 = dma.vmem_to_hbm [thread:$0]  %s2763, 256, %s2765, %s2728, 64, 128, 4
        $region152: #{tpu_custom_call.1} parent=95 // pred_fallthru
          _
        // Predicated region
        $region153: #{tpu_custom_call.1} parent=95 // pred_check
          %p2771 = pneg %p553
        $region154: #{tpu_custom_call.1} parent=95 // pred_check_branch
          %2773 = sbr.rel (%p2771) target = $region156
        $region155: #{tpu_custom_call.1} parent=95 // pred_region
          %2775 = vsyncadd %s2733, 0
          %s2776 = smul.addr %s53, 8
          %s2777 = sadd.s32 %s54, %s2776
          %s2778 = smul.addr %s2777, 4
          %s2779 = scalar_lea.hbm %s21, %s2778
          %s2780 = sshll.u32 %s2736, 4
          %s2781 = int_to_ptr.vmem [resolvable:$true] %s2780
          %s2782 = sshll.u32 %s2779, 4
          %s2783 = int_to_ptr.hbm [resolvable:$true] %s2782
          %2788 = dma.vmem_to_hbm [thread:$0]  %s2781, 256, %s2783, %s2733, 64, 128, 4
        $region156: #{tpu_custom_call.1} parent=95 // pred_fallthru
          _
      $region96: #{tpu_custom_call.1} parent=5 // pred_fallthru
        _
      %p2789 = scmp.le.s32.totalorder 2, %s44
      // Predicated region
      $region157: #{tpu_custom_call.1} parent=5 // pred_check
        %p2790 = pneg %p2789
      $region158: #{tpu_custom_call.1} parent=5 // pred_check_branch
        %2792 = sbr.rel (%p2790) target = $region160
      $region159: #{tpu_custom_call.1} parent=5 // pred_region
        %s2793 = ssub.s32 %s44, 2
        // Predicated region
        $region161: #{tpu_custom_call.1} parent=159 // pred_check
          %p2794 = pneg %p503
        $region162: #{tpu_custom_call.1} parent=159 // pred_check_branch
          %2796 = sbr.rel (%p2794) target = $region164
        $region163: #{tpu_custom_call.1} parent=159 // pred_region
          %s2797 = sand.u32 %s488, 1
          %s2798 = scalar_lea.sflag [#allocation6], %s2797
          %s2799 = sand.u32 %s488, 1
          %s2800 = smul.addr %s2799, 8
          %s2801 = scalar_lea.vmem [#allocation22], %s2800
          %2803 = dma.done %s2798, 128
        $region164: #{tpu_custom_call.1} parent=159 // pred_fallthru
          _
        // Predicated region
        $region165: #{tpu_custom_call.1} parent=159 // pred_check
          %p2804 = pneg %p531
        $region166: #{tpu_custom_call.1} parent=159 // pred_check_branch
          %2806 = sbr.rel (%p2804) target = $region168
        $region167: #{tpu_custom_call.1} parent=159 // pred_region
          %s2807 = sand.u32 %s50, 1
          %s2808 = scalar_lea.sflag [#allocation24], %s2807
          %s2809 = sand.u32 %s516, 1
          %s2810 = smul.addr %s2809, 16
          %s2811 = scalar_lea.vmem [#allocation23], %s2810
          %2813 = dma.done %s2808, 256
        $region168: #{tpu_custom_call.1} parent=159 // pred_fallthru
          _
        // Predicated region
        $region169: #{tpu_custom_call.1} parent=159 // pred_check
          %p2814 = pneg %p559
        $region170: #{tpu_custom_call.1} parent=159 // pred_check_branch
          %2816 = sbr.rel (%p2814) target = $region172
        $region171: #{tpu_custom_call.1} parent=159 // pred_region
          %s2817 = sand.u32 %s50, 1
          %s2818 = scalar_lea.sflag [#allocation24], %s2817
          %s2819 = sand.u32 %s544, 1
          %s2820 = smul.addr %s2819, 16
          %s2821 = scalar_lea.vmem [#allocation25], %s2820
          %2823 = dma.done %s2818, 256
        $region172: #{tpu_custom_call.1} parent=159 // pred_fallthru
          _
      $region160: #{tpu_custom_call.1} parent=5 // pred_fallthru
        _
    $region6: #{tpu_custom_call.1} parent=1 // loop_footer
      %s48 = sadd.s32 1, %s44
    $region7: #{tpu_custom_call.1} parent=1 // loop_footer_branch
      %43 = sbr.rel target = $region3
    $region8: #{tpu_custom_call.1} parent=1 // loop_exit
      _
    %2824 = vsyncpa [#allocation5], 1
    %s2825 = scalar_lea.sflag [#allocation5], 1
    %2826 = vsyncpa %s2825, 1
    %2827 = vsyncpa [#allocation8], 1
    %s2828 = scalar_lea.sflag [#allocation8], 1
    %2829 = vsyncpa %s2828, 1
    %2830 = vsyncpa [#allocation11], 1
    %2831 = vsyncpa [#allocation14], 1
    %2832 = vsyncpa [#allocation17], 1
    %2833 = vsyncpa [#allocation20], 1
    %2834 = vsyncpa [#allocation6], 1
    %s2835 = scalar_lea.sflag [#allocation6], 1
    %2836 = vsyncpa %s2835, 1
    %2837 = vsyncpa [#allocation24], 1
    %s2838 = scalar_lea.sflag [#allocation24], 1
    %2839 = vsyncpa %s2838, 1

</llo_original>
